<compile_context>
chip_gen: v7x
topology: tpu7x:2x2x1
jax: 0.10.0
libtpu: 0.0.40
codegen_flags: <defaults>
</compile_context>

<pallas_src>
import functools

import jax
import jax.numpy as jnp
from jax.experimental import pallas as pl
from jax.experimental.pallas import tpu as pltpu


# activation per layer: encoder (sigmoid x3, tanh), decoder (sigmoid x4)
ACTS = ("sigmoid", "sigmoid", "sigmoid", "tanh",
        "sigmoid", "sigmoid", "sigmoid", "sigmoid")


def _round_up(n: int, m: int) -> int:
    return ((n + m - 1) // m) * m


def _fused_autoencoder_kernel(*refs, acts):
    """refs = (x_ref, w1, b1, ..., w8, b8, o_ref). Whole 8-layer chain in VMEM."""
    x_ref = refs[0]
    o_ref = refs[-1]
    param_refs = refs[1:-1]

    h = x_ref[...]
    for i, act in enumerate(acts):
        w = param_refs[2 * i][...]
        b = param_refs[2 * i + 1][...]
        y = jnp.dot(h, w, preferred_element_type=jnp.float32) + b  # (bt, D_out)
        # tanh/sigmoid go to the EUP -> essentially free next to the MXU work.
        h = jnp.tanh(y) if act == "tanh" else jax.nn.sigmoid(y)
    o_ref[...] = h.astype(o_ref.dtype)


def mnist_autoencoder_forward(x, padded_params, input_dim, *, batch_tile=128):
    """x: (B, input_dim) f32 -> (B, input_dim) f32, via one fused Pallas kernel."""
    B = x.shape[0]
    d_in_pad = padded_params[0][0].shape[0]
    d_out_pad = padded_params[-1][0].shape[1]

    flat_params = []
    for w, b in padded_params:
        flat_params += [w, b]

    kernel = functools.partial(_fused_autoencoder_kernel, acts=ACTS)

    # Advisory cost hint for the XLA scheduler around the custom call.
    flops = int(2 * B * sum(w.shape[0] * w.shape[1] for w, _ in padded_params))
    transcendentals = int(B * sum(w.shape[1] for w, _ in padded_params))
    bytes_accessed = int(4 * (B * d_in_pad + B * d_out_pad
                              + sum(w.size + b.size for w, b in padded_params)))
    cost = pl.CostEstimate(flops=flops, transcendentals=transcendentals,
                           bytes_accessed=bytes_accessed)

    use_grid = B > batch_tile
    B_pad = _round_up(B, batch_tile) if use_grid else _round_up(max(B, 1), 8)

    # Pad the input (rows and feature lanes) with zeros; padded weight rows are zero,
    # so padded lanes/rows never perturb the real outputs.
    x_pad = jnp.zeros((B_pad, d_in_pad), jnp.float32)
    x_pad = x_pad.at[:B, : x.shape[1]].set(x.astype(jnp.float32))

    out_shape = jax.ShapeDtypeStruct((B_pad, d_out_pad), jnp.float32)

    if use_grid:
        # Large batch: tile B on a parallel grid axis, keep weights resident
        # (constant block index across the grid -> Pallas skips redundant re-DMA).
        in_specs = [pl.BlockSpec((batch_tile, d_in_pad), lambda i: (i, 0))]
        for w, b in padded_params:
            in_specs.append(pl.BlockSpec(w.shape, lambda i: (0, 0)))
            in_specs.append(pl.BlockSpec(b.shape, lambda i: (0, 0)))
        out_pad = pl.pallas_call(
            kernel,
            out_shape=out_shape,
            grid=(B_pad // batch_tile,),
            in_specs=in_specs,
            out_specs=pl.BlockSpec((batch_tile, d_out_pad), lambda i: (i, 0)),
            compiler_params=pltpu.CompilerParams(
                dimension_semantics=("parallel",),  # megacore batch split on v7x
                vmem_limit_bytes=64 << 20,
            ),
            cost_estimate=cost,
        )(x_pad, *flat_params)
    else:
        # Small batch: no grid, every operand is a single full VMEM-resident block.
        vmem_spec = pl.BlockSpec(memory_space=pltpu.MemorySpace.VMEM)
        out_pad = pl.pallas_call(
            kernel,
            out_shape=out_shape,
            in_specs=[vmem_spec] * (1 + len(flat_params)),
            out_specs=vmem_spec,
            cost_estimate=cost,
        )(x_pad, *flat_params)

    return out_pad[:B, :input_dim]


# ----------------------------------------------------------------------------
# Parameter setup (PyTorch-like U(-1/sqrt(fan_in), 1/sqrt(fan_in)) init).
# Padding / layout work is hoisted here so the hot path is pure DMA + matmul.
# ----------------------------------------------------------------------------

def init_params(key, input_dim: int, encoding_dim: int):
    layer_dims = [
        (input_dim, 500, "sigmoid"),
        (500, 300, "sigmoid"),
        (300, 100, "sigmoid"),
        (100, encoding_dim, "tanh"),
        (encoding_dim, 100, "sigmoid"),
        (100, 300, "sigmoid"),
        (300, 500, "sigmoid"),
        (500, input_dim, "sigmoid"),
    ]
    raw_params = []      # exact (unpadded) params, used by the pure-JAX reference
    padded_params = []   # 128-lane-padded params, used by the Pallas kernel
    for d_in, d_out, act in layer_dims:
        key, kw, kb = jax.random.split(key, 3)
        bound = 1.0 / jnp.sqrt(float(d_in))
        w = jax.random.uniform(kw, (d_in, d_out), jnp.float32, -bound, bound)
        b = jax.random.uniform(kb, (1, d_out), jnp.float32, -bound, bound)
        raw_params.append((w, b, act))

        d_in_p, d_out_p = _round_up(d_in, 128), _round_up(d_out, 128)
        w_p = jnp.zeros((d_in_p, d_out_p), jnp.float32).at[:d_in, :d_out].set(w)
        b_p = jnp.zeros((1, d_out_p), jnp.float32).at[:, :d_out].set(b)
        padded_params.append((w_p, b_p))
    return raw_params, padded_params


def reference_forward(x, raw_params):
    """Pure-JAX reference (unpadded) for correctness checking."""
    h = x
    for w, b, act in raw_params:
        h = h @ w + b
        h = jnp.tanh(h) if act == "tanh" else jax.nn.sigmoid(h)
    return h


# TODO(synk): bf16 weight storage (halves weight DMA, 2x MXU rate on v6e/v7x) is a
# further win but changes numerics; kept f32 to preserve exact PyTorch forward math.

if __name__ == "__main__":
    input_dim = 784      # 28*28 MNIST
    encoding_dim = 32

    key = jax.random.PRNGKey(0)
    key, kx_small, kx_large = jax.random.split(key, 3)
    raw_params, padded_params = init_params(key, input_dim, encoding_dim)

    # 1) small batch (not sublane aligned on purpose) -> single-invocation fused kernel
    x_small = jax.random.uniform(kx_small, (4, input_dim), jnp.float32)
    out_small = jax.block_until_ready(
        mnist_autoencoder_forward(x_small, padded_params, input_dim))
    ref_small = reference_forward(x_small, raw_params)
    assert out_small.shape == (4, input_dim)
    assert jnp.allclose(out_small, ref_small, atol=1e-5, rtol=1e-5)

    # 2) larger batch -> batch-tiled grid path (parallel axis, weights resident)
    x_large = jax.random.uniform(kx_large, (256, input_dim), jnp.float32)
    out_large = jax.block_until_ready(
        mnist_autoencoder_forward(x_large, padded_params, input_dim))
    ref_large = reference_forward(x_large, raw_params)
    assert out_large.shape == (256, input_dim)
    assert jnp.allclose(out_large, ref_large, atol=1e-5, rtol=1e-5)

    print("KERNEL_OK")
</pallas_src>

<mosaic_0001>
module attributes {stable_mosaic.version = 11 : i64} {
  func.func @_fused_autoencoder_kernel(%arg0: memref<8x896xf32, #tpu.memory_space<vmem>>, %arg1: memref<896x512xf32, #tpu.memory_space<vmem>>, %arg2: memref<1x512xf32, #tpu.memory_space<vmem>>, %arg3: memref<512x384xf32, #tpu.memory_space<vmem>>, %arg4: memref<1x384xf32, #tpu.memory_space<vmem>>, %arg5: memref<384x128xf32, #tpu.memory_space<vmem>>, %arg6: memref<1x128xf32, #tpu.memory_space<vmem>>, %arg7: memref<128x128xf32, #tpu.memory_space<vmem>>, %arg8: memref<1x128xf32, #tpu.memory_space<vmem>>, %arg9: memref<128x128xf32, #tpu.memory_space<vmem>>, %arg10: memref<1x128xf32, #tpu.memory_space<vmem>>, %arg11: memref<128x384xf32, #tpu.memory_space<vmem>>, %arg12: memref<1x384xf32, #tpu.memory_space<vmem>>, %arg13: memref<384x512xf32, #tpu.memory_space<vmem>>, %arg14: memref<1x512xf32, #tpu.memory_space<vmem>>, %arg15: memref<512x896xf32, #tpu.memory_space<vmem>>, %arg16: memref<1x896xf32, #tpu.memory_space<vmem>>, %arg17: memref<8x896xf32, #tpu.memory_space<vmem>>) attributes {dimension_semantics = [], scalar_prefetch = 0 : i64, scratch_operands = 0 : i64, tpu.core_type = #tpu.core_type<tc>} {
    %c0 = arith.constant 0 : index
    %c0_0 = arith.constant 0 : index
    %0 = vector.load %arg0[%c0, %c0_0] : memref<8x896xf32, #tpu.memory_space<vmem>>, vector<8x896xf32>
    %c0_1 = arith.constant 0 : index
    %c0_2 = arith.constant 0 : index
    %1 = vector.load %arg1[%c0_1, %c0_2] : memref<896x512xf32, #tpu.memory_space<vmem>>, vector<896x512xf32>
    %c0_3 = arith.constant 0 : index
    %c0_4 = arith.constant 0 : index
    %2 = vector.load %arg2[%c0_3, %c0_4] : memref<1x512xf32, #tpu.memory_space<vmem>>, vector<1x512xf32>
    %cst = arith.constant dense<0.000000e+00> : vector<8x512xf32>
    %3 = tpu.matmul %0, %1, %cst {dimension_numbers = #tpu.dot_dimension_numbers<[1], [0], [0], [1], [0, 0, 1, 1], [], []>} : vector<8x896xf32>, vector<896x512xf32>, vector<8x512xf32> -> vector<8x512xf32>
    %4 = vector.broadcast %2 : vector<1x512xf32> to vector<8x512xf32>
    %5 = arith.addf %3, %4 : vector<8x512xf32>
    %6 = arith.negf %5 : vector<8x512xf32>
    %7 = math.exp %6 : vector<8x512xf32>
    %cst_5 = arith.constant 1.000000e+00 : f32
    %8 = vector.broadcast %cst_5 : f32 to vector<8x512xf32>
    %9 = arith.addf %8, %7 : vector<8x512xf32>
    %10 = arith.divf %8, %9 : vector<8x512xf32>
    %c0_6 = arith.constant 0 : index
    %c0_7 = arith.constant 0 : index
    %11 = vector.load %arg3[%c0_6, %c0_7] : memref<512x384xf32, #tpu.memory_space<vmem>>, vector<512x384xf32>
    %c0_8 = arith.constant 0 : index
    %c0_9 = arith.constant 0 : index
    %12 = vector.load %arg4[%c0_8, %c0_9] : memref<1x384xf32, #tpu.memory_space<vmem>>, vector<1x384xf32>
    %cst_10 = arith.constant dense<0.000000e+00> : vector<8x384xf32>
    %13 = tpu.matmul %10, %11, %cst_10 {dimension_numbers = #tpu.dot_dimension_numbers<[1], [0], [0], [1], [0, 0, 1, 1], [], []>} : vector<8x512xf32>, vector<512x384xf32>, vector<8x384xf32> -> vector<8x384xf32>
    %14 = vector.broadcast %12 : vector<1x384xf32> to vector<8x384xf32>
    %15 = arith.addf %13, %14 : vector<8x384xf32>
    %16 = arith.negf %15 : vector<8x384xf32>
    %17 = math.exp %16 : vector<8x384xf32>
    %cst_11 = arith.constant 1.000000e+00 : f32
    %18 = vector.broadcast %cst_11 : f32 to vector<8x384xf32>
    %19 = arith.addf %18, %17 : vector<8x384xf32>
    %20 = arith.divf %18, %19 : vector<8x384xf32>
    %c0_12 = arith.constant 0 : index
    %c0_13 = arith.constant 0 : index
    %21 = vector.load %arg5[%c0_12, %c0_13] : memref<384x128xf32, #tpu.memory_space<vmem>>, vector<384x128xf32>
    %c0_14 = arith.constant 0 : index
    %c0_15 = arith.constant 0 : index
    %22 = vector.load %arg6[%c0_14, %c0_15] : memref<1x128xf32, #tpu.memory_space<vmem>>, vector<1x128xf32>
    %cst_16 = arith.constant dense<0.000000e+00> : vector<8x128xf32>
    %23 = tpu.matmul %20, %21, %cst_16 {dimension_numbers = #tpu.dot_dimension_numbers<[1], [0], [0], [1], [0, 0, 1, 1], [], []>} : vector<8x384xf32>, vector<384x128xf32>, vector<8x128xf32> -> vector<8x128xf32>
    %24 = vector.broadcast %22 : vector<1x128xf32> to vector<8x128xf32>
    %25 = arith.addf %23, %24 : vector<8x128xf32>
    %26 = arith.negf %25 : vector<8x128xf32>
    %27 = math.exp %26 : vector<8x128xf32>
    %cst_17 = arith.constant 1.000000e+00 : f32
    %28 = vector.broadcast %cst_17 : f32 to vector<8x128xf32>
    %29 = arith.addf %28, %27 : vector<8x128xf32>
    %30 = arith.divf %28, %29 : vector<8x128xf32>
    %c0_18 = arith.constant 0 : index
    %c0_19 = arith.constant 0 : index
    %31 = vector.load %arg7[%c0_18, %c0_19] : memref<128x128xf32, #tpu.memory_space<vmem>>, vector<128x128xf32>
    %c0_20 = arith.constant 0 : index
    %c0_21 = arith.constant 0 : index
    %32 = vector.load %arg8[%c0_20, %c0_21] : memref<1x128xf32, #tpu.memory_space<vmem>>, vector<1x128xf32>
    %cst_22 = arith.constant dense<0.000000e+00> : vector<8x128xf32>
    %33 = tpu.matmul %30, %31, %cst_22 {dimension_numbers = #tpu.dot_dimension_numbers<[1], [0], [0], [1], [0, 0, 1, 1], [], []>} : vector<8x128xf32>, vector<128x128xf32>, vector<8x128xf32> -> vector<8x128xf32>
    %34 = vector.broadcast %32 : vector<1x128xf32> to vector<8x128xf32>
    %35 = arith.addf %33, %34 : vector<8x128xf32>
    %36 = math.tanh %35 : vector<8x128xf32>
    %c0_23 = arith.constant 0 : index
    %c0_24 = arith.constant 0 : index
    %37 = vector.load %arg9[%c0_23, %c0_24] : memref<128x128xf32, #tpu.memory_space<vmem>>, vector<128x128xf32>
    %c0_25 = arith.constant 0 : index
    %c0_26 = arith.constant 0 : index
    %38 = vector.load %arg10[%c0_25, %c0_26] : memref<1x128xf32, #tpu.memory_space<vmem>>, vector<1x128xf32>
    %cst_27 = arith.constant dense<0.000000e+00> : vector<8x128xf32>
    %39 = tpu.matmul %36, %37, %cst_27 {dimension_numbers = #tpu.dot_dimension_numbers<[1], [0], [0], [1], [0, 0, 1, 1], [], []>} : vector<8x128xf32>, vector<128x128xf32>, vector<8x128xf32> -> vector<8x128xf32>
    %40 = vector.broadcast %38 : vector<1x128xf32> to vector<8x128xf32>
    %41 = arith.addf %39, %40 : vector<8x128xf32>
    %42 = arith.negf %41 : vector<8x128xf32>
    %43 = math.exp %42 : vector<8x128xf32>
    %cst_28 = arith.constant 1.000000e+00 : f32
    %44 = vector.broadcast %cst_28 : f32 to vector<8x128xf32>
    %45 = arith.addf %44, %43 : vector<8x128xf32>
    %46 = arith.divf %44, %45 : vector<8x128xf32>
    %c0_29 = arith.constant 0 : index
    %c0_30 = arith.constant 0 : index
    %47 = vector.load %arg11[%c0_29, %c0_30] : memref<128x384xf32, #tpu.memory_space<vmem>>, vector<128x384xf32>
    %c0_31 = arith.constant 0 : index
    %c0_32 = arith.constant 0 : index
    %48 = vector.load %arg12[%c0_31, %c0_32] : memref<1x384xf32, #tpu.memory_space<vmem>>, vector<1x384xf32>
    %cst_33 = arith.constant dense<0.000000e+00> : vector<8x384xf32>
    %49 = tpu.matmul %46, %47, %cst_33 {dimension_numbers = #tpu.dot_dimension_numbers<[1], [0], [0], [1], [0, 0, 1, 1], [], []>} : vector<8x128xf32>, vector<128x384xf32>, vector<8x384xf32> -> vector<8x384xf32>
    %50 = vector.broadcast %48 : vector<1x384xf32> to vector<8x384xf32>
    %51 = arith.addf %49, %50 : vector<8x384xf32>
    %52 = arith.negf %51 : vector<8x384xf32>
    %53 = math.exp %52 : vector<8x384xf32>
    %cst_34 = arith.constant 1.000000e+00 : f32
    %54 = vector.broadcast %cst_34 : f32 to vector<8x384xf32>
    %55 = arith.addf %54, %53 : vector<8x384xf32>
    %56 = arith.divf %54, %55 : vector<8x384xf32>
    %c0_35 = arith.constant 0 : index
    %c0_36 = arith.constant 0 : index
    %57 = vector.load %arg13[%c0_35, %c0_36] : memref<384x512xf32, #tpu.memory_space<vmem>>, vector<384x512xf32>
    %c0_37 = arith.constant 0 : index
    %c0_38 = arith.constant 0 : index
    %58 = vector.load %arg14[%c0_37, %c0_38] : memref<1x512xf32, #tpu.memory_space<vmem>>, vector<1x512xf32>
    %cst_39 = arith.constant dense<0.000000e+00> : vector<8x512xf32>
    %59 = tpu.matmul %56, %57, %cst_39 {dimension_numbers = #tpu.dot_dimension_numbers<[1], [0], [0], [1], [0, 0, 1, 1], [], []>} : vector<8x384xf32>, vector<384x512xf32>, vector<8x512xf32> -> vector<8x512xf32>
    %60 = vector.broadcast %58 : vector<1x512xf32> to vector<8x512xf32>
    %61 = arith.addf %59, %60 : vector<8x512xf32>
    %62 = arith.negf %61 : vector<8x512xf32>
    %63 = math.exp %62 : vector<8x512xf32>
    %cst_40 = arith.constant 1.000000e+00 : f32
    %64 = vector.broadcast %cst_40 : f32 to vector<8x512xf32>
    %65 = arith.addf %64, %63 : vector<8x512xf32>
    %66 = arith.divf %64, %65 : vector<8x512xf32>
    %c0_41 = arith.constant 0 : index
    %c0_42 = arith.constant 0 : index
    %67 = vector.load %arg15[%c0_41, %c0_42] : memref<512x896xf32, #tpu.memory_space<vmem>>, vector<512x896xf32>
    %c0_43 = arith.constant 0 : index
    %c0_44 = arith.constant 0 : index
    %68 = vector.load %arg16[%c0_43, %c0_44] : memref<1x896xf32, #tpu.memory_space<vmem>>, vector<1x896xf32>
    %cst_45 = arith.constant dense<0.000000e+00> : vector<8x896xf32>
    %69 = tpu.matmul %66, %67, %cst_45 {dimension_numbers = #tpu.dot_dimension_numbers<[1], [0], [0], [1], [0, 0, 1, 1], [], []>} : vector<8x512xf32>, vector<512x896xf32>, vector<8x896xf32> -> vector<8x896xf32>
    %70 = vector.broadcast %68 : vector<1x896xf32> to vector<8x896xf32>
    %71 = arith.addf %69, %70 : vector<8x896xf32>
    %72 = arith.negf %71 : vector<8x896xf32>
    %73 = math.exp %72 : vector<8x896xf32>
    %cst_46 = arith.constant 1.000000e+00 : f32
    %74 = vector.broadcast %cst_46 : f32 to vector<8x896xf32>
    %75 = arith.addf %74, %73 : vector<8x896xf32>
    %76 = arith.divf %74, %75 : vector<8x896xf32>
    %c0_47 = arith.constant 0 : index
    %c0_48 = arith.constant 0 : index
    %77 = vector.load %arg17[%c0_47, %c0_48] : memref<8x896xf32, #tpu.memory_space<vmem>>, vector<8x896xf32>
    tpu.vector_store %arg17[%c0_47, %c0_48], %76 {strides = array<i32>} : memref<8x896xf32, #tpu.memory_space<vmem>>, vector<8x896xf32>,
    return
  }
}

</mosaic_0001>

<llo_original>
// kernel: tpu_custom_call.1
$region0: #{tpu_custom_call.1}
  #allocation0 [shape = 'u32[]', space=smem, size = 0x4, offset = 0x4, fixed_abs, tag = 'smem constant byte address 0x4 - core index']
  #allocation1 [shape = 'u32[144,128]{1,0:T(1,128)}', space=vmem, size = 0x12000, scoped, tag = 'internal scratch']
  %s0 = inlined_call_operand.hbm [shape: f32[8,896], index: 0, kind: input, shape index: {}]
  %s1 = inlined_call_operand.hbm [shape: f32[896,512], index: 1, kind: input, shape index: {}]
  %s2 = inlined_call_operand.hbm [shape: f32[1,512], index: 2, kind: input, shape index: {}]
  %s3 = inlined_call_operand.hbm [shape: f32[512,384], index: 3, kind: input, shape index: {}]
  %s4 = inlined_call_operand.hbm [shape: f32[1,384], index: 4, kind: input, shape index: {}]
  %s5 = inlined_call_operand.hbm [shape: f32[384,128], index: 5, kind: input, shape index: {}]
  %s6 = inlined_call_operand.hbm [shape: f32[1,128], index: 6, kind: input, shape index: {}]
  %s7 = inlined_call_operand.hbm [shape: f32[128,128], index: 7, kind: input, shape index: {}]
  %s8 = inlined_call_operand.hbm [shape: f32[1,128], index: 8, kind: input, shape index: {}]
  %s9 = inlined_call_operand.hbm [shape: f32[128,128], index: 9, kind: input, shape index: {}]
  %s10 = inlined_call_operand.hbm [shape: f32[1,128], index: 10, kind: input, shape index: {}]
  %s11 = inlined_call_operand.hbm [shape: f32[128,384], index: 11, kind: input, shape index: {}]
  %s12 = inlined_call_operand.hbm [shape: f32[1,384], index: 12, kind: input, shape index: {}]
  %s13 = inlined_call_operand.hbm [shape: f32[384,512], index: 13, kind: input, shape index: {}]
  %s14 = inlined_call_operand.hbm [shape: f32[1,512], index: 14, kind: input, shape index: {}]
  %s15 = inlined_call_operand.hbm [shape: f32[512,896], index: 15, kind: input, shape index: {}]
  %s16 = inlined_call_operand.hbm [shape: f32[1,896], index: 16, kind: input, shape index: {}]
  %s17 = inlined_call_operand.hbm [shape: f32[8,896], index: 17, kind: output, shape index: {}]
  %s18 = sld [smem:[#allocation0]]
  $region146: #{tpu_custom_call.1} parent=0
    _
  %s20 = ssub.s32 1, %s18
  %s21 = scalar_select 0, %s20, %s18
  $region1: #{tpu_custom_call.1} parent=0
    #allocation2 [shape = 'u8[28672]{0}', space=vmem, size = 0x7000, scoped, tag = 'input window, operand 0, single buffered']
    #allocation3 [shape = 's32[1]{0}', space=sflag, size = 0x4, scoped, tag = 'scoped memory for tpu_custom_call.1']
    #allocation4 [shape = 's32[1]{0}', space=sflag, size = 0x4, scoped, tag = 'scoped memory for tpu_custom_call.1']
    #allocation5 [shape = 'u8[1835008]{0}', space=vmem, size = 0x1c0000, scoped, tag = 'input window, operand 1, single buffered']
    #allocation6 [shape = 's32[1]{0}', space=sflag, size = 0x4, scoped, tag = 'scoped memory for tpu_custom_call.1']
    #allocation7 [shape = 'u8[2048]{0}', space=vmem, size = 0x800, scoped, tag = 'input window, operand 2, single buffered']
    #allocation8 [shape = 'u8[786432]{0}', space=vmem, size = 0xc0000, scoped, tag = 'input window, operand 3, single buffered']
    #allocation9 [shape = 's32[1]{0}', space=sflag, size = 0x4, scoped, tag = 'scoped memory for tpu_custom_call.1']
    #allocation10 [shape = 'u8[1536]{0}', space=vmem, size = 0x800, scoped, tag = 'input window, operand 4, single buffered']
    #allocation11 [shape = 'u8[196608]{0}', space=vmem, size = 0x30000, scoped, tag = 'input window, operand 5, single buffered']
    #allocation12 [shape = 's32[1]{0}', space=sflag, size = 0x4, scoped, tag = 'scoped memory for tpu_custom_call.1']
    #allocation13 [shape = 'u8[512]{0}', space=vmem, size = 0x400, scoped, tag = 'input window, operand 6, single buffered']
    #allocation14 [shape = 'u8[65536]{0}', space=vmem, size = 0x10000, scoped, tag = 'input window, operand 7, single buffered']
    #allocation15 [shape = 's32[1]{0}', space=sflag, size = 0x4, scoped, tag = 'scoped memory for tpu_custom_call.1']
    #allocation16 [shape = 'u8[512]{0}', space=vmem, size = 0x400, scoped, tag = 'input window, operand 8, single buffered']
    #allocation17 [shape = 'u8[65536]{0}', space=vmem, size = 0x10000, scoped, tag = 'input window, operand 9, single buffered']
    #allocation18 [shape = 's32[1]{0}', space=sflag, size = 0x4, scoped, tag = 'scoped memory for tpu_custom_call.1']
    #allocation19 [shape = 'u8[512]{0}', space=vmem, size = 0x400, scoped, tag = 'input window, operand 10, single buffered']
    #allocation20 [shape = 'u8[196608]{0}', space=vmem, size = 0x30000, scoped, tag = 'input window, operand 11, single buffered']
    #allocation21 [shape = 's32[1]{0}', space=sflag, size = 0x4, scoped, tag = 'scoped memory for tpu_custom_call.1']
    #allocation22 [shape = 'u8[1536]{0}', space=vmem, size = 0x800, scoped, tag = 'input window, operand 12, single buffered']
    #allocation23 [shape = 'u8[786432]{0}', space=vmem, size = 0xc0000, scoped, tag = 'input window, operand 13, single buffered']
    #allocation24 [shape = 's32[1]{0}', space=sflag, size = 0x4, scoped, tag = 'scoped memory for tpu_custom_call.1']
    #allocation25 [shape = 'u8[2048]{0}', space=vmem, size = 0x800, scoped, tag = 'input window, operand 14, single buffered']
    #allocation26 [shape = 'u8[1835008]{0}', space=vmem, size = 0x1c0000, scoped, tag = 'input window, operand 15, single buffered']
    #allocation27 [shape = 's32[1]{0}', space=sflag, size = 0x4, scoped, tag = 'scoped memory for tpu_custom_call.1']
    #allocation28 [shape = 'u8[3584]{0}', space=vmem, size = 0x1000, scoped, tag = 'input window, operand 16, single buffered']
    #allocation29 [shape = 'u8[28672]{0}', space=vmem, size = 0x7000, scoped, tag = 'output window, operand 0, single buffered']
    %22 = vsyncpa [#allocation3], 0
    %23 = vsyncpa [#allocation6], 0
    %24 = vsyncpa [#allocation9], 0
    %25 = vsyncpa [#allocation12], 0
    %26 = vsyncpa [#allocation15], 0
    %27 = vsyncpa [#allocation18], 0
    %28 = vsyncpa [#allocation21], 0
    %29 = vsyncpa [#allocation24], 0
    %30 = vsyncpa [#allocation27], 0
    %31 = vsyncpa [#allocation4], 0
    // Predicated region
    $region2: #{tpu_custom_call.1} parent=1 // pred_check
      _
    $region3: #{tpu_custom_call.1} parent=1 // pred_check_branch
      %33 = sbr.rel (0) target = $region5
    $region4: #{tpu_custom_call.1} parent=1 // pred_region
      %s35 = ssub.s32 896, 896
      %36 = vsyncadd [#allocation3], %s35
      %s38 = sshll.u32 [#allocation2], 4
      %s39 = int_to_ptr.vmem [resolvable:$true] %s38
      %41 = dma.hbm_to_vmem [thread:$0]  %s0, 896, %s39, [#allocation3]
    $region5: #{tpu_custom_call.1} parent=1 // pred_fallthru
      _
    // Predicated region
    $region6: #{tpu_custom_call.1} parent=1 // pred_check
      _
    $region7: #{tpu_custom_call.1} parent=1 // pred_check_branch
      %43 = sbr.rel (0) target = $region9
    $region8: #{tpu_custom_call.1} parent=1 // pred_region
      %s45 = ssub.s32 57344, 57344
      %46 = vsyncadd [#allocation6], %s45
      %s47 = sshll.u32 [#allocation5], 4
      %s48 = int_to_ptr.vmem [resolvable:$true] %s47
      %53 = dma.hbm_to_vmem [thread:$0]  %s1, 57344, %s48, [#allocation6], 512, 512, 32
    $region9: #{tpu_custom_call.1} parent=1 // pred_fallthru
      _
    // Predicated region
    $region10: #{tpu_custom_call.1} parent=1 // pred_check
      _
    $region11: #{tpu_custom_call.1} parent=1 // pred_check_branch
      %55 = sbr.rel (0) target = $region13
    $region12: #{tpu_custom_call.1} parent=1 // pred_region
      %s57 = ssub.s32 64, 64
      %58 = vsyncadd [#allocation6], %s57
      %s60 = sshll.u32 [#allocation7], 4
      %s61 = int_to_ptr.vmem [resolvable:$true] %s60
      %63 = dma.hbm_to_vmem [thread:$0]  %s2, 64, %s61, [#allocation6]
    $region13: #{tpu_custom_call.1} parent=1 // pred_fallthru
      _
    // Predicated region
    $region14: #{tpu_custom_call.1} parent=1 // pred_check
      _
    $region15: #{tpu_custom_call.1} parent=1 // pred_check_branch
      %65 = sbr.rel (0) target = $region17
    $region16: #{tpu_custom_call.1} parent=1 // pred_region
      %s67 = ssub.s32 24576, 24576
      %68 = vsyncadd [#allocation9], %s67
      %s69 = sshll.u32 [#allocation8], 4
      %s70 = int_to_ptr.vmem [resolvable:$true] %s69
      %75 = dma.hbm_to_vmem [thread:$0]  %s3, 24576, %s70, [#allocation9], 384, 384, 24
    $region17: #{tpu_custom_call.1} parent=1 // pred_fallthru
      _
    // Predicated region
    $region18: #{tpu_custom_call.1} parent=1 // pred_check
      _
    $region19: #{tpu_custom_call.1} parent=1 // pred_check_branch
      %77 = sbr.rel (0) target = $region21
    $region20: #{tpu_custom_call.1} parent=1 // pred_region
      %s79 = ssub.s32 48, 48
      %80 = vsyncadd [#allocation9], %s79
      %s82 = sshll.u32 [#allocation10], 4
      %s83 = int_to_ptr.vmem [resolvable:$true] %s82
      %85 = dma.hbm_to_vmem [thread:$0]  %s4, 48, %s83, [#allocation9]
    $region21: #{tpu_custom_call.1} parent=1 // pred_fallthru
      _
    // Predicated region
    $region22: #{tpu_custom_call.1} parent=1 // pred_check
      _
    $region23: #{tpu_custom_call.1} parent=1 // pred_check_branch
      %87 = sbr.rel (0) target = $region25
    $region24: #{tpu_custom_call.1} parent=1 // pred_region
      %s89 = ssub.s32 6144, 6144
      %90 = vsyncadd [#allocation12], %s89
      %s91 = sshll.u32 [#allocation11], 4
      %s92 = int_to_ptr.vmem [resolvable:$true] %s91
      %97 = dma.hbm_to_vmem [thread:$0]  %s5, 6144, %s92, [#allocation12], 128, 128, 8
    $region25: #{tpu_custom_call.1} parent=1 // pred_fallthru
      _
    // Predicated region
    $region26: #{tpu_custom_call.1} parent=1 // pred_check
      _
    $region27: #{tpu_custom_call.1} parent=1 // pred_check_branch
      %99 = sbr.rel (0) target = $region29
    $region28: #{tpu_custom_call.1} parent=1 // pred_region
      %s101 = ssub.s32 16, 16
      %102 = vsyncadd [#allocation12], %s101
      %s104 = sshll.u32 [#allocation13], 4
      %s105 = int_to_ptr.vmem [resolvable:$true] %s104
      %107 = dma.hbm_to_vmem [thread:$0]  %s6, 16, %s105, [#allocation12]
    $region29: #{tpu_custom_call.1} parent=1 // pred_fallthru
      _
    // Predicated region
    $region30: #{tpu_custom_call.1} parent=1 // pred_check
      _
    $region31: #{tpu_custom_call.1} parent=1 // pred_check_branch
      %109 = sbr.rel (0) target = $region33
    $region32: #{tpu_custom_call.1} parent=1 // pred_region
      %s111 = ssub.s32 2048, 2048
      %112 = vsyncadd [#allocation15], %s111
      %s113 = sshll.u32 [#allocation14], 4
      %s114 = int_to_ptr.vmem [resolvable:$true] %s113
      %119 = dma.hbm_to_vmem [thread:$0]  %s7, 2048, %s114, [#allocation15], 128, 128, 8
    $region33: #{tpu_custom_call.1} parent=1 // pred_fallthru
      _
    // Predicated region
    $region34: #{tpu_custom_call.1} parent=1 // pred_check
      _
    $region35: #{tpu_custom_call.1} parent=1 // pred_check_branch
      %121 = sbr.rel (0) target = $region37
    $region36: #{tpu_custom_call.1} parent=1 // pred_region
      %s123 = ssub.s32 16, 16
      %124 = vsyncadd [#allocation15], %s123
      %s126 = sshll.u32 [#allocation16], 4
      %s127 = int_to_ptr.vmem [resolvable:$true] %s126
      %129 = dma.hbm_to_vmem [thread:$0]  %s8, 16, %s127, [#allocation15]
    $region37: #{tpu_custom_call.1} parent=1 // pred_fallthru
      _
    // Predicated region
    $region38: #{tpu_custom_call.1} parent=1 // pred_check
      _
    $region39: #{tpu_custom_call.1} parent=1 // pred_check_branch
      %131 = sbr.rel (0) target = $region41
    $region40: #{tpu_custom_call.1} parent=1 // pred_region
      %s133 = ssub.s32 2048, 2048
      %134 = vsyncadd [#allocation18], %s133
      %s135 = sshll.u32 [#allocation17], 4
      %s136 = int_to_ptr.vmem [resolvable:$true] %s135
      %141 = dma.hbm_to_vmem [thread:$0]  %s9, 2048, %s136, [#allocation18], 128, 128, 8
    $region41: #{tpu_custom_call.1} parent=1 // pred_fallthru
      _
    // Predicated region
    $region42: #{tpu_custom_call.1} parent=1 // pred_check
      _
    $region43: #{tpu_custom_call.1} parent=1 // pred_check_branch
      %143 = sbr.rel (0) target = $region45
    $region44: #{tpu_custom_call.1} parent=1 // pred_region
      %s145 = ssub.s32 16, 16
      %146 = vsyncadd [#allocation18], %s145
      %s148 = sshll.u32 [#allocation19], 4
      %s149 = int_to_ptr.vmem [resolvable:$true] %s148
      %151 = dma.hbm_to_vmem [thread:$0]  %s10, 16, %s149, [#allocation18]
    $region45: #{tpu_custom_call.1} parent=1 // pred_fallthru
      _
    // Predicated region
    $region46: #{tpu_custom_call.1} parent=1 // pred_check
      _
    $region47: #{tpu_custom_call.1} parent=1 // pred_check_branch
      %153 = sbr.rel (0) target = $region49
    $region48: #{tpu_custom_call.1} parent=1 // pred_region
      %s155 = ssub.s32 6144, 6144
      %156 = vsyncadd [#allocation21], %s155
      %s157 = sshll.u32 [#allocation20], 4
      %s158 = int_to_ptr.vmem [resolvable:$true] %s157
      %163 = dma.hbm_to_vmem [thread:$0]  %s11, 6144, %s158, [#allocation21], 384, 384, 24
    $region49: #{tpu_custom_call.1} parent=1 // pred_fallthru
      _
    // Predicated region
    $region50: #{tpu_custom_call.1} parent=1 // pred_check
      _
    $region51: #{tpu_custom_call.1} parent=1 // pred_check_branch
      %165 = sbr.rel (0) target = $region53
    $region52: #{tpu_custom_call.1} parent=1 // pred_region
      %s167 = ssub.s32 48, 48
      %168 = vsyncadd [#allocation21], %s167
      %s170 = sshll.u32 [#allocation22], 4
      %s171 = int_to_ptr.vmem [resolvable:$true] %s170
      %173 = dma.hbm_to_vmem [thread:$0]  %s12, 48, %s171, [#allocation21]
    $region53: #{tpu_custom_call.1} parent=1 // pred_fallthru
      _
    // Predicated region
    $region54: #{tpu_custom_call.1} parent=1 // pred_check
      _
    $region55: #{tpu_custom_call.1} parent=1 // pred_check_branch
      %175 = sbr.rel (0) target = $region57
    $region56: #{tpu_custom_call.1} parent=1 // pred_region
      %s177 = ssub.s32 24576, 24576
      %178 = vsyncadd [#allocation24], %s177
      %s179 = sshll.u32 [#allocation23], 4
      %s180 = int_to_ptr.vmem [resolvable:$true] %s179
      %185 = dma.hbm_to_vmem [thread:$0]  %s13, 24576, %s180, [#allocation24], 512, 512, 32
    $region57: #{tpu_custom_call.1} parent=1 // pred_fallthru
      _
    // Predicated region
    $region58: #{tpu_custom_call.1} parent=1 // pred_check
      _
    $region59: #{tpu_custom_call.1} parent=1 // pred_check_branch
      %187 = sbr.rel (0) target = $region61
    $region60: #{tpu_custom_call.1} parent=1 // pred_region
      %s189 = ssub.s32 64, 64
      %190 = vsyncadd [#allocation24], %s189
      %s192 = sshll.u32 [#allocation25], 4
      %s193 = int_to_ptr.vmem [resolvable:$true] %s192
      %195 = dma.hbm_to_vmem [thread:$0]  %s14, 64, %s193, [#allocation24]
    $region61: #{tpu_custom_call.1} parent=1 // pred_fallthru
      _
    // Predicated region
    $region62: #{tpu_custom_call.1} parent=1 // pred_check
      _
    $region63: #{tpu_custom_call.1} parent=1 // pred_check_branch
      %197 = sbr.rel (0) target = $region65
    $region64: #{tpu_custom_call.1} parent=1 // pred_region
      %s199 = ssub.s32 57344, 57344
      %200 = vsyncadd [#allocation27], %s199
      %s201 = sshll.u32 [#allocation26], 4
      %s202 = int_to_ptr.vmem [resolvable:$true] %s201
      %207 = dma.hbm_to_vmem [thread:$0]  %s15, 57344, %s202, [#allocation27], 896, 896, 56
    $region65: #{tpu_custom_call.1} parent=1 // pred_fallthru
      _
    // Predicated region
    $region66: #{tpu_custom_call.1} parent=1 // pred_check
      _
    $region67: #{tpu_custom_call.1} parent=1 // pred_check_branch
      %209 = sbr.rel (0) target = $region69
    $region68: #{tpu_custom_call.1} parent=1 // pred_region
      %s211 = ssub.s32 112, 112
      %212 = vsyncadd [#allocation27], %s211
      %s214 = sshll.u32 [#allocation28], 4
      %s215 = int_to_ptr.vmem [resolvable:$true] %s214
      %217 = dma.hbm_to_vmem [thread:$0]  %s16, 112, %s215, [#allocation27]
    $region69: #{tpu_custom_call.1} parent=1 // pred_fallthru
      _
    // Predicated region
    $region70: #{tpu_custom_call.1} parent=1 // pred_check
      _
    $region71: #{tpu_custom_call.1} parent=1 // pred_check_branch
      %219 = sbr.rel (0) target = $region73
    $region72: #{tpu_custom_call.1} parent=1 // pred_region
      %220 = dma.done [#allocation3], 896
    $region73: #{tpu_custom_call.1} parent=1 // pred_fallthru
      _
    // Predicated region
    $region74: #{tpu_custom_call.1} parent=1 // pred_check
      _
    $region75: #{tpu_custom_call.1} parent=1 // pred_check_branch
      %222 = sbr.rel (0) target = $region77
    $region76: #{tpu_custom_call.1} parent=1 // pred_region
      %223 = dma.done [#allocation6], 57344
    $region77: #{tpu_custom_call.1} parent=1 // pred_fallthru
      _
    // Predicated region
    $region78: #{tpu_custom_call.1} parent=1 // pred_check
      _
    $region79: #{tpu_custom_call.1} parent=1 // pred_check_branch
      %225 = sbr.rel (0) target = $region81
    $region80: #{tpu_custom_call.1} parent=1 // pred_region
      %226 = dma.done [#allocation6], 64
    $region81: #{tpu_custom_call.1} parent=1 // pred_fallthru
      _
    // Predicated region
    $region82: #{tpu_custom_call.1} parent=1 // pred_check
      _
    $region83: #{tpu_custom_call.1} parent=1 // pred_check_branch
      %228 = sbr.rel (0) target = $region85
    $region84: #{tpu_custom_call.1} parent=1 // pred_region
      %229 = dma.done [#allocation9], 24576
    $region85: #{tpu_custom_call.1} parent=1 // pred_fallthru
      _
    // Predicated region
    $region86: #{tpu_custom_call.1} parent=1 // pred_check
      _
    $region87: #{tpu_custom_call.1} parent=1 // pred_check_branch
      %231 = sbr.rel (0) target = $region89
    $region88: #{tpu_custom_call.1} parent=1 // pred_region
      %232 = dma.done [#allocation9], 48
    $region89: #{tpu_custom_call.1} parent=1 // pred_fallthru
      _
    // Predicated region
    $region90: #{tpu_custom_call.1} parent=1 // pred_check
      _
    $region91: #{tpu_custom_call.1} parent=1 // pred_check_branch
      %234 = sbr.rel (0) target = $region93
    $region92: #{tpu_custom_call.1} parent=1 // pred_region
      %235 = dma.done [#allocation12], 6144
    $region93: #{tpu_custom_call.1} parent=1 // pred_fallthru
      _
    // Predicated region
    $region94: #{tpu_custom_call.1} parent=1 // pred_check
      _
    $region95: #{tpu_custom_call.1} parent=1 // pred_check_branch
      %237 = sbr.rel (0) target = $region97
    $region96: #{tpu_custom_call.1} parent=1 // pred_region
      %238 = dma.done [#allocation12], 16
    $region97: #{tpu_custom_call.1} parent=1 // pred_fallthru
      _
    // Predicated region
    $region98: #{tpu_custom_call.1} parent=1 // pred_check
      _
    $region99: #{tpu_custom_call.1} parent=1 // pred_check_branch
      %240 = sbr.rel (0) target = $region101
    $region100: #{tpu_custom_call.1} parent=1 // pred_region
      %241 = dma.done [#allocation15], 2048
    $region101: #{tpu_custom_call.1} parent=1 // pred_fallthru
      _
    // Predicated region
    $region102: #{tpu_custom_call.1} parent=1 // pred_check
      _
    $region103: #{tpu_custom_call.1} parent=1 // pred_check_branch
      %243 = sbr.rel (0) target = $region105
    $region104: #{tpu_custom_call.1} parent=1 // pred_region
      %244 = dma.done [#allocation15], 16
    $region105: #{tpu_custom_call.1} parent=1 // pred_fallthru
      _
    // Predicated region
    $region106: #{tpu_custom_call.1} parent=1 // pred_check
      _
    $region107: #{tpu_custom_call.1} parent=1 // pred_check_branch
      %246 = sbr.rel (0) target = $region109
    $region108: #{tpu_custom_call.1} parent=1 // pred_region
      %247 = dma.done [#allocation18], 2048
    $region109: #{tpu_custom_call.1} parent=1 // pred_fallthru
      _
    // Predicated region
    $region110: #{tpu_custom_call.1} parent=1 // pred_check
      _
    $region111: #{tpu_custom_call.1} parent=1 // pred_check_branch
      %249 = sbr.rel (0) target = $region113
    $region112: #{tpu_custom_call.1} parent=1 // pred_region
      %250 = dma.done [#allocation18], 16
    $region113: #{tpu_custom_call.1} parent=1 // pred_fallthru
      _
    // Predicated region
    $region114: #{tpu_custom_call.1} parent=1 // pred_check
      _
    $region115: #{tpu_custom_call.1} parent=1 // pred_check_branch
      %252 = sbr.rel (0) target = $region117
    $region116: #{tpu_custom_call.1} parent=1 // pred_region
      %253 = dma.done [#allocation21], 6144
    $region117: #{tpu_custom_call.1} parent=1 // pred_fallthru
      _
    // Predicated region
    $region118: #{tpu_custom_call.1} parent=1 // pred_check
      _
    $region119: #{tpu_custom_call.1} parent=1 // pred_check_branch
      %255 = sbr.rel (0) target = $region121
    $region120: #{tpu_custom_call.1} parent=1 // pred_region
      %256 = dma.done [#allocation21], 48
    $region121: #{tpu_custom_call.1} parent=1 // pred_fallthru
      _
    // Predicated region
    $region122: #{tpu_custom_call.1} parent=1 // pred_check
      _
    $region123: #{tpu_custom_call.1} parent=1 // pred_check_branch
      %258 = sbr.rel (0) target = $region125
    $region124: #{tpu_custom_call.1} parent=1 // pred_region
      %259 = dma.done [#allocation24], 24576
    $region125: #{tpu_custom_call.1} parent=1 // pred_fallthru
      _
    // Predicated region
    $region126: #{tpu_custom_call.1} parent=1 // pred_check
      _
    $region127: #{tpu_custom_call.1} parent=1 // pred_check_branch
      %261 = sbr.rel (0) target = $region129
    $region128: #{tpu_custom_call.1} parent=1 // pred_region
      %262 = dma.done [#allocation24], 64
    $region129: #{tpu_custom_call.1} parent=1 // pred_fallthru
      _
    // Predicated region
    $region130: #{tpu_custom_call.1} parent=1 // pred_check
      _
    $region131: #{tpu_custom_call.1} parent=1 // pred_check_branch
      %264 = sbr.rel (0) target = $region133
    $region132: #{tpu_custom_call.1} parent=1 // pred_region
      %265 = dma.done [#allocation27], 57344
    $region133: #{tpu_custom_call.1} parent=1 // pred_fallthru
      _
    // Predicated region
    $region134: #{tpu_custom_call.1} parent=1 // pred_check
      _
    $region135: #{tpu_custom_call.1} parent=1 // pred_check_branch
      %267 = sbr.rel (0) target = $region137
    $region136: #{tpu_custom_call.1} parent=1 // pred_region
      %268 = dma.done [#allocation27], 112
    $region137: #{tpu_custom_call.1} parent=1 // pred_fallthru
      _
    %v269 = vld [vmem:[#allocation2] sm:$0xff]
    %v270 = vld [vmem:[#allocation2 + $0x8] sm:$0xff]
    %v271 = vld [vmem:[#allocation2 + $0x10] sm:$0xff]
    %v272 = vld [vmem:[#allocation2 + $0x18] sm:$0xff]
    %v273 = vld [vmem:[#allocation2 + $0x20] sm:$0xff]
    %v274 = vld [vmem:[#allocation2 + $0x28] sm:$0xff]
    %v275 = vld [vmem:[#allocation2 + $0x30] sm:$0xff]
    %v276 = vld [vmem:[#allocation5] sm:$0xff]
    %v277 = vld [vmem:[#allocation5 + $0x8] sm:$0xff]
    %v278 = vld [vmem:[#allocation5 + $0x10] sm:$0xff]
    %v279 = vld [vmem:[#allocation5 + $0x18] sm:$0xff]
    %v280 = vld [vmem:[#allocation5 + $0x20] sm:$0xff]
    %v281 = vld [vmem:[#allocation5 + $0x28] sm:$0xff]
    %v282 = vld [vmem:[#allocation5 + $0x30] sm:$0xff]
    %v283 = vld [vmem:[#allocation5 + $0x38] sm:$0xff]
    %v284 = vld [vmem:[#allocation5 + $0x40] sm:$0xff]
    %v285 = vld [vmem:[#allocation5 + $0x48] sm:$0xff]
    %v286 = vld [vmem:[#allocation5 + $0x50] sm:$0xff]
    %v287 = vld [vmem:[#allocation5 + $0x58] sm:$0xff]
    %v288 = vld [vmem:[#allocation5 + $0x60] sm:$0xff]
    %v289 = vld [vmem:[#allocation5 + $0x68] sm:$0xff]
    %v290 = vld [vmem:[#allocation5 + $0x70] sm:$0xff]
    %v291 = vld [vmem:[#allocation5 + $0x78] sm:$0xff]
    %v292 = vld [vmem:[#allocation5 + $0x80] sm:$0xff]
    %v293 = vld [vmem:[#allocation5 + $0x88] sm:$0xff]
    %v294 = vld [vmem:[#allocation5 + $0x90] sm:$0xff]
    %v295 = vld [vmem:[#allocation5 + $0x98] sm:$0xff]
    %v296 = vld [vmem:[#allocation5 + $0xa0] sm:$0xff]
    %v297 = vld [vmem:[#allocation5 + $0xa8] sm:$0xff]
    %v298 = vld [vmem:[#allocation5 + $0xb0] sm:$0xff]
    %v299 = vld [vmem:[#allocation5 + $0xb8] sm:$0xff]
    %v300 = vld [vmem:[#allocation5 + $0xc0] sm:$0xff]
    %v301 = vld [vmem:[#allocation5 + $0xc8] sm:$0xff]
    %v302 = vld [vmem:[#allocation5 + $0xd0] sm:$0xff]
    %v303 = vld [vmem:[#allocation5 + $0xd8] sm:$0xff]
    %v304 = vld [vmem:[#allocation5 + $0xe0] sm:$0xff]
    %v305 = vld [vmem:[#allocation5 + $0xe8] sm:$0xff]
    %v306 = vld [vmem:[#allocation5 + $0xf0] sm:$0xff]
    %v307 = vld [vmem:[#allocation5 + $0xf8] sm:$0xff]
    %v308 = vld [vmem:[#allocation5 + $0x100] sm:$0xff]
    %v309 = vld [vmem:[#allocation5 + $0x108] sm:$0xff]
    %v310 = vld [vmem:[#allocation5 + $0x110] sm:$0xff]
    %v311 = vld [vmem:[#allocation5 + $0x118] sm:$0xff]
    %v312 = vld [vmem:[#allocation5 + $0x120] sm:$0xff]
    %v313 = vld [vmem:[#allocation5 + $0x128] sm:$0xff]
    %v314 = vld [vmem:[#allocation5 + $0x130] sm:$0xff]
    %v315 = vld [vmem:[#allocation5 + $0x138] sm:$0xff]
    %v316 = vld [vmem:[#allocation5 + $0x140] sm:$0xff]
    %v317 = vld [vmem:[#allocation5 + $0x148] sm:$0xff]
    %v318 = vld [vmem:[#allocation5 + $0x150] sm:$0xff]
    %v319 = vld [vmem:[#allocation5 + $0x158] sm:$0xff]
    %v320 = vld [vmem:[#allocation5 + $0x160] sm:$0xff]
    %v321 = vld [vmem:[#allocation5 + $0x168] sm:$0xff]
    %v322 = vld [vmem:[#allocation5 + $0x170] sm:$0xff]
    %v323 = vld [vmem:[#allocation5 + $0x178] sm:$0xff]
    %v324 = vld [vmem:[#allocation5 + $0x180] sm:$0xff]
    %v325 = vld [vmem:[#allocation5 + $0x188] sm:$0xff]
    %v326 = vld [vmem:[#allocation5 + $0x190] sm:$0xff]
    %v327 = vld [vmem:[#allocation5 + $0x198] sm:$0xff]
    %v328 = vld [vmem:[#allocation5 + $0x1a0] sm:$0xff]
    %v329 = vld [vmem:[#allocation5 + $0x1a8] sm:$0xff]
    %v330 = vld [vmem:[#allocation5 + $0x1b0] sm:$0xff]
    %v331 = vld [vmem:[#allocation5 + $0x1b8] sm:$0xff]
    %v332 = vld [vmem:[#allocation5 + $0x1c0] sm:$0xff]
    %v333 = vld [vmem:[#allocation5 + $0x1c8] sm:$0xff]
    %v334 = vld [vmem:[#allocation5 + $0x1d0] sm:$0xff]
    %v335 = vld [vmem:[#allocation5 + $0x1d8] sm:$0xff]
    %v336 = vld [vmem:[#allocation5 + $0x1e0] sm:$0xff]
    %v337 = vld [vmem:[#allocation5 + $0x1e8] sm:$0xff]
    %v338 = vld [vmem:[#allocation5 + $0x1f0] sm:$0xff]
    %v339 = vld [vmem:[#allocation5 + $0x1f8] sm:$0xff]
    %v340 = vld [vmem:[#allocation5 + $0x200] sm:$0xff]
    %v341 = vld [vmem:[#allocation5 + $0x208] sm:$0xff]
    %v342 = vld [vmem:[#allocation5 + $0x210] sm:$0xff]
    %v343 = vld [vmem:[#allocation5 + $0x218] sm:$0xff]
    %v344 = vld [vmem:[#allocation5 + $0x220] sm:$0xff]
    %v345 = vld [vmem:[#allocation5 + $0x228] sm:$0xff]
    %v346 = vld [vmem:[#allocation5 + $0x230] sm:$0xff]
    %v347 = vld [vmem:[#allocation5 + $0x238] sm:$0xff]
    %v348 = vld [vmem:[#allocation5 + $0x240] sm:$0xff]
    %v349 = vld [vmem:[#allocation5 + $0x248] sm:$0xff]
    %v350 = vld [vmem:[#allocation5 + $0x250] sm:$0xff]
    %v351 = vld [vmem:[#allocation5 + $0x258] sm:$0xff]
    %v352 = vld [vmem:[#allocation5 + $0x260] sm:$0xff]
    %v353 = vld [vmem:[#allocation5 + $0x268] sm:$0xff]
    %v354 = vld [vmem:[#allocation5 + $0x270] sm:$0xff]
    %v355 = vld [vmem:[#allocation5 + $0x278] sm:$0xff]
    %v356 = vld [vmem:[#allocation5 + $0x280] sm:$0xff]
    %v357 = vld [vmem:[#allocation5 + $0x288] sm:$0xff]
    %v358 = vld [vmem:[#allocation5 + $0x290] sm:$0xff]
    %v359 = vld [vmem:[#allocation5 + $0x298] sm:$0xff]
    %v360 = vld [vmem:[#allocation5 + $0x2a0] sm:$0xff]
    %v361 = vld [vmem:[#allocation5 + $0x2a8] sm:$0xff]
    %v362 = vld [vmem:[#allocation5 + $0x2b0] sm:$0xff]
    %v363 = vld [vmem:[#allocation5 + $0x2b8] sm:$0xff]
    %v364 = vld [vmem:[#allocation5 + $0x2c0] sm:$0xff]
    %v365 = vld [vmem:[#allocation5 + $0x2c8] sm:$0xff]
    %v366 = vld [vmem:[#allocation5 + $0x2d0] sm:$0xff]
    %v367 = vld [vmem:[#allocation5 + $0x2d8] sm:$0xff]
    %v368 = vld [vmem:[#allocation5 + $0x2e0] sm:$0xff]
    %v369 = vld [vmem:[#allocation5 + $0x2e8] sm:$0xff]
    %v370 = vld [vmem:[#allocation5 + $0x2f0] sm:$0xff]
    %v371 = vld [vmem:[#allocation5 + $0x2f8] sm:$0xff]
    %v372 = vld [vmem:[#allocation5 + $0x300] sm:$0xff]
    %v373 = vld [vmem:[#allocation5 + $0x308] sm:$0xff]
    %v374 = vld [vmem:[#allocation5 + $0x310] sm:$0xff]
    %v375 = vld [vmem:[#allocation5 + $0x318] sm:$0xff]
    %v376 = vld [vmem:[#allocation5 + $0x320] sm:$0xff]
    %v377 = vld [vmem:[#allocation5 + $0x328] sm:$0xff]
    %v378 = vld [vmem:[#allocation5 + $0x330] sm:$0xff]
    %v379 = vld [vmem:[#allocation5 + $0x338] sm:$0xff]
    %v380 = vld [vmem:[#allocation5 + $0x340] sm:$0xff]
    %v381 = vld [vmem:[#allocation5 + $0x348] sm:$0xff]
    %v382 = vld [vmem:[#allocation5 + $0x350] sm:$0xff]
    %v383 = vld [vmem:[#allocation5 + $0x358] sm:$0xff]
    %v384 = vld [vmem:[#allocation5 + $0x360] sm:$0xff]
    %v385 = vld [vmem:[#allocation5 + $0x368] sm:$0xff]
    %v386 = vld [vmem:[#allocation5 + $0x370] sm:$0xff]
    %v387 = vld [vmem:[#allocation5 + $0x378] sm:$0xff]
    %v388 = vld [vmem:[#allocation5 + $0x380] sm:$0xff]
    %v389 = vld [vmem:[#allocation5 + $0x388] sm:$0xff]
    %v390 = vld [vmem:[#allocation5 + $0x390] sm:$0xff]
    %v391 = vld [vmem:[#allocation5 + $0x398] sm:$0xff]
    %v392 = vld [vmem:[#allocation5 + $0x3a0] sm:$0xff]
    %v393 = vld [vmem:[#allocation5 + $0x3a8] sm:$0xff]
    %v394 = vld [vmem:[#allocation5 + $0x3b0] sm:$0xff]
    %v395 = vld [vmem:[#allocation5 + $0x3b8] sm:$0xff]
    %v396 = vld [vmem:[#allocation5 + $0x3c0] sm:$0xff]
    %v397 = vld [vmem:[#allocation5 + $0x3c8] sm:$0xff]
    %v398 = vld [vmem:[#allocation5 + $0x3d0] sm:$0xff]
    %v399 = vld [vmem:[#allocation5 + $0x3d8] sm:$0xff]
    %v400 = vld [vmem:[#allocation5 + $0x3e0] sm:$0xff]
    %v401 = vld [vmem:[#allocation5 + $0x3e8] sm:$0xff]
    %v402 = vld [vmem:[#allocation5 + $0x3f0] sm:$0xff]
    %v403 = vld [vmem:[#allocation5 + $0x3f8] sm:$0xff]
    %v404 = vld [vmem:[#allocation5 + $0x400] sm:$0xff]
    %v405 = vld [vmem:[#allocation5 + $0x408] sm:$0xff]
    %v406 = vld [vmem:[#allocation5 + $0x410] sm:$0xff]
    %v407 = vld [vmem:[#allocation5 + $0x418] sm:$0xff]
    %v408 = vld [vmem:[#allocation5 + $0x420] sm:$0xff]
    %v409 = vld [vmem:[#allocation5 + $0x428] sm:$0xff]
    %v410 = vld [vmem:[#allocation5 + $0x430] sm:$0xff]
    %v411 = vld [vmem:[#allocation5 + $0x438] sm:$0xff]
    %v412 = vld [vmem:[#allocation5 + $0x440] sm:$0xff]
    %v413 = vld [vmem:[#allocation5 + $0x448] sm:$0xff]
    %v414 = vld [vmem:[#allocation5 + $0x450] sm:$0xff]
    %v415 = vld [vmem:[#allocation5 + $0x458] sm:$0xff]
    %v416 = vld [vmem:[#allocation5 + $0x460] sm:$0xff]
    %v417 = vld [vmem:[#allocation5 + $0x468] sm:$0xff]
    %v418 = vld [vmem:[#allocation5 + $0x470] sm:$0xff]
    %v419 = vld [vmem:[#allocation5 + $0x478] sm:$0xff]
    %v420 = vld [vmem:[#allocation5 + $0x480] sm:$0xff]
    %v421 = vld [vmem:[#allocation5 + $0x488] sm:$0xff]
    %v422 = vld [vmem:[#allocation5 + $0x490] sm:$0xff]
    %v423 = vld [vmem:[#allocation5 + $0x498] sm:$0xff]
    %v424 = vld [vmem:[#allocation5 + $0x4a0] sm:$0xff]
    %v425 = vld [vmem:[#allocation5 + $0x4a8] sm:$0xff]
    %v426 = vld [vmem:[#allocation5 + $0x4b0] sm:$0xff]
    %v427 = vld [vmem:[#allocation5 + $0x4b8] sm:$0xff]
    %v428 = vld [vmem:[#allocation5 + $0x4c0] sm:$0xff]
    %v429 = vld [vmem:[#allocation5 + $0x4c8] sm:$0xff]
    %v430 = vld [vmem:[#allocation5 + $0x4d0] sm:$0xff]
    %v431 = vld [vmem:[#allocation5 + $0x4d8] sm:$0xff]
    %v432 = vld [vmem:[#allocation5 + $0x4e0] sm:$0xff]
    %v433 = vld [vmem:[#allocation5 + $0x4e8] sm:$0xff]
    %v434 = vld [vmem:[#allocation5 + $0x4f0] sm:$0xff]
    %v435 = vld [vmem:[#allocation5 + $0x4f8] sm:$0xff]
    %v436 = vld [vmem:[#allocation5 + $0x500] sm:$0xff]
    %v437 = vld [vmem:[#allocation5 + $0x508] sm:$0xff]
    %v438 = vld [vmem:[#allocation5 + $0x510] sm:$0xff]
    %v439 = vld [vmem:[#allocation5 + $0x518] sm:$0xff]
    %v440 = vld [vmem:[#allocation5 + $0x520] sm:$0xff]
    %v441 = vld [vmem:[#allocation5 + $0x528] sm:$0xff]
    %v442 = vld [vmem:[#allocation5 + $0x530] sm:$0xff]
    %v443 = vld [vmem:[#allocation5 + $0x538] sm:$0xff]
    %v444 = vld [vmem:[#allocation5 + $0x540] sm:$0xff]
    %v445 = vld [vmem:[#allocation5 + $0x548] sm:$0xff]
    %v446 = vld [vmem:[#allocation5 + $0x550] sm:$0xff]
    %v447 = vld [vmem:[#allocation5 + $0x558] sm:$0xff]
    %v448 = vld [vmem:[#allocation5 + $0x560] sm:$0xff]
    %v449 = vld [vmem:[#allocation5 + $0x568] sm:$0xff]
    %v450 = vld [vmem:[#allocation5 + $0x570] sm:$0xff]
    %v451 = vld [vmem:[#allocation5 + $0x578] sm:$0xff]
    %v452 = vld [vmem:[#allocation5 + $0x580] sm:$0xff]
    %v453 = vld [vmem:[#allocation5 + $0x588] sm:$0xff]
    %v454 = vld [vmem:[#allocation5 + $0x590] sm:$0xff]
    %v455 = vld [vmem:[#allocation5 + $0x598] sm:$0xff]
    %v456 = vld [vmem:[#allocation5 + $0x5a0] sm:$0xff]
    %v457 = vld [vmem:[#allocation5 + $0x5a8] sm:$0xff]
    %v458 = vld [vmem:[#allocation5 + $0x5b0] sm:$0xff]
    %v459 = vld [vmem:[#allocation5 + $0x5b8] sm:$0xff]
    %v460 = vld [vmem:[#allocation5 + $0x5c0] sm:$0xff]
    %v461 = vld [vmem:[#allocation5 + $0x5c8] sm:$0xff]
    %v462 = vld [vmem:[#allocation5 + $0x5d0] sm:$0xff]
    %v463 = vld [vmem:[#allocation5 + $0x5d8] sm:$0xff]
    %v464 = vld [vmem:[#allocation5 + $0x5e0] sm:$0xff]
    %v465 = vld [vmem:[#allocation5 + $0x5e8] sm:$0xff]
    %v466 = vld [vmem:[#allocation5 + $0x5f0] sm:$0xff]
    %v467 = vld [vmem:[#allocation5 + $0x5f8] sm:$0xff]
    %v468 = vld [vmem:[#allocation5 + $0x600] sm:$0xff]
    %v469 = vld [vmem:[#allocation5 + $0x608] sm:$0xff]
    %v470 = vld [vmem:[#allocation5 + $0x610] sm:$0xff]
    %v471 = vld [vmem:[#allocation5 + $0x618] sm:$0xff]
    %v472 = vld [vmem:[#allocation5 + $0x620] sm:$0xff]
    %v473 = vld [vmem:[#allocation5 + $0x628] sm:$0xff]
    %v474 = vld [vmem:[#allocation5 + $0x630] sm:$0xff]
    %v475 = vld [vmem:[#allocation5 + $0x638] sm:$0xff]
    %v476 = vld [vmem:[#allocation5 + $0x640] sm:$0xff]
    %v477 = vld [vmem:[#allocation5 + $0x648] sm:$0xff]
    %v478 = vld [vmem:[#allocation5 + $0x650] sm:$0xff]
    %v479 = vld [vmem:[#allocation5 + $0x658] sm:$0xff]
    %v480 = vld [vmem:[#allocation5 + $0x660] sm:$0xff]
    %v481 = vld [vmem:[#allocation5 + $0x668] sm:$0xff]
    %v482 = vld [vmem:[#allocation5 + $0x670] sm:$0xff]
    %v483 = vld [vmem:[#allocation5 + $0x678] sm:$0xff]
    %v484 = vld [vmem:[#allocation5 + $0x680] sm:$0xff]
    %v485 = vld [vmem:[#allocation5 + $0x688] sm:$0xff]
    %v486 = vld [vmem:[#allocation5 + $0x690] sm:$0xff]
    %v487 = vld [vmem:[#allocation5 + $0x698] sm:$0xff]
    %v488 = vld [vmem:[#allocation5 + $0x6a0] sm:$0xff]
    %v489 = vld [vmem:[#allocation5 + $0x6a8] sm:$0xff]
    %v490 = vld [vmem:[#allocation5 + $0x6b0] sm:$0xff]
    %v491 = vld [vmem:[#allocation5 + $0x6b8] sm:$0xff]
    %v492 = vld [vmem:[#allocation5 + $0x6c0] sm:$0xff]
    %v493 = vld [vmem:[#allocation5 + $0x6c8] sm:$0xff]
    %v494 = vld [vmem:[#allocation5 + $0x6d0] sm:$0xff]
    %v495 = vld [vmem:[#allocation5 + $0x6d8] sm:$0xff]
    %v496 = vld [vmem:[#allocation5 + $0x6e0] sm:$0xff]
    %v497 = vld [vmem:[#allocation5 + $0x6e8] sm:$0xff]
    %v498 = vld [vmem:[#allocation5 + $0x6f0] sm:$0xff]
    %v499 = vld [vmem:[#allocation5 + $0x6f8] sm:$0xff]
    %v500 = vld [vmem:[#allocation5 + $0x700] sm:$0xff]
    %v501 = vld [vmem:[#allocation5 + $0x708] sm:$0xff]
    %v502 = vld [vmem:[#allocation5 + $0x710] sm:$0xff]
    %v503 = vld [vmem:[#allocation5 + $0x718] sm:$0xff]
    %v504 = vld [vmem:[#allocation5 + $0x720] sm:$0xff]
    %v505 = vld [vmem:[#allocation5 + $0x728] sm:$0xff]
    %v506 = vld [vmem:[#allocation5 + $0x730] sm:$0xff]
    %v507 = vld [vmem:[#allocation5 + $0x738] sm:$0xff]
    %v508 = vld [vmem:[#allocation5 + $0x740] sm:$0xff]
    %v509 = vld [vmem:[#allocation5 + $0x748] sm:$0xff]
    %v510 = vld [vmem:[#allocation5 + $0x750] sm:$0xff]
    %v511 = vld [vmem:[#allocation5 + $0x758] sm:$0xff]
    %v512 = vld [vmem:[#allocation5 + $0x760] sm:$0xff]
    %v513 = vld [vmem:[#allocation5 + $0x768] sm:$0xff]
    %v514 = vld [vmem:[#allocation5 + $0x770] sm:$0xff]
    %v515 = vld [vmem:[#allocation5 + $0x778] sm:$0xff]
    %v516 = vld [vmem:[#allocation5 + $0x780] sm:$0xff]
    %v517 = vld [vmem:[#allocation5 + $0x788] sm:$0xff]
    %v518 = vld [vmem:[#allocation5 + $0x790] sm:$0xff]
    %v519 = vld [vmem:[#allocation5 + $0x798] sm:$0xff]
    %v520 = vld [vmem:[#allocation5 + $0x7a0] sm:$0xff]
    %v521 = vld [vmem:[#allocation5 + $0x7a8] sm:$0xff]
    %v522 = vld [vmem:[#allocation5 + $0x7b0] sm:$0xff]
    %v523 = vld [vmem:[#allocation5 + $0x7b8] sm:$0xff]
    %v524 = vld [vmem:[#allocation5 + $0x7c0] sm:$0xff]
    %v525 = vld [vmem:[#allocation5 + $0x7c8] sm:$0xff]
    %v526 = vld [vmem:[#allocation5 + $0x7d0] sm:$0xff]
    %v527 = vld [vmem:[#allocation5 + $0x7d8] sm:$0xff]
    %v528 = vld [vmem:[#allocation5 + $0x7e0] sm:$0xff]
    %v529 = vld [vmem:[#allocation5 + $0x7e8] sm:$0xff]
    %v530 = vld [vmem:[#allocation5 + $0x7f0] sm:$0xff]
    %v531 = vld [vmem:[#allocation5 + $0x7f8] sm:$0xff]
    %v532 = vld [vmem:[#allocation5 + $0x800] sm:$0xff]
    %v533 = vld [vmem:[#allocation5 + $0x808] sm:$0xff]
    %v534 = vld [vmem:[#allocation5 + $0x810] sm:$0xff]
    %v535 = vld [vmem:[#allocation5 + $0x818] sm:$0xff]
    %v536 = vld [vmem:[#allocation5 + $0x820] sm:$0xff]
    %v537 = vld [vmem:[#allocation5 + $0x828] sm:$0xff]
    %v538 = vld [vmem:[#allocation5 + $0x830] sm:$0xff]
    %v539 = vld [vmem:[#allocation5 + $0x838] sm:$0xff]
    %v540 = vld [vmem:[#allocation5 + $0x840] sm:$0xff]
    %v541 = vld [vmem:[#allocation5 + $0x848] sm:$0xff]
    %v542 = vld [vmem:[#allocation5 + $0x850] sm:$0xff]
    %v543 = vld [vmem:[#allocation5 + $0x858] sm:$0xff]
    %v544 = vld [vmem:[#allocation5 + $0x860] sm:$0xff]
    %v545 = vld [vmem:[#allocation5 + $0x868] sm:$0xff]
    %v546 = vld [vmem:[#allocation5 + $0x870] sm:$0xff]
    %v547 = vld [vmem:[#allocation5 + $0x878] sm:$0xff]
    %v548 = vld [vmem:[#allocation5 + $0x880] sm:$0xff]
    %v549 = vld [vmem:[#allocation5 + $0x888] sm:$0xff]
    %v550 = vld [vmem:[#allocation5 + $0x890] sm:$0xff]
    %v551 = vld [vmem:[#allocation5 + $0x898] sm:$0xff]
    %v552 = vld [vmem:[#allocation5 + $0x8a0] sm:$0xff]
    %v553 = vld [vmem:[#allocation5 + $0x8a8] sm:$0xff]
    %v554 = vld [vmem:[#allocation5 + $0x8b0] sm:$0xff]
    %v555 = vld [vmem:[#allocation5 + $0x8b8] sm:$0xff]
    %v556 = vld [vmem:[#allocation5 + $0x8c0] sm:$0xff]
    %v557 = vld [vmem:[#allocation5 + $0x8c8] sm:$0xff]
    %v558 = vld [vmem:[#allocation5 + $0x8d0] sm:$0xff]
    %v559 = vld [vmem:[#allocation5 + $0x8d8] sm:$0xff]
    %v560 = vld [vmem:[#allocation5 + $0x8e0] sm:$0xff]
    %v561 = vld [vmem:[#allocation5 + $0x8e8] sm:$0xff]
    %v562 = vld [vmem:[#allocation5 + $0x8f0] sm:$0xff]
    %v563 = vld [vmem:[#allocation5 + $0x8f8] sm:$0xff]
    %v564 = vld [vmem:[#allocation5 + $0x900] sm:$0xff]
    %v565 = vld [vmem:[#allocation5 + $0x908] sm:$0xff]
    %v566 = vld [vmem:[#allocation5 + $0x910] sm:$0xff]
    %v567 = vld [vmem:[#allocation5 + $0x918] sm:$0xff]
    %v568 = vld [vmem:[#allocation5 + $0x920] sm:$0xff]
    %v569 = vld [vmem:[#allocation5 + $0x928] sm:$0xff]
    %v570 = vld [vmem:[#allocation5 + $0x930] sm:$0xff]
    %v571 = vld [vmem:[#allocation5 + $0x938] sm:$0xff]
    %v572 = vld [vmem:[#allocation5 + $0x940] sm:$0xff]
    %v573 = vld [vmem:[#allocation5 + $0x948] sm:$0xff]
    %v574 = vld [vmem:[#allocation5 + $0x950] sm:$0xff]
    %v575 = vld [vmem:[#allocation5 + $0x958] sm:$0xff]
    %v576 = vld [vmem:[#allocation5 + $0x960] sm:$0xff]
    %v577 = vld [vmem:[#allocation5 + $0x968] sm:$0xff]
    %v578 = vld [vmem:[#allocation5 + $0x970] sm:$0xff]
    %v579 = vld [vmem:[#allocation5 + $0x978] sm:$0xff]
    %v580 = vld [vmem:[#allocation5 + $0x980] sm:$0xff]
    %v581 = vld [vmem:[#allocation5 + $0x988] sm:$0xff]
    %v582 = vld [vmem:[#allocation5 + $0x990] sm:$0xff]
    %v583 = vld [vmem:[#allocation5 + $0x998] sm:$0xff]
    %v584 = vld [vmem:[#allocation5 + $0x9a0] sm:$0xff]
    %v585 = vld [vmem:[#allocation5 + $0x9a8] sm:$0xff]
    %v586 = vld [vmem:[#allocation5 + $0x9b0] sm:$0xff]
    %v587 = vld [vmem:[#allocation5 + $0x9b8] sm:$0xff]
    %v588 = vld [vmem:[#allocation5 + $0x9c0] sm:$0xff]
    %v589 = vld [vmem:[#allocation5 + $0x9c8] sm:$0xff]
    %v590 = vld [vmem:[#allocation5 + $0x9d0] sm:$0xff]
    %v591 = vld [vmem:[#allocation5 + $0x9d8] sm:$0xff]
    %v592 = vld [vmem:[#allocation5 + $0x9e0] sm:$0xff]
    %v593 = vld [vmem:[#allocation5 + $0x9e8] sm:$0xff]
    %v594 = vld [vmem:[#allocation5 + $0x9f0] sm:$0xff]
    %v595 = vld [vmem:[#allocation5 + $0x9f8] sm:$0xff]
    %v596 = vld [vmem:[#allocation5 + $0xa00] sm:$0xff]
    %v597 = vld [vmem:[#allocation5 + $0xa08] sm:$0xff]
    %v598 = vld [vmem:[#allocation5 + $0xa10] sm:$0xff]
    %v599 = vld [vmem:[#allocation5 + $0xa18] sm:$0xff]
    %v600 = vld [vmem:[#allocation5 + $0xa20] sm:$0xff]
    %v601 = vld [vmem:[#allocation5 + $0xa28] sm:$0xff]
    %v602 = vld [vmem:[#allocation5 + $0xa30] sm:$0xff]
    %v603 = vld [vmem:[#allocation5 + $0xa38] sm:$0xff]
    %v604 = vld [vmem:[#allocation5 + $0xa40] sm:$0xff]
    %v605 = vld [vmem:[#allocation5 + $0xa48] sm:$0xff]
    %v606 = vld [vmem:[#allocation5 + $0xa50] sm:$0xff]
    %v607 = vld [vmem:[#allocation5 + $0xa58] sm:$0xff]
    %v608 = vld [vmem:[#allocation5 + $0xa60] sm:$0xff]
    %v609 = vld [vmem:[#allocation5 + $0xa68] sm:$0xff]
    %v610 = vld [vmem:[#allocation5 + $0xa70] sm:$0xff]
    %v611 = vld [vmem:[#allocation5 + $0xa78] sm:$0xff]
    %v612 = vld [vmem:[#allocation5 + $0xa80] sm:$0xff]
    %v613 = vld [vmem:[#allocation5 + $0xa88] sm:$0xff]
    %v614 = vld [vmem:[#allocation5 + $0xa90] sm:$0xff]
    %v615 = vld [vmem:[#allocation5 + $0xa98] sm:$0xff]
    %v616 = vld [vmem:[#allocation5 + $0xaa0] sm:$0xff]
    %v617 = vld [vmem:[#allocation5 + $0xaa8] sm:$0xff]
    %v618 = vld [vmem:[#allocation5 + $0xab0] sm:$0xff]
    %v619 = vld [vmem:[#allocation5 + $0xab8] sm:$0xff]
    %v620 = vld [vmem:[#allocation5 + $0xac0] sm:$0xff]
    %v621 = vld [vmem:[#allocation5 + $0xac8] sm:$0xff]
    %v622 = vld [vmem:[#allocation5 + $0xad0] sm:$0xff]
    %v623 = vld [vmem:[#allocation5 + $0xad8] sm:$0xff]
    %v624 = vld [vmem:[#allocation5 + $0xae0] sm:$0xff]
    %v625 = vld [vmem:[#allocation5 + $0xae8] sm:$0xff]
    %v626 = vld [vmem:[#allocation5 + $0xaf0] sm:$0xff]
    %v627 = vld [vmem:[#allocation5 + $0xaf8] sm:$0xff]
    %v628 = vld [vmem:[#allocation5 + $0xb00] sm:$0xff]
    %v629 = vld [vmem:[#allocation5 + $0xb08] sm:$0xff]
    %v630 = vld [vmem:[#allocation5 + $0xb10] sm:$0xff]
    %v631 = vld [vmem:[#allocation5 + $0xb18] sm:$0xff]
    %v632 = vld [vmem:[#allocation5 + $0xb20] sm:$0xff]
    %v633 = vld [vmem:[#allocation5 + $0xb28] sm:$0xff]
    %v634 = vld [vmem:[#allocation5 + $0xb30] sm:$0xff]
    %v635 = vld [vmem:[#allocation5 + $0xb38] sm:$0xff]
    %v636 = vld [vmem:[#allocation5 + $0xb40] sm:$0xff]
    %v637 = vld [vmem:[#allocation5 + $0xb48] sm:$0xff]
    %v638 = vld [vmem:[#allocation5 + $0xb50] sm:$0xff]
    %v639 = vld [vmem:[#allocation5 + $0xb58] sm:$0xff]
    %v640 = vld [vmem:[#allocation5 + $0xb60] sm:$0xff]
    %v641 = vld [vmem:[#allocation5 + $0xb68] sm:$0xff]
    %v642 = vld [vmem:[#allocation5 + $0xb70] sm:$0xff]
    %v643 = vld [vmem:[#allocation5 + $0xb78] sm:$0xff]
    %v644 = vld [vmem:[#allocation5 + $0xb80] sm:$0xff]
    %v645 = vld [vmem:[#allocation5 + $0xb88] sm:$0xff]
    %v646 = vld [vmem:[#allocation5 + $0xb90] sm:$0xff]
    %v647 = vld [vmem:[#allocation5 + $0xb98] sm:$0xff]
    %v648 = vld [vmem:[#allocation5 + $0xba0] sm:$0xff]
    %v649 = vld [vmem:[#allocation5 + $0xba8] sm:$0xff]
    %v650 = vld [vmem:[#allocation5 + $0xbb0] sm:$0xff]
    %v651 = vld [vmem:[#allocation5 + $0xbb8] sm:$0xff]
    %v652 = vld [vmem:[#allocation5 + $0xbc0] sm:$0xff]
    %v653 = vld [vmem:[#allocation5 + $0xbc8] sm:$0xff]
    %v654 = vld [vmem:[#allocation5 + $0xbd0] sm:$0xff]
    %v655 = vld [vmem:[#allocation5 + $0xbd8] sm:$0xff]
    %v656 = vld [vmem:[#allocation5 + $0xbe0] sm:$0xff]
    %v657 = vld [vmem:[#allocation5 + $0xbe8] sm:$0xff]
    %v658 = vld [vmem:[#allocation5 + $0xbf0] sm:$0xff]
    %v659 = vld [vmem:[#allocation5 + $0xbf8] sm:$0xff]
    %v660 = vld [vmem:[#allocation5 + $0xc00] sm:$0xff]
    %v661 = vld [vmem:[#allocation5 + $0xc08] sm:$0xff]
    %v662 = vld [vmem:[#allocation5 + $0xc10] sm:$0xff]
    %v663 = vld [vmem:[#allocation5 + $0xc18] sm:$0xff]
    %v664 = vld [vmem:[#allocation5 + $0xc20] sm:$0xff]
    %v665 = vld [vmem:[#allocation5 + $0xc28] sm:$0xff]
    %v666 = vld [vmem:[#allocation5 + $0xc30] sm:$0xff]
    %v667 = vld [vmem:[#allocation5 + $0xc38] sm:$0xff]
    %v668 = vld [vmem:[#allocation5 + $0xc40] sm:$0xff]
    %v669 = vld [vmem:[#allocation5 + $0xc48] sm:$0xff]
    %v670 = vld [vmem:[#allocation5 + $0xc50] sm:$0xff]
    %v671 = vld [vmem:[#allocation5 + $0xc58] sm:$0xff]
    %v672 = vld [vmem:[#allocation5 + $0xc60] sm:$0xff]
    %v673 = vld [vmem:[#allocation5 + $0xc68] sm:$0xff]
    %v674 = vld [vmem:[#allocation5 + $0xc70] sm:$0xff]
    %v675 = vld [vmem:[#allocation5 + $0xc78] sm:$0xff]
    %v676 = vld [vmem:[#allocation5 + $0xc80] sm:$0xff]
    %v677 = vld [vmem:[#allocation5 + $0xc88] sm:$0xff]
    %v678 = vld [vmem:[#allocation5 + $0xc90] sm:$0xff]
    %v679 = vld [vmem:[#allocation5 + $0xc98] sm:$0xff]
    %v680 = vld [vmem:[#allocation5 + $0xca0] sm:$0xff]
    %v681 = vld [vmem:[#allocation5 + $0xca8] sm:$0xff]
    %v682 = vld [vmem:[#allocation5 + $0xcb0] sm:$0xff]
    %v683 = vld [vmem:[#allocation5 + $0xcb8] sm:$0xff]
    %v684 = vld [vmem:[#allocation5 + $0xcc0] sm:$0xff]
    %v685 = vld [vmem:[#allocation5 + $0xcc8] sm:$0xff]
    %v686 = vld [vmem:[#allocation5 + $0xcd0] sm:$0xff]
    %v687 = vld [vmem:[#allocation5 + $0xcd8] sm:$0xff]
    %v688 = vld [vmem:[#allocation5 + $0xce0] sm:$0xff]
    %v689 = vld [vmem:[#allocation5 + $0xce8] sm:$0xff]
    %v690 = vld [vmem:[#allocation5 + $0xcf0] sm:$0xff]
    %v691 = vld [vmem:[#allocation5 + $0xcf8] sm:$0xff]
    %v692 = vld [vmem:[#allocation5 + $0xd00] sm:$0xff]
    %v693 = vld [vmem:[#allocation5 + $0xd08] sm:$0xff]
    %v694 = vld [vmem:[#allocation5 + $0xd10] sm:$0xff]
    %v695 = vld [vmem:[#allocation5 + $0xd18] sm:$0xff]
    %v696 = vld [vmem:[#allocation5 + $0xd20] sm:$0xff]
    %v697 = vld [vmem:[#allocation5 + $0xd28] sm:$0xff]
    %v698 = vld [vmem:[#allocation5 + $0xd30] sm:$0xff]
    %v699 = vld [vmem:[#allocation5 + $0xd38] sm:$0xff]
    %v700 = vld [vmem:[#allocation5 + $0xd40] sm:$0xff]
    %v701 = vld [vmem:[#allocation5 + $0xd48] sm:$0xff]
    %v702 = vld [vmem:[#allocation5 + $0xd50] sm:$0xff]
    %v703 = vld [vmem:[#allocation5 + $0xd58] sm:$0xff]
    %v704 = vld [vmem:[#allocation5 + $0xd60] sm:$0xff]
    %v705 = vld [vmem:[#allocation5 + $0xd68] sm:$0xff]
    %v706 = vld [vmem:[#allocation5 + $0xd70] sm:$0xff]
    %v707 = vld [vmem:[#allocation5 + $0xd78] sm:$0xff]
    %v708 = vld [vmem:[#allocation5 + $0xd80] sm:$0xff]
    %v709 = vld [vmem:[#allocation5 + $0xd88] sm:$0xff]
    %v710 = vld [vmem:[#allocation5 + $0xd90] sm:$0xff]
    %v711 = vld [vmem:[#allocation5 + $0xd98] sm:$0xff]
    %v712 = vld [vmem:[#allocation5 + $0xda0] sm:$0xff]
    %v713 = vld [vmem:[#allocation5 + $0xda8] sm:$0xff]
    %v714 = vld [vmem:[#allocation5 + $0xdb0] sm:$0xff]
    %v715 = vld [vmem:[#allocation5 + $0xdb8] sm:$0xff]
    %v716 = vld [vmem:[#allocation5 + $0xdc0] sm:$0xff]
    %v717 = vld [vmem:[#allocation5 + $0xdc8] sm:$0xff]
    %v718 = vld [vmem:[#allocation5 + $0xdd0] sm:$0xff]
    %v719 = vld [vmem:[#allocation5 + $0xdd8] sm:$0xff]
    %v720 = vld [vmem:[#allocation5 + $0xde0] sm:$0xff]
    %v721 = vld [vmem:[#allocation5 + $0xde8] sm:$0xff]
    %v722 = vld [vmem:[#allocation5 + $0xdf0] sm:$0xff]
    %v723 = vld [vmem:[#allocation5 + $0xdf8] sm:$0xff]
    %v724 = vld [vmem:[#allocation7] sm:$0xf]
    %v726 = vlaneseq
    %v727 = vshrl.u32 %v726, 7
    %v728 = vsub.s32 0, %v727
    %v729 = vrot.slane %v724, %v728
    %v730 = vlaneseq
    %v731 = vshrl.u32 %v730, 7
    %v732 = vsub.s32 1, %v731
    %v733 = vrot.slane %v724, %v732
    %v734 = vlaneseq
    %v735 = vshrl.u32 %v734, 7
    %v736 = vsub.s32 2, %v735
    %v737 = vrot.slane %v724, %v736
    %v738 = vlaneseq
    %v739 = vshrl.u32 %v738, 7
    %v740 = vsub.s32 3, %v739
    %v741 = vrot.slane %v724, %v740
    %746 = vmatprep.subr.mxu0 %v277
    %747 = vmatpush1.msra.mxu0 %v276
    %748 = vmatprep.subr.mxu0 %v281
    %749 = vmatpush1.msra.mxu0 %v280
    %750 = vmatprep.subr.mxu0 %v285
    %751 = vmatpush1.msra.mxu0 %v284
    %752 = vmatprep.subr.mxu0 %v289
    %753 = vmatpush1.msra.mxu0 %v288
    %754 = vmatprep.subr.mxu0 %v293
    %755 = vmatpush1.msra.mxu0 %v292
    %756 = vmatprep.subr.mxu0 %v297
    %757 = vmatpush1.msra.mxu0 %v296
    %758 = vmatprep.subr.mxu0 %v301
    %759 = vmatpush1.msra.mxu0 %v300
    %760 = vmatprep.subr.mxu0 %v305
    %761 = vmatpush1.msra.mxu0 %v304
    %762 = vmatprep.subr.mxu0 %v309
    %763 = vmatpush1.msra.mxu0 %v308
    %764 = vmatprep.subr.mxu0 %v313
    %765 = vmatpush1.msra.mxu0 %v312
    %766 = vmatprep.subr.mxu0 %v317
    %767 = vmatpush1.msra.mxu0 %v316
    %768 = vmatprep.subr.mxu0 %v321
    %769 = vmatpush1.msra.mxu0 %v320
    %770 = vmatprep.subr.mxu0 %v325
    %771 = vmatpush1.msra.mxu0 %v324
    %772 = vmatprep.subr.mxu0 %v329
    %773 = vmatpush1.msra.mxu0 %v328
    %774 = vmatprep.subr.mxu0 %v333
    %775 = vmatpush1.msra.mxu0 %v332
    %776 = vmatprep.subr.mxu0 %v337
    %777 = vmatpush1.msra.mxu0 %v336
    %778 = vmatprep.subr.mxu0 %v341
    %779 = vmatpush1.msra.mxu0 %v340
    %780 = vmatprep.subr.mxu0 %v345
    %781 = vmatpush1.msra.mxu0 %v344
    %782 = vmatprep.subr.mxu0 %v349
    %783 = vmatpush1.msra.mxu0 %v348
    %784 = vmatprep.subr.mxu0 %v353
    %785 = vmatpush1.msra.mxu0 %v352
    %786 = vmatprep.subr.mxu0 %v357
    %787 = vmatpush1.msra.mxu0 %v356
    %788 = vmatprep.subr.mxu0 %v361
    %789 = vmatpush1.msra.mxu0 %v360
    %790 = vmatprep.subr.mxu0 %v365
    %791 = vmatpush1.msra.mxu0 %v364
    %792 = vmatprep.subr.mxu0 %v369
    %793 = vmatpush1.msra.mxu0 %v368
    %794 = vmatprep.subr.mxu0 %v373
    %795 = vmatpush1.msra.mxu0 %v372
    %796 = vmatprep.subr.mxu0 %v377
    %797 = vmatpush1.msra.mxu0 %v376
    %798 = vmatprep.subr.mxu0 %v381
    %799 = vmatpush1.msra.mxu0 %v380
    %800 = vmatprep.subr.mxu0 %v385
    %801 = vmatpush1.msra.mxu0 %v384
    %802 = vmatprep.subr.mxu0 %v389
    %803 = vmatpush1.msra.mxu0 %v388
    %804 = vmatprep.subr.mxu0 %v393
    %805 = vmatpush1.msra.mxu0 %v392
    %806 = vmatprep.subr.mxu0 %v397
    %807 = vmatpush1.msra.mxu0 %v396
    %808 = vmatprep.subr.mxu0 %v401
    %809 = vmatpush1.msra.mxu0 %v400
    %810 = vmatprep.mubr.f32.mxu0 %v270
    %811 = vmatmul.mubr.f32.gmra.mrb[0].mxu0 %v269
    %v812 = vpop.f32.mrb[0].mxu0
    %v813 = vadd.f32 %v729, %v812
    %v814 = vpop.f32.mrb[0].mxu0
    %v815 = vadd.f32 %v733, %v814
    %816 = vdwg.mxu0
    %817 = vmatprep.subr.mxu0 %v405
    %818 = vmatpush1.msra.mxu0 %v404
    %819 = vmatprep.subr.mxu0 %v409
    %820 = vmatpush1.msra.mxu0 %v408
    %821 = vmatprep.subr.mxu0 %v413
    %822 = vmatpush1.msra.mxu0 %v412
    %823 = vmatprep.subr.mxu0 %v417
    %824 = vmatpush1.msra.mxu0 %v416
    %825 = vmatprep.subr.mxu0 %v421
    %826 = vmatpush1.msra.mxu0 %v420
    %827 = vmatprep.subr.mxu0 %v425
    %828 = vmatpush1.msra.mxu0 %v424
    %829 = vmatprep.subr.mxu0 %v429
    %830 = vmatpush1.msra.mxu0 %v428
    %831 = vmatprep.subr.mxu0 %v433
    %832 = vmatpush1.msra.mxu0 %v432
    %833 = vmatprep.subr.mxu0 %v437
    %834 = vmatpush1.msra.mxu0 %v436
    %835 = vmatprep.subr.mxu0 %v441
    %836 = vmatpush1.msra.mxu0 %v440
    %837 = vmatprep.subr.mxu0 %v445
    %838 = vmatpush1.msra.mxu0 %v444
    %839 = vmatprep.subr.mxu0 %v449
    %840 = vmatpush1.msra.mxu0 %v448
    %841 = vmatprep.subr.mxu0 %v453
    %842 = vmatpush1.msra.mxu0 %v452
    %843 = vmatprep.subr.mxu0 %v457
    %844 = vmatpush1.msra.mxu0 %v456
    %845 = vmatprep.subr.mxu0 %v461
    %846 = vmatpush1.msra.mxu0 %v460
    %847 = vmatprep.subr.mxu0 %v465
    %848 = vmatpush1.msra.mxu0 %v464
    %849 = vmatprep.subr.mxu0 %v469
    %850 = vmatpush1.msra.mxu0 %v468
    %851 = vmatprep.subr.mxu0 %v473
    %852 = vmatpush1.msra.mxu0 %v472
    %853 = vmatprep.subr.mxu0 %v477
    %854 = vmatpush1.msra.mxu0 %v476
    %855 = vmatprep.subr.mxu0 %v481
    %856 = vmatpush1.msra.mxu0 %v480
    %857 = vmatprep.subr.mxu0 %v485
    %858 = vmatpush1.msra.mxu0 %v484
    %859 = vmatprep.subr.mxu0 %v489
    %860 = vmatpush1.msra.mxu0 %v488
    %861 = vmatprep.subr.mxu0 %v493
    %862 = vmatpush1.msra.mxu0 %v492
    %863 = vmatprep.subr.mxu0 %v497
    %864 = vmatpush1.msra.mxu0 %v496
    %865 = vmatprep.subr.mxu0 %v501
    %866 = vmatpush1.msra.mxu0 %v500
    %867 = vmatprep.subr.mxu0 %v505
    %868 = vmatpush1.msra.mxu0 %v504
    %869 = vmatprep.subr.mxu0 %v509
    %870 = vmatpush1.msra.mxu0 %v508
    %871 = vmatprep.subr.mxu0 %v513
    %872 = vmatpush1.msra.mxu0 %v512
    %873 = vmatprep.subr.mxu0 %v517
    %874 = vmatpush1.msra.mxu0 %v516
    %875 = vmatprep.subr.mxu0 %v521
    %876 = vmatpush1.msra.mxu0 %v520
    %877 = vmatprep.subr.mxu0 %v525
    %878 = vmatpush1.msra.mxu0 %v524
    %879 = vmatprep.subr.mxu0 %v529
    %880 = vmatpush1.msra.mxu0 %v528
    %881 = vmatprep.mubr.f32.mxu0 %v272
    %882 = vmatmul.mubr.f32.gmra.mrb[0].mxu0 %v271
    %v883 = vpop.f32.mrb[0].mxu0
    %v884 = vadd.f32 %v813, %v883
    %v885 = vpop.f32.mrb[0].mxu0
    %v886 = vadd.f32 %v815, %v885
    %887 = vdwg.mxu0
    %888 = vmatprep.subr.mxu0 %v533
    %889 = vmatpush1.msra.mxu0 %v532
    %890 = vmatprep.subr.mxu0 %v537
    %891 = vmatpush1.msra.mxu0 %v536
    %892 = vmatprep.subr.mxu0 %v541
    %893 = vmatpush1.msra.mxu0 %v540
    %894 = vmatprep.subr.mxu0 %v545
    %895 = vmatpush1.msra.mxu0 %v544
    %896 = vmatprep.subr.mxu0 %v549
    %897 = vmatpush1.msra.mxu0 %v548
    %898 = vmatprep.subr.mxu0 %v553
    %899 = vmatpush1.msra.mxu0 %v552
    %900 = vmatprep.subr.mxu0 %v557
    %901 = vmatpush1.msra.mxu0 %v556
    %902 = vmatprep.subr.mxu0 %v561
    %903 = vmatpush1.msra.mxu0 %v560
    %904 = vmatprep.subr.mxu0 %v565
    %905 = vmatpush1.msra.mxu0 %v564
    %906 = vmatprep.subr.mxu0 %v569
    %907 = vmatpush1.msra.mxu0 %v568
    %908 = vmatprep.subr.mxu0 %v573
    %909 = vmatpush1.msra.mxu0 %v572
    %910 = vmatprep.subr.mxu0 %v577
    %911 = vmatpush1.msra.mxu0 %v576
    %912 = vmatprep.subr.mxu0 %v581
    %913 = vmatpush1.msra.mxu0 %v580
    %914 = vmatprep.subr.mxu0 %v585
    %915 = vmatpush1.msra.mxu0 %v584
    %916 = vmatprep.subr.mxu0 %v589
    %917 = vmatpush1.msra.mxu0 %v588
    %918 = vmatprep.subr.mxu0 %v593
    %919 = vmatpush1.msra.mxu0 %v592
    %920 = vmatprep.subr.mxu0 %v597
    %921 = vmatpush1.msra.mxu0 %v596
    %922 = vmatprep.subr.mxu0 %v601
    %923 = vmatpush1.msra.mxu0 %v600
    %924 = vmatprep.subr.mxu0 %v605
    %925 = vmatpush1.msra.mxu0 %v604
    %926 = vmatprep.subr.mxu0 %v609
    %927 = vmatpush1.msra.mxu0 %v608
    %928 = vmatprep.subr.mxu0 %v613
    %929 = vmatpush1.msra.mxu0 %v612
    %930 = vmatprep.subr.mxu0 %v617
    %931 = vmatpush1.msra.mxu0 %v616
    %932 = vmatprep.subr.mxu0 %v621
    %933 = vmatpush1.msra.mxu0 %v620
    %934 = vmatprep.subr.mxu0 %v625
    %935 = vmatpush1.msra.mxu0 %v624
    %936 = vmatprep.subr.mxu0 %v629
    %937 = vmatpush1.msra.mxu0 %v628
    %938 = vmatprep.subr.mxu0 %v633
    %939 = vmatpush1.msra.mxu0 %v632
    %940 = vmatprep.subr.mxu0 %v637
    %941 = vmatpush1.msra.mxu0 %v636
    %942 = vmatprep.subr.mxu0 %v641
    %943 = vmatpush1.msra.mxu0 %v640
    %944 = vmatprep.subr.mxu0 %v645
    %945 = vmatpush1.msra.mxu0 %v644
    %946 = vmatprep.subr.mxu0 %v649
    %947 = vmatpush1.msra.mxu0 %v648
    %948 = vmatprep.subr.mxu0 %v653
    %949 = vmatpush1.msra.mxu0 %v652
    %950 = vmatprep.subr.mxu0 %v657
    %951 = vmatpush1.msra.mxu0 %v656
    %952 = vmatprep.mubr.f32.mxu0 %v274
    %953 = vmatmul.mubr.f32.gmra.mrb[0].mxu0 %v273
    %v954 = vpop.f32.mrb[0].mxu0
    %v955 = vadd.f32 %v884, %v954
    %v956 = vpop.f32.mrb[0].mxu0
    %v957 = vadd.f32 %v886, %v956
    %958 = vdwg.mxu0
    %959 = vmatprep.subr.mxu0 %v661
    %960 = vmatpush1.msra.mxu0 %v660
    %961 = vmatprep.subr.mxu0 %v665
    %962 = vmatpush1.msra.mxu0 %v664
    %963 = vmatprep.subr.mxu0 %v669
    %964 = vmatpush1.msra.mxu0 %v668
    %965 = vmatprep.subr.mxu0 %v673
    %966 = vmatpush1.msra.mxu0 %v672
    %967 = vmatprep.subr.mxu0 %v677
    %968 = vmatpush1.msra.mxu0 %v676
    %969 = vmatprep.subr.mxu0 %v681
    %970 = vmatpush1.msra.mxu0 %v680
    %971 = vmatprep.subr.mxu0 %v685
    %972 = vmatpush1.msra.mxu0 %v684
    %973 = vmatprep.subr.mxu0 %v689
    %974 = vmatpush1.msra.mxu0 %v688
    %975 = vmatprep.subr.mxu0 %v693
    %976 = vmatpush1.msra.mxu0 %v692
    %977 = vmatprep.subr.mxu0 %v697
    %978 = vmatpush1.msra.mxu0 %v696
    %979 = vmatprep.subr.mxu0 %v701
    %980 = vmatpush1.msra.mxu0 %v700
    %981 = vmatprep.subr.mxu0 %v705
    %982 = vmatpush1.msra.mxu0 %v704
    %983 = vmatprep.subr.mxu0 %v709
    %984 = vmatpush1.msra.mxu0 %v708
    %985 = vmatprep.subr.mxu0 %v713
    %986 = vmatpush1.msra.mxu0 %v712
    %987 = vmatprep.subr.mxu0 %v717
    %988 = vmatpush1.msra.mxu0 %v716
    %989 = vmatprep.subr.mxu0 %v721
    %990 = vmatpush1.msra.mxu0 %v720
    %991 = vmatprep.subr.mxu0 0.0
    %992 = vmatpush1.msra.mxu0 0.0
    %993 = vmatprep.subr.mxu0 0.0
    %994 = vmatpush1.msra.mxu0 0.0
    %995 = vmatprep.subr.mxu0 0.0
    %996 = vmatpush1.msra.mxu0 0.0
    %997 = vmatprep.subr.mxu0 0.0
    %998 = vmatpush1.msra.mxu0 0.0
    %999 = vmatprep.subr.mxu0 0.0
    %1000 = vmatpush1.msra.mxu0 0.0
    %1001 = vmatprep.subr.mxu0 0.0
    %1002 = vmatpush1.msra.mxu0 0.0
    %1003 = vmatprep.subr.mxu0 0.0
    %1004 = vmatpush1.msra.mxu0 0.0
    %1005 = vmatprep.subr.mxu0 0.0
    %1006 = vmatpush1.msra.mxu0 0.0
    %1007 = vmatprep.subr.mxu0 0.0
    %1008 = vmatpush1.msra.mxu0 0.0
    %1009 = vmatprep.subr.mxu0 0.0
    %1010 = vmatpush1.msra.mxu0 0.0
    %1011 = vmatprep.subr.mxu0 0.0
    %1012 = vmatpush1.msra.mxu0 0.0
    %1013 = vmatprep.subr.mxu0 0.0
    %1014 = vmatpush1.msra.mxu0 0.0
    %1015 = vmatprep.subr.mxu0 0.0
    %1016 = vmatpush1.msra.mxu0 0.0
    %1017 = vmatprep.subr.mxu0 0.0
    %1018 = vmatpush1.msra.mxu0 0.0
    %1019 = vmatprep.subr.mxu0 0.0
    %1020 = vmatpush1.msra.mxu0 0.0
    %1021 = vmatprep.subr.mxu0 0.0
    %1022 = vmatpush1.msra.mxu0 0.0
    %1023 = vmatprep.mubr.f32.mxu0 0.0
    %1024 = vmatmul.mubr.f32.gmra.mrb[0].mxu0 %v275
    %v1025 = vpop.f32.mrb[0].mxu0
    %v1026 = vadd.f32 %v955, %v1025
    %v1027 = vpop.f32.mrb[0].mxu0
    %v1028 = vadd.f32 %v957, %v1027
    %1029 = vdwg.mxu0
    %1030 = vmatprep.subr.mxu0 %v279
    %1031 = vmatpush1.msra.mxu0 %v278
    %1032 = vmatprep.subr.mxu0 %v283
    %1033 = vmatpush1.msra.mxu0 %v282
    %1034 = vmatprep.subr.mxu0 %v287
    %1035 = vmatpush1.msra.mxu0 %v286
    %1036 = vmatprep.subr.mxu0 %v291
    %1037 = vmatpush1.msra.mxu0 %v290
    %1038 = vmatprep.subr.mxu0 %v295
    %1039 = vmatpush1.msra.mxu0 %v294
    %1040 = vmatprep.subr.mxu0 %v299
    %1041 = vmatpush1.msra.mxu0 %v298
    %1042 = vmatprep.subr.mxu0 %v303
    %1043 = vmatpush1.msra.mxu0 %v302
    %1044 = vmatprep.subr.mxu0 %v307
    %1045 = vmatpush1.msra.mxu0 %v306
    %1046 = vmatprep.subr.mxu0 %v311
    %1047 = vmatpush1.msra.mxu0 %v310
    %1048 = vmatprep.subr.mxu0 %v315
    %1049 = vmatpush1.msra.mxu0 %v314
    %1050 = vmatprep.subr.mxu0 %v319
    %1051 = vmatpush1.msra.mxu0 %v318
    %1052 = vmatprep.subr.mxu0 %v323
    %1053 = vmatpush1.msra.mxu0 %v322
    %1054 = vmatprep.subr.mxu0 %v327
    %1055 = vmatpush1.msra.mxu0 %v326
    %1056 = vmatprep.subr.mxu0 %v331
    %1057 = vmatpush1.msra.mxu0 %v330
    %1058 = vmatprep.subr.mxu0 %v335
    %1059 = vmatpush1.msra.mxu0 %v334
    %1060 = vmatprep.subr.mxu0 %v339
    %1061 = vmatpush1.msra.mxu0 %v338
    %1062 = vmatprep.subr.mxu0 %v343
    %1063 = vmatpush1.msra.mxu0 %v342
    %1064 = vmatprep.subr.mxu0 %v347
    %1065 = vmatpush1.msra.mxu0 %v346
    %1066 = vmatprep.subr.mxu0 %v351
    %1067 = vmatpush1.msra.mxu0 %v350
    %1068 = vmatprep.subr.mxu0 %v355
    %1069 = vmatpush1.msra.mxu0 %v354
    %1070 = vmatprep.subr.mxu0 %v359
    %1071 = vmatpush1.msra.mxu0 %v358
    %1072 = vmatprep.subr.mxu0 %v363
    %1073 = vmatpush1.msra.mxu0 %v362
    %1074 = vmatprep.subr.mxu0 %v367
    %1075 = vmatpush1.msra.mxu0 %v366
    %1076 = vmatprep.subr.mxu0 %v371
    %1077 = vmatpush1.msra.mxu0 %v370
    %1078 = vmatprep.subr.mxu0 %v375
    %1079 = vmatpush1.msra.mxu0 %v374
    %1080 = vmatprep.subr.mxu0 %v379
    %1081 = vmatpush1.msra.mxu0 %v378
    %1082 = vmatprep.subr.mxu0 %v383
    %1083 = vmatpush1.msra.mxu0 %v382
    %1084 = vmatprep.subr.mxu0 %v387
    %1085 = vmatpush1.msra.mxu0 %v386
    %1086 = vmatprep.subr.mxu0 %v391
    %1087 = vmatpush1.msra.mxu0 %v390
    %1088 = vmatprep.subr.mxu0 %v395
    %1089 = vmatpush1.msra.mxu0 %v394
    %1090 = vmatprep.subr.mxu0 %v399
    %1091 = vmatpush1.msra.mxu0 %v398
    %1092 = vmatprep.subr.mxu0 %v403
    %1093 = vmatpush1.msra.mxu0 %v402
    %1094 = vmatprep.mubr.f32.mxu0 %v270
    %1095 = vmatmul.mubr.f32.gmra.mrb[0].mxu0 %v269
    %v1096 = vpop.f32.mrb[0].mxu0
    %v1097 = vadd.f32 %v737, %v1096
    %v1098 = vpop.f32.mrb[0].mxu0
    %v1099 = vadd.f32 %v741, %v1098
    %1100 = vdwg.mxu0
    %1101 = vmatprep.subr.mxu0 %v407
    %1102 = vmatpush1.msra.mxu0 %v406
    %1103 = vmatprep.subr.mxu0 %v411
    %1104 = vmatpush1.msra.mxu0 %v410
    %1105 = vmatprep.subr.mxu0 %v415
    %1106 = vmatpush1.msra.mxu0 %v414
    %1107 = vmatprep.subr.mxu0 %v419
    %1108 = vmatpush1.msra.mxu0 %v418
    %1109 = vmatprep.subr.mxu0 %v423
    %1110 = vmatpush1.msra.mxu0 %v422
    %1111 = vmatprep.subr.mxu0 %v427
    %1112 = vmatpush1.msra.mxu0 %v426
    %1113 = vmatprep.subr.mxu0 %v431
    %1114 = vmatpush1.msra.mxu0 %v430
    %1115 = vmatprep.subr.mxu0 %v435
    %1116 = vmatpush1.msra.mxu0 %v434
    %1117 = vmatprep.subr.mxu0 %v439
    %1118 = vmatpush1.msra.mxu0 %v438
    %1119 = vmatprep.subr.mxu0 %v443
    %1120 = vmatpush1.msra.mxu0 %v442
    %1121 = vmatprep.subr.mxu0 %v447
    %1122 = vmatpush1.msra.mxu0 %v446
    %1123 = vmatprep.subr.mxu0 %v451
    %1124 = vmatpush1.msra.mxu0 %v450
    %1125 = vmatprep.subr.mxu0 %v455
    %1126 = vmatpush1.msra.mxu0 %v454
    %1127 = vmatprep.subr.mxu0 %v459
    %1128 = vmatpush1.msra.mxu0 %v458
    %1129 = vmatprep.subr.mxu0 %v463
    %1130 = vmatpush1.msra.mxu0 %v462
    %1131 = vmatprep.subr.mxu0 %v467
    %1132 = vmatpush1.msra.mxu0 %v466
    %1133 = vmatprep.subr.mxu0 %v471
    %1134 = vmatpush1.msra.mxu0 %v470
    %1135 = vmatprep.subr.mxu0 %v475
    %1136 = vmatpush1.msra.mxu0 %v474
    %1137 = vmatprep.subr.mxu0 %v479
    %1138 = vmatpush1.msra.mxu0 %v478
    %1139 = vmatprep.subr.mxu0 %v483
    %1140 = vmatpush1.msra.mxu0 %v482
    %1141 = vmatprep.subr.mxu0 %v487
    %1142 = vmatpush1.msra.mxu0 %v486
    %1143 = vmatprep.subr.mxu0 %v491
    %1144 = vmatpush1.msra.mxu0 %v490
    %1145 = vmatprep.subr.mxu0 %v495
    %1146 = vmatpush1.msra.mxu0 %v494
    %1147 = vmatprep.subr.mxu0 %v499
    %1148 = vmatpush1.msra.mxu0 %v498
    %1149 = vmatprep.subr.mxu0 %v503
    %1150 = vmatpush1.msra.mxu0 %v502
    %1151 = vmatprep.subr.mxu0 %v507
    %1152 = vmatpush1.msra.mxu0 %v506
    %1153 = vmatprep.subr.mxu0 %v511
    %1154 = vmatpush1.msra.mxu0 %v510
    %1155 = vmatprep.subr.mxu0 %v515
    %1156 = vmatpush1.msra.mxu0 %v514
    %1157 = vmatprep.subr.mxu0 %v519
    %1158 = vmatpush1.msra.mxu0 %v518
    %1159 = vmatprep.subr.mxu0 %v523
    %1160 = vmatpush1.msra.mxu0 %v522
    %1161 = vmatprep.subr.mxu0 %v527
    %1162 = vmatpush1.msra.mxu0 %v526
    %1163 = vmatprep.subr.mxu0 %v531
    %1164 = vmatpush1.msra.mxu0 %v530
    %1165 = vmatprep.mubr.f32.mxu0 %v272
    %1166 = vmatmul.mubr.f32.gmra.mrb[0].mxu0 %v271
    %v1167 = vpop.f32.mrb[0].mxu0
    %v1168 = vadd.f32 %v1097, %v1167
    %v1169 = vpop.f32.mrb[0].mxu0
    %v1170 = vadd.f32 %v1099, %v1169
    %1171 = vdwg.mxu0
    %1172 = vmatprep.subr.mxu0 %v535
    %1173 = vmatpush1.msra.mxu0 %v534
    %1174 = vmatprep.subr.mxu0 %v539
    %1175 = vmatpush1.msra.mxu0 %v538
    %1176 = vmatprep.subr.mxu0 %v543
    %1177 = vmatpush1.msra.mxu0 %v542
    %1178 = vmatprep.subr.mxu0 %v547
    %1179 = vmatpush1.msra.mxu0 %v546
    %1180 = vmatprep.subr.mxu0 %v551
    %1181 = vmatpush1.msra.mxu0 %v550
    %1182 = vmatprep.subr.mxu0 %v555
    %1183 = vmatpush1.msra.mxu0 %v554
    %1184 = vmatprep.subr.mxu0 %v559
    %1185 = vmatpush1.msra.mxu0 %v558
    %1186 = vmatprep.subr.mxu0 %v563
    %1187 = vmatpush1.msra.mxu0 %v562
    %1188 = vmatprep.subr.mxu0 %v567
    %1189 = vmatpush1.msra.mxu0 %v566
    %1190 = vmatprep.subr.mxu0 %v571
    %1191 = vmatpush1.msra.mxu0 %v570
    %1192 = vmatprep.subr.mxu0 %v575
    %1193 = vmatpush1.msra.mxu0 %v574
    %1194 = vmatprep.subr.mxu0 %v579
    %1195 = vmatpush1.msra.mxu0 %v578
    %1196 = vmatprep.subr.mxu0 %v583
    %1197 = vmatpush1.msra.mxu0 %v582
    %1198 = vmatprep.subr.mxu0 %v587
    %1199 = vmatpush1.msra.mxu0 %v586
    %1200 = vmatprep.subr.mxu0 %v591
    %1201 = vmatpush1.msra.mxu0 %v590
    %1202 = vmatprep.subr.mxu0 %v595
    %1203 = vmatpush1.msra.mxu0 %v594
    %1204 = vmatprep.subr.mxu0 %v599
    %1205 = vmatpush1.msra.mxu0 %v598
    %1206 = vmatprep.subr.mxu0 %v603
    %1207 = vmatpush1.msra.mxu0 %v602
    %1208 = vmatprep.subr.mxu0 %v607
    %1209 = vmatpush1.msra.mxu0 %v606
    %1210 = vmatprep.subr.mxu0 %v611
    %1211 = vmatpush1.msra.mxu0 %v610
    %1212 = vmatprep.subr.mxu0 %v615
    %1213 = vmatpush1.msra.mxu0 %v614
    %1214 = vmatprep.subr.mxu0 %v619
    %1215 = vmatpush1.msra.mxu0 %v618
    %1216 = vmatprep.subr.mxu0 %v623
    %1217 = vmatpush1.msra.mxu0 %v622
    %1218 = vmatprep.subr.mxu0 %v627
    %1219 = vmatpush1.msra.mxu0 %v626
    %1220 = vmatprep.subr.mxu0 %v631
    %1221 = vmatpush1.msra.mxu0 %v630
    %1222 = vmatprep.subr.mxu0 %v635
    %1223 = vmatpush1.msra.mxu0 %v634
    %1224 = vmatprep.subr.mxu0 %v639
    %1225 = vmatpush1.msra.mxu0 %v638
    %1226 = vmatprep.subr.mxu0 %v643
    %1227 = vmatpush1.msra.mxu0 %v642
    %1228 = vmatprep.subr.mxu0 %v647
    %1229 = vmatpush1.msra.mxu0 %v646
    %1230 = vmatprep.subr.mxu0 %v651
    %1231 = vmatpush1.msra.mxu0 %v650
    %1232 = vmatprep.subr.mxu0 %v655
    %1233 = vmatpush1.msra.mxu0 %v654
    %1234 = vmatprep.subr.mxu0 %v659
    %1235 = vmatpush1.msra.mxu0 %v658
    %1236 = vmatprep.mubr.f32.mxu0 %v274
    %1237 = vmatmul.mubr.f32.gmra.mrb[0].mxu0 %v273
    %v1238 = vpop.f32.mrb[0].mxu0
    %v1239 = vadd.f32 %v1168, %v1238
    %v1240 = vpop.f32.mrb[0].mxu0
    %v1241 = vadd.f32 %v1170, %v1240
    %1242 = vdwg.mxu0
    %1243 = vmatprep.subr.mxu0 %v663
    %1244 = vmatpush1.msra.mxu0 %v662
    %1245 = vmatprep.subr.mxu0 %v667
    %1246 = vmatpush1.msra.mxu0 %v666
    %1247 = vmatprep.subr.mxu0 %v671
    %1248 = vmatpush1.msra.mxu0 %v670
    %1249 = vmatprep.subr.mxu0 %v675
    %1250 = vmatpush1.msra.mxu0 %v674
    %1251 = vmatprep.subr.mxu0 %v679
    %1252 = vmatpush1.msra.mxu0 %v678
    %1253 = vmatprep.subr.mxu0 %v683
    %1254 = vmatpush1.msra.mxu0 %v682
    %1255 = vmatprep.subr.mxu0 %v687
    %1256 = vmatpush1.msra.mxu0 %v686
    %1257 = vmatprep.subr.mxu0 %v691
    %1258 = vmatpush1.msra.mxu0 %v690
    %1259 = vmatprep.subr.mxu0 %v695
    %1260 = vmatpush1.msra.mxu0 %v694
    %1261 = vmatprep.subr.mxu0 %v699
    %1262 = vmatpush1.msra.mxu0 %v698
    %1263 = vmatprep.subr.mxu0 %v703
    %1264 = vmatpush1.msra.mxu0 %v702
    %1265 = vmatprep.subr.mxu0 %v707
    %1266 = vmatpush1.msra.mxu0 %v706
    %1267 = vmatprep.subr.mxu0 %v711
    %1268 = vmatpush1.msra.mxu0 %v710
    %1269 = vmatprep.subr.mxu0 %v715
    %1270 = vmatpush1.msra.mxu0 %v714
    %1271 = vmatprep.subr.mxu0 %v719
    %1272 = vmatpush1.msra.mxu0 %v718
    %1273 = vmatprep.subr.mxu0 %v723
    %1274 = vmatpush1.msra.mxu0 %v722
    %1275 = vmatprep.subr.mxu0 0.0
    %1276 = vmatpush1.msra.mxu0 0.0
    %1277 = vmatprep.subr.mxu0 0.0
    %1278 = vmatpush1.msra.mxu0 0.0
    %1279 = vmatprep.subr.mxu0 0.0
    %1280 = vmatpush1.msra.mxu0 0.0
    %1281 = vmatprep.subr.mxu0 0.0
    %1282 = vmatpush1.msra.mxu0 0.0
    %1283 = vmatprep.subr.mxu0 0.0
    %1284 = vmatpush1.msra.mxu0 0.0
    %1285 = vmatprep.subr.mxu0 0.0
    %1286 = vmatpush1.msra.mxu0 0.0
    %1287 = vmatprep.subr.mxu0 0.0
    %1288 = vmatpush1.msra.mxu0 0.0
    %1289 = vmatprep.subr.mxu0 0.0
    %1290 = vmatpush1.msra.mxu0 0.0
    %1291 = vmatprep.subr.mxu0 0.0
    %1292 = vmatpush1.msra.mxu0 0.0
    %1293 = vmatprep.subr.mxu0 0.0
    %1294 = vmatpush1.msra.mxu0 0.0
    %1295 = vmatprep.subr.mxu0 0.0
    %1296 = vmatpush1.msra.mxu0 0.0
    %1297 = vmatprep.subr.mxu0 0.0
    %1298 = vmatpush1.msra.mxu0 0.0
    %1299 = vmatprep.subr.mxu0 0.0
    %1300 = vmatpush1.msra.mxu0 0.0
    %1301 = vmatprep.subr.mxu0 0.0
    %1302 = vmatpush1.msra.mxu0 0.0
    %1303 = vmatprep.subr.mxu0 0.0
    %1304 = vmatpush1.msra.mxu0 0.0
    %1305 = vmatprep.subr.mxu0 0.0
    %1306 = vmatpush1.msra.mxu0 0.0
    %1307 = vmatprep.mubr.f32.mxu0 0.0
    %1308 = vmatmul.mubr.f32.gmra.mrb[0].mxu0 %v275
    %v1309 = vpop.f32.mrb[0].mxu0
    %v1310 = vadd.f32 %v1239, %v1309
    %v1311 = vpop.f32.mrb[0].mxu0
    %v1312 = vadd.f32 %v1241, %v1311
    %1313 = vdwg.mxu0
    %v1314 = vxor.u32 %v1026, 2147483648
    %v1315 = vxor.u32 %v1028, 2147483648
    %v1316 = vxor.u32 %v1310, 2147483648
    %v1317 = vxor.u32 %v1312, 2147483648
    %v1318 = vmul.f32 %v1314, 1.442695
    %v1319 = vpow.pop %v1318
    %v1320 = vmul.f32 %v1315, 1.442695
    %v1321 = vpow.pop %v1320
    %v1322 = vmul.f32 %v1316, 1.442695
    %v1323 = vpow.pop %v1322
    %v1324 = vmul.f32 %v1317, 1.442695
    %v1325 = vpow.pop %v1324
    %v1326 = vadd.f32 %v1319, 1.0
    %v1327 = vadd.f32 %v1321, 1.0
    %v1328 = vadd.f32 %v1323, 1.0
    %v1329 = vadd.f32 %v1325, 1.0
    %v1330 = vrcp.pop %v1326
    %v1331 = vmul.f32 1.0, %v1330
    %v1332 = vrcp.pop %v1327
    %v1333 = vmul.f32 1.0, %v1332
    %v1334 = vrcp.pop %v1328
    %v1335 = vmul.f32 1.0, %v1334
    %v1336 = vrcp.pop %v1329
    %v1337 = vmul.f32 1.0, %v1336
    %v1338 = vld [vmem:[#allocation8] sm:$0xff]
    %v1339 = vld [vmem:[#allocation8 + $0x8] sm:$0xff]
    %v1340 = vld [vmem:[#allocation8 + $0x10] sm:$0xff]
    %v1341 = vld [vmem:[#allocation8 + $0x18] sm:$0xff]
    %v1342 = vld [vmem:[#allocation8 + $0x20] sm:$0xff]
    %v1343 = vld [vmem:[#allocation8 + $0x28] sm:$0xff]
    %v1344 = vld [vmem:[#allocation8 + $0x30] sm:$0xff]
    %v1345 = vld [vmem:[#allocation8 + $0x38] sm:$0xff]
    %v1346 = vld [vmem:[#allocation8 + $0x40] sm:$0xff]
    %v1347 = vld [vmem:[#allocation8 + $0x48] sm:$0xff]
    %v1348 = vld [vmem:[#allocation8 + $0x50] sm:$0xff]
    %v1349 = vld [vmem:[#allocation8 + $0x58] sm:$0xff]
    %v1350 = vld [vmem:[#allocation8 + $0x60] sm:$0xff]
    %v1351 = vld [vmem:[#allocation8 + $0x68] sm:$0xff]
    %v1352 = vld [vmem:[#allocation8 + $0x70] sm:$0xff]
    %v1353 = vld [vmem:[#allocation8 + $0x78] sm:$0xff]
    %v1354 = vld [vmem:[#allocation8 + $0x80] sm:$0xff]
    %v1355 = vld [vmem:[#allocation8 + $0x88] sm:$0xff]
    %v1356 = vld [vmem:[#allocation8 + $0x90] sm:$0xff]
    %v1357 = vld [vmem:[#allocation8 + $0x98] sm:$0xff]
    %v1358 = vld [vmem:[#allocation8 + $0xa0] sm:$0xff]
    %v1359 = vld [vmem:[#allocation8 + $0xa8] sm:$0xff]
    %v1360 = vld [vmem:[#allocation8 + $0xb0] sm:$0xff]
    %v1361 = vld [vmem:[#allocation8 + $0xb8] sm:$0xff]
    %v1362 = vld [vmem:[#allocation8 + $0xc0] sm:$0xff]
    %v1363 = vld [vmem:[#allocation8 + $0xc8] sm:$0xff]
    %v1364 = vld [vmem:[#allocation8 + $0xd0] sm:$0xff]
    %v1365 = vld [vmem:[#allocation8 + $0xd8] sm:$0xff]
    %v1366 = vld [vmem:[#allocation8 + $0xe0] sm:$0xff]
    %v1367 = vld [vmem:[#allocation8 + $0xe8] sm:$0xff]
    %v1368 = vld [vmem:[#allocation8 + $0xf0] sm:$0xff]
    %v1369 = vld [vmem:[#allocation8 + $0xf8] sm:$0xff]
    %v1370 = vld [vmem:[#allocation8 + $0x100] sm:$0xff]
    %v1371 = vld [vmem:[#allocation8 + $0x108] sm:$0xff]
    %v1372 = vld [vmem:[#allocation8 + $0x110] sm:$0xff]
    %v1373 = vld [vmem:[#allocation8 + $0x118] sm:$0xff]
    %v1374 = vld [vmem:[#allocation8 + $0x120] sm:$0xff]
    %v1375 = vld [vmem:[#allocation8 + $0x128] sm:$0xff]
    %v1376 = vld [vmem:[#allocation8 + $0x130] sm:$0xff]
    %v1377 = vld [vmem:[#allocation8 + $0x138] sm:$0xff]
    %v1378 = vld [vmem:[#allocation8 + $0x140] sm:$0xff]
    %v1379 = vld [vmem:[#allocation8 + $0x148] sm:$0xff]
    %v1380 = vld [vmem:[#allocation8 + $0x150] sm:$0xff]
    %v1381 = vld [vmem:[#allocation8 + $0x158] sm:$0xff]
    %v1382 = vld [vmem:[#allocation8 + $0x160] sm:$0xff]
    %v1383 = vld [vmem:[#allocation8 + $0x168] sm:$0xff]
    %v1384 = vld [vmem:[#allocation8 + $0x170] sm:$0xff]
    %v1385 = vld [vmem:[#allocation8 + $0x178] sm:$0xff]
    %v1386 = vld [vmem:[#allocation8 + $0x180] sm:$0xff]
    %v1387 = vld [vmem:[#allocation8 + $0x188] sm:$0xff]
    %v1388 = vld [vmem:[#allocation8 + $0x190] sm:$0xff]
    %v1389 = vld [vmem:[#allocation8 + $0x198] sm:$0xff]
    %v1390 = vld [vmem:[#allocation8 + $0x1a0] sm:$0xff]
    %v1391 = vld [vmem:[#allocation8 + $0x1a8] sm:$0xff]
    %v1392 = vld [vmem:[#allocation8 + $0x1b0] sm:$0xff]
    %v1393 = vld [vmem:[#allocation8 + $0x1b8] sm:$0xff]
    %v1394 = vld [vmem:[#allocation8 + $0x1c0] sm:$0xff]
    %v1395 = vld [vmem:[#allocation8 + $0x1c8] sm:$0xff]
    %v1396 = vld [vmem:[#allocation8 + $0x1d0] sm:$0xff]
    %v1397 = vld [vmem:[#allocation8 + $0x1d8] sm:$0xff]
    %v1398 = vld [vmem:[#allocation8 + $0x1e0] sm:$0xff]
    %v1399 = vld [vmem:[#allocation8 + $0x1e8] sm:$0xff]
    %v1400 = vld [vmem:[#allocation8 + $0x1f0] sm:$0xff]
    %v1401 = vld [vmem:[#allocation8 + $0x1f8] sm:$0xff]
    %v1402 = vld [vmem:[#allocation8 + $0x200] sm:$0xff]
    %v1403 = vld [vmem:[#allocation8 + $0x208] sm:$0xff]
    %v1404 = vld [vmem:[#allocation8 + $0x210] sm:$0xff]
    %v1405 = vld [vmem:[#allocation8 + $0x218] sm:$0xff]
    %v1406 = vld [vmem:[#allocation8 + $0x220] sm:$0xff]
    %v1407 = vld [vmem:[#allocation8 + $0x228] sm:$0xff]
    %v1408 = vld [vmem:[#allocation8 + $0x230] sm:$0xff]
    %v1409 = vld [vmem:[#allocation8 + $0x238] sm:$0xff]
    %v1410 = vld [vmem:[#allocation8 + $0x240] sm:$0xff]
    %v1411 = vld [vmem:[#allocation8 + $0x248] sm:$0xff]
    %v1412 = vld [vmem:[#allocation8 + $0x250] sm:$0xff]
    %v1413 = vld [vmem:[#allocation8 + $0x258] sm:$0xff]
    %v1414 = vld [vmem:[#allocation8 + $0x260] sm:$0xff]
    %v1415 = vld [vmem:[#allocation8 + $0x268] sm:$0xff]
    %v1416 = vld [vmem:[#allocation8 + $0x270] sm:$0xff]
    %v1417 = vld [vmem:[#allocation8 + $0x278] sm:$0xff]
    %v1418 = vld [vmem:[#allocation8 + $0x280] sm:$0xff]
    %v1419 = vld [vmem:[#allocation8 + $0x288] sm:$0xff]
    %v1420 = vld [vmem:[#allocation8 + $0x290] sm:$0xff]
    %v1421 = vld [vmem:[#allocation8 + $0x298] sm:$0xff]
    %v1422 = vld [vmem:[#allocation8 + $0x2a0] sm:$0xff]
    %v1423 = vld [vmem:[#allocation8 + $0x2a8] sm:$0xff]
    %v1424 = vld [vmem:[#allocation8 + $0x2b0] sm:$0xff]
    %v1425 = vld [vmem:[#allocation8 + $0x2b8] sm:$0xff]
    %v1426 = vld [vmem:[#allocation8 + $0x2c0] sm:$0xff]
    %v1427 = vld [vmem:[#allocation8 + $0x2c8] sm:$0xff]
    %v1428 = vld [vmem:[#allocation8 + $0x2d0] sm:$0xff]
    %v1429 = vld [vmem:[#allocation8 + $0x2d8] sm:$0xff]
    %v1430 = vld [vmem:[#allocation8 + $0x2e0] sm:$0xff]
    %v1431 = vld [vmem:[#allocation8 + $0x2e8] sm:$0xff]
    %v1432 = vld [vmem:[#allocation8 + $0x2f0] sm:$0xff]
    %v1433 = vld [vmem:[#allocation8 + $0x2f8] sm:$0xff]
    %v1434 = vld [vmem:[#allocation8 + $0x300] sm:$0xff]
    %v1435 = vld [vmem:[#allocation8 + $0x308] sm:$0xff]
    %v1436 = vld [vmem:[#allocation8 + $0x310] sm:$0xff]
    %v1437 = vld [vmem:[#allocation8 + $0x318] sm:$0xff]
    %v1438 = vld [vmem:[#allocation8 + $0x320] sm:$0xff]
    %v1439 = vld [vmem:[#allocation8 + $0x328] sm:$0xff]
    %v1440 = vld [vmem:[#allocation8 + $0x330] sm:$0xff]
    %v1441 = vld [vmem:[#allocation8 + $0x338] sm:$0xff]
    %v1442 = vld [vmem:[#allocation8 + $0x340] sm:$0xff]
    %v1443 = vld [vmem:[#allocation8 + $0x348] sm:$0xff]
    %v1444 = vld [vmem:[#allocation8 + $0x350] sm:$0xff]
    %v1445 = vld [vmem:[#allocation8 + $0x358] sm:$0xff]
    %v1446 = vld [vmem:[#allocation8 + $0x360] sm:$0xff]
    %v1447 = vld [vmem:[#allocation8 + $0x368] sm:$0xff]
    %v1448 = vld [vmem:[#allocation8 + $0x370] sm:$0xff]
    %v1449 = vld [vmem:[#allocation8 + $0x378] sm:$0xff]
    %v1450 = vld [vmem:[#allocation8 + $0x380] sm:$0xff]
    %v1451 = vld [vmem:[#allocation8 + $0x388] sm:$0xff]
    %v1452 = vld [vmem:[#allocation8 + $0x390] sm:$0xff]
    %v1453 = vld [vmem:[#allocation8 + $0x398] sm:$0xff]
    %v1454 = vld [vmem:[#allocation8 + $0x3a0] sm:$0xff]
    %v1455 = vld [vmem:[#allocation8 + $0x3a8] sm:$0xff]
    %v1456 = vld [vmem:[#allocation8 + $0x3b0] sm:$0xff]
    %v1457 = vld [vmem:[#allocation8 + $0x3b8] sm:$0xff]
    %v1458 = vld [vmem:[#allocation8 + $0x3c0] sm:$0xff]
    %v1459 = vld [vmem:[#allocation8 + $0x3c8] sm:$0xff]
    %v1460 = vld [vmem:[#allocation8 + $0x3d0] sm:$0xff]
    %v1461 = vld [vmem:[#allocation8 + $0x3d8] sm:$0xff]
    %v1462 = vld [vmem:[#allocation8 + $0x3e0] sm:$0xff]
    %v1463 = vld [vmem:[#allocation8 + $0x3e8] sm:$0xff]
    %v1464 = vld [vmem:[#allocation8 + $0x3f0] sm:$0xff]
    %v1465 = vld [vmem:[#allocation8 + $0x3f8] sm:$0xff]
    %v1466 = vld [vmem:[#allocation8 + $0x400] sm:$0xff]
    %v1467 = vld [vmem:[#allocation8 + $0x408] sm:$0xff]
    %v1468 = vld [vmem:[#allocation8 + $0x410] sm:$0xff]
    %v1469 = vld [vmem:[#allocation8 + $0x418] sm:$0xff]
    %v1470 = vld [vmem:[#allocation8 + $0x420] sm:$0xff]
    %v1471 = vld [vmem:[#allocation8 + $0x428] sm:$0xff]
    %v1472 = vld [vmem:[#allocation8 + $0x430] sm:$0xff]
    %v1473 = vld [vmem:[#allocation8 + $0x438] sm:$0xff]
    %v1474 = vld [vmem:[#allocation8 + $0x440] sm:$0xff]
    %v1475 = vld [vmem:[#allocation8 + $0x448] sm:$0xff]
    %v1476 = vld [vmem:[#allocation8 + $0x450] sm:$0xff]
    %v1477 = vld [vmem:[#allocation8 + $0x458] sm:$0xff]
    %v1478 = vld [vmem:[#allocation8 + $0x460] sm:$0xff]
    %v1479 = vld [vmem:[#allocation8 + $0x468] sm:$0xff]
    %v1480 = vld [vmem:[#allocation8 + $0x470] sm:$0xff]
    %v1481 = vld [vmem:[#allocation8 + $0x478] sm:$0xff]
    %v1482 = vld [vmem:[#allocation8 + $0x480] sm:$0xff]
    %v1483 = vld [vmem:[#allocation8 + $0x488] sm:$0xff]
    %v1484 = vld [vmem:[#allocation8 + $0x490] sm:$0xff]
    %v1485 = vld [vmem:[#allocation8 + $0x498] sm:$0xff]
    %v1486 = vld [vmem:[#allocation8 + $0x4a0] sm:$0xff]
    %v1487 = vld [vmem:[#allocation8 + $0x4a8] sm:$0xff]
    %v1488 = vld [vmem:[#allocation8 + $0x4b0] sm:$0xff]
    %v1489 = vld [vmem:[#allocation8 + $0x4b8] sm:$0xff]
    %v1490 = vld [vmem:[#allocation8 + $0x4c0] sm:$0xff]
    %v1491 = vld [vmem:[#allocation8 + $0x4c8] sm:$0xff]
    %v1492 = vld [vmem:[#allocation8 + $0x4d0] sm:$0xff]
    %v1493 = vld [vmem:[#allocation8 + $0x4d8] sm:$0xff]
    %v1494 = vld [vmem:[#allocation8 + $0x4e0] sm:$0xff]
    %v1495 = vld [vmem:[#allocation8 + $0x4e8] sm:$0xff]
    %v1496 = vld [vmem:[#allocation8 + $0x4f0] sm:$0xff]
    %v1497 = vld [vmem:[#allocation8 + $0x4f8] sm:$0xff]
    %v1498 = vld [vmem:[#allocation8 + $0x500] sm:$0xff]
    %v1499 = vld [vmem:[#allocation8 + $0x508] sm:$0xff]
    %v1500 = vld [vmem:[#allocation8 + $0x510] sm:$0xff]
    %v1501 = vld [vmem:[#allocation8 + $0x518] sm:$0xff]
    %v1502 = vld [vmem:[#allocation8 + $0x520] sm:$0xff]
    %v1503 = vld [vmem:[#allocation8 + $0x528] sm:$0xff]
    %v1504 = vld [vmem:[#allocation8 + $0x530] sm:$0xff]
    %v1505 = vld [vmem:[#allocation8 + $0x538] sm:$0xff]
    %v1506 = vld [vmem:[#allocation8 + $0x540] sm:$0xff]
    %v1507 = vld [vmem:[#allocation8 + $0x548] sm:$0xff]
    %v1508 = vld [vmem:[#allocation8 + $0x550] sm:$0xff]
    %v1509 = vld [vmem:[#allocation8 + $0x558] sm:$0xff]
    %v1510 = vld [vmem:[#allocation8 + $0x560] sm:$0xff]
    %v1511 = vld [vmem:[#allocation8 + $0x568] sm:$0xff]
    %v1512 = vld [vmem:[#allocation8 + $0x570] sm:$0xff]
    %v1513 = vld [vmem:[#allocation8 + $0x578] sm:$0xff]
    %v1514 = vld [vmem:[#allocation8 + $0x580] sm:$0xff]
    %v1515 = vld [vmem:[#allocation8 + $0x588] sm:$0xff]
    %v1516 = vld [vmem:[#allocation8 + $0x590] sm:$0xff]
    %v1517 = vld [vmem:[#allocation8 + $0x598] sm:$0xff]
    %v1518 = vld [vmem:[#allocation8 + $0x5a0] sm:$0xff]
    %v1519 = vld [vmem:[#allocation8 + $0x5a8] sm:$0xff]
    %v1520 = vld [vmem:[#allocation8 + $0x5b0] sm:$0xff]
    %v1521 = vld [vmem:[#allocation8 + $0x5b8] sm:$0xff]
    %v1522 = vld [vmem:[#allocation8 + $0x5c0] sm:$0xff]
    %v1523 = vld [vmem:[#allocation8 + $0x5c8] sm:$0xff]
    %v1524 = vld [vmem:[#allocation8 + $0x5d0] sm:$0xff]
    %v1525 = vld [vmem:[#allocation8 + $0x5d8] sm:$0xff]
    %v1526 = vld [vmem:[#allocation8 + $0x5e0] sm:$0xff]
    %v1527 = vld [vmem:[#allocation8 + $0x5e8] sm:$0xff]
    %v1528 = vld [vmem:[#allocation8 + $0x5f0] sm:$0xff]
    %v1529 = vld [vmem:[#allocation8 + $0x5f8] sm:$0xff]
    %v1530 = vld [vmem:[#allocation10] sm:$0x7]
    %v1532 = vlaneseq
    %v1533 = vshrl.u32 %v1532, 7
    %v1534 = vsub.s32 0, %v1533
    %v1535 = vrot.slane %v1530, %v1534
    %v1536 = vlaneseq
    %v1537 = vshrl.u32 %v1536, 7
    %v1538 = vsub.s32 1, %v1537
    %v1539 = vrot.slane %v1530, %v1538
    %v1540 = vlaneseq
    %v1541 = vshrl.u32 %v1540, 7
    %v1542 = vsub.s32 2, %v1541
    %v1543 = vrot.slane %v1530, %v1542
    %1547 = vmatprep.subr.mxu0 %v1339
    %1548 = vmatpush1.msra.mxu0 %v1338
    %1549 = vmatprep.subr.mxu0 %v1342
    %1550 = vmatpush1.msra.mxu0 %v1341
    %1551 = vmatprep.subr.mxu0 %v1345
    %1552 = vmatpush1.msra.mxu0 %v1344
    %1553 = vmatprep.subr.mxu0 %v1348
    %1554 = vmatpush1.msra.mxu0 %v1347
    %1555 = vmatprep.subr.mxu0 %v1351
    %1556 = vmatpush1.msra.mxu0 %v1350
    %1557 = vmatprep.subr.mxu0 %v1354
    %1558 = vmatpush1.msra.mxu0 %v1353
    %1559 = vmatprep.subr.mxu0 %v1357
    %1560 = vmatpush1.msra.mxu0 %v1356
    %1561 = vmatprep.subr.mxu0 %v1360
    %1562 = vmatpush1.msra.mxu0 %v1359
    %1563 = vmatprep.subr.mxu0 %v1363
    %1564 = vmatpush1.msra.mxu0 %v1362
    %1565 = vmatprep.subr.mxu0 %v1366
    %1566 = vmatpush1.msra.mxu0 %v1365
    %1567 = vmatprep.subr.mxu0 %v1369
    %1568 = vmatpush1.msra.mxu0 %v1368
    %1569 = vmatprep.subr.mxu0 %v1372
    %1570 = vmatpush1.msra.mxu0 %v1371
    %1571 = vmatprep.subr.mxu0 %v1375
    %1572 = vmatpush1.msra.mxu0 %v1374
    %1573 = vmatprep.subr.mxu0 %v1378
    %1574 = vmatpush1.msra.mxu0 %v1377
    %1575 = vmatprep.subr.mxu0 %v1381
    %1576 = vmatpush1.msra.mxu0 %v1380
    %1577 = vmatprep.subr.mxu0 %v1384
    %1578 = vmatpush1.msra.mxu0 %v1383
    %1579 = vmatprep.subr.mxu0 %v1387
    %1580 = vmatpush1.msra.mxu0 %v1386
    %1581 = vmatprep.subr.mxu0 %v1390
    %1582 = vmatpush1.msra.mxu0 %v1389
    %1583 = vmatprep.subr.mxu0 %v1393
    %1584 = vmatpush1.msra.mxu0 %v1392
    %1585 = vmatprep.subr.mxu0 %v1396
    %1586 = vmatpush1.msra.mxu0 %v1395
    %1587 = vmatprep.subr.mxu0 %v1399
    %1588 = vmatpush1.msra.mxu0 %v1398
    %1589 = vmatprep.subr.mxu0 %v1402
    %1590 = vmatpush1.msra.mxu0 %v1401
    %1591 = vmatprep.subr.mxu0 %v1405
    %1592 = vmatpush1.msra.mxu0 %v1404
    %1593 = vmatprep.subr.mxu0 %v1408
    %1594 = vmatpush1.msra.mxu0 %v1407
    %1595 = vmatprep.subr.mxu0 %v1411
    %1596 = vmatpush1.msra.mxu0 %v1410
    %1597 = vmatprep.subr.mxu0 %v1414
    %1598 = vmatpush1.msra.mxu0 %v1413
    %1599 = vmatprep.subr.mxu0 %v1417
    %1600 = vmatpush1.msra.mxu0 %v1416
    %1601 = vmatprep.subr.mxu0 %v1420
    %1602 = vmatpush1.msra.mxu0 %v1419
    %1603 = vmatprep.subr.mxu0 %v1423
    %1604 = vmatpush1.msra.mxu0 %v1422
    %1605 = vmatprep.subr.mxu0 %v1426
    %1606 = vmatpush1.msra.mxu0 %v1425
    %1607 = vmatprep.subr.mxu0 %v1429
    %1608 = vmatpush1.msra.mxu0 %v1428
    %1609 = vmatprep.subr.mxu0 %v1432
    %1610 = vmatpush1.msra.mxu0 %v1431
    %1611 = vmatprep.mubr.f32.mxu0 %v1333
    %1612 = vmatmul.mubr.f32.gmra.mrb[0].mxu0 %v1331
    %v1613 = vpop.f32.mrb[0].mxu0
    %v1614 = vadd.f32 %v1535, %v1613
    %v1615 = vpop.f32.mrb[0].mxu0
    %v1616 = vadd.f32 %v1539, %v1615
    %1617 = vdwg.mxu0
    %1618 = vmatprep.subr.mxu0 %v1435
    %1619 = vmatpush1.msra.mxu0 %v1434
    %1620 = vmatprep.subr.mxu0 %v1438
    %1621 = vmatpush1.msra.mxu0 %v1437
    %1622 = vmatprep.subr.mxu0 %v1441
    %1623 = vmatpush1.msra.mxu0 %v1440
    %1624 = vmatprep.subr.mxu0 %v1444
    %1625 = vmatpush1.msra.mxu0 %v1443
    %1626 = vmatprep.subr.mxu0 %v1447
    %1627 = vmatpush1.msra.mxu0 %v1446
    %1628 = vmatprep.subr.mxu0 %v1450
    %1629 = vmatpush1.msra.mxu0 %v1449
    %1630 = vmatprep.subr.mxu0 %v1453
    %1631 = vmatpush1.msra.mxu0 %v1452
    %1632 = vmatprep.subr.mxu0 %v1456
    %1633 = vmatpush1.msra.mxu0 %v1455
    %1634 = vmatprep.subr.mxu0 %v1459
    %1635 = vmatpush1.msra.mxu0 %v1458
    %1636 = vmatprep.subr.mxu0 %v1462
    %1637 = vmatpush1.msra.mxu0 %v1461
    %1638 = vmatprep.subr.mxu0 %v1465
    %1639 = vmatpush1.msra.mxu0 %v1464
    %1640 = vmatprep.subr.mxu0 %v1468
    %1641 = vmatpush1.msra.mxu0 %v1467
    %1642 = vmatprep.subr.mxu0 %v1471
    %1643 = vmatpush1.msra.mxu0 %v1470
    %1644 = vmatprep.subr.mxu0 %v1474
    %1645 = vmatpush1.msra.mxu0 %v1473
    %1646 = vmatprep.subr.mxu0 %v1477
    %1647 = vmatpush1.msra.mxu0 %v1476
    %1648 = vmatprep.subr.mxu0 %v1480
    %1649 = vmatpush1.msra.mxu0 %v1479
    %1650 = vmatprep.subr.mxu0 %v1483
    %1651 = vmatpush1.msra.mxu0 %v1482
    %1652 = vmatprep.subr.mxu0 %v1486
    %1653 = vmatpush1.msra.mxu0 %v1485
    %1654 = vmatprep.subr.mxu0 %v1489
    %1655 = vmatpush1.msra.mxu0 %v1488
    %1656 = vmatprep.subr.mxu0 %v1492
    %1657 = vmatpush1.msra.mxu0 %v1491
    %1658 = vmatprep.subr.mxu0 %v1495
    %1659 = vmatpush1.msra.mxu0 %v1494
    %1660 = vmatprep.subr.mxu0 %v1498
    %1661 = vmatpush1.msra.mxu0 %v1497
    %1662 = vmatprep.subr.mxu0 %v1501
    %1663 = vmatpush1.msra.mxu0 %v1500
    %1664 = vmatprep.subr.mxu0 %v1504
    %1665 = vmatpush1.msra.mxu0 %v1503
    %1666 = vmatprep.subr.mxu0 %v1507
    %1667 = vmatpush1.msra.mxu0 %v1506
    %1668 = vmatprep.subr.mxu0 %v1510
    %1669 = vmatpush1.msra.mxu0 %v1509
    %1670 = vmatprep.subr.mxu0 %v1513
    %1671 = vmatpush1.msra.mxu0 %v1512
    %1672 = vmatprep.subr.mxu0 %v1516
    %1673 = vmatpush1.msra.mxu0 %v1515
    %1674 = vmatprep.subr.mxu0 %v1519
    %1675 = vmatpush1.msra.mxu0 %v1518
    %1676 = vmatprep.subr.mxu0 %v1522
    %1677 = vmatpush1.msra.mxu0 %v1521
    %1678 = vmatprep.subr.mxu0 %v1525
    %1679 = vmatpush1.msra.mxu0 %v1524
    %1680 = vmatprep.subr.mxu0 %v1528
    %1681 = vmatpush1.msra.mxu0 %v1527
    %1682 = vmatprep.mubr.f32.mxu0 %v1337
    %1683 = vmatmul.mubr.f32.gmra.mrb[0].mxu0 %v1335
    %v1684 = vpop.f32.mrb[0].mxu0
    %v1685 = vadd.f32 %v1614, %v1684
    %v1686 = vpop.f32.mrb[0].mxu0
    %v1687 = vadd.f32 %v1616, %v1686
    %1688 = vdwg.mxu0
    %1689 = vmatprep.subr.mxu0 0.0
    %1690 = vmatpush1.msra.mxu0 %v1340
    %1691 = vmatprep.subr.mxu0 0.0
    %1692 = vmatpush1.msra.mxu0 %v1343
    %1693 = vmatprep.subr.mxu0 0.0
    %1694 = vmatpush1.msra.mxu0 %v1346
    %1695 = vmatprep.subr.mxu0 0.0
    %1696 = vmatpush1.msra.mxu0 %v1349
    %1697 = vmatprep.subr.mxu0 0.0
    %1698 = vmatpush1.msra.mxu0 %v1352
    %1699 = vmatprep.subr.mxu0 0.0
    %1700 = vmatpush1.msra.mxu0 %v1355
    %1701 = vmatprep.subr.mxu0 0.0
    %1702 = vmatpush1.msra.mxu0 %v1358
    %1703 = vmatprep.subr.mxu0 0.0
    %1704 = vmatpush1.msra.mxu0 %v1361
    %1705 = vmatprep.subr.mxu0 0.0
    %1706 = vmatpush1.msra.mxu0 %v1364
    %1707 = vmatprep.subr.mxu0 0.0
    %1708 = vmatpush1.msra.mxu0 %v1367
    %1709 = vmatprep.subr.mxu0 0.0
    %1710 = vmatpush1.msra.mxu0 %v1370
    %1711 = vmatprep.subr.mxu0 0.0
    %1712 = vmatpush1.msra.mxu0 %v1373
    %1713 = vmatprep.subr.mxu0 0.0
    %1714 = vmatpush1.msra.mxu0 %v1376
    %1715 = vmatprep.subr.mxu0 0.0
    %1716 = vmatpush1.msra.mxu0 %v1379
    %1717 = vmatprep.subr.mxu0 0.0
    %1718 = vmatpush1.msra.mxu0 %v1382
    %1719 = vmatprep.subr.mxu0 0.0
    %1720 = vmatpush1.msra.mxu0 %v1385
    %1721 = vmatprep.subr.mxu0 0.0
    %1722 = vmatpush1.msra.mxu0 %v1388
    %1723 = vmatprep.subr.mxu0 0.0
    %1724 = vmatpush1.msra.mxu0 %v1391
    %1725 = vmatprep.subr.mxu0 0.0
    %1726 = vmatpush1.msra.mxu0 %v1394
    %1727 = vmatprep.subr.mxu0 0.0
    %1728 = vmatpush1.msra.mxu0 %v1397
    %1729 = vmatprep.subr.mxu0 0.0
    %1730 = vmatpush1.msra.mxu0 %v1400
    %1731 = vmatprep.subr.mxu0 0.0
    %1732 = vmatpush1.msra.mxu0 %v1403
    %1733 = vmatprep.subr.mxu0 0.0
    %1734 = vmatpush1.msra.mxu0 %v1406
    %1735 = vmatprep.subr.mxu0 0.0
    %1736 = vmatpush1.msra.mxu0 %v1409
    %1737 = vmatprep.subr.mxu0 0.0
    %1738 = vmatpush1.msra.mxu0 %v1412
    %1739 = vmatprep.subr.mxu0 0.0
    %1740 = vmatpush1.msra.mxu0 %v1415
    %1741 = vmatprep.subr.mxu0 0.0
    %1742 = vmatpush1.msra.mxu0 %v1418
    %1743 = vmatprep.subr.mxu0 0.0
    %1744 = vmatpush1.msra.mxu0 %v1421
    %1745 = vmatprep.subr.mxu0 0.0
    %1746 = vmatpush1.msra.mxu0 %v1424
    %1747 = vmatprep.subr.mxu0 0.0
    %1748 = vmatpush1.msra.mxu0 %v1427
    %1749 = vmatprep.subr.mxu0 0.0
    %1750 = vmatpush1.msra.mxu0 %v1430
    %1751 = vmatprep.subr.mxu0 0.0
    %1752 = vmatpush1.msra.mxu0 %v1433
    %1753 = vmatprep.mubr.f32.mxu0 %v1333
    %1754 = vmatmul.mubr.f32.gmra.mrb[0].mxu0 %v1331
    %v1755 = vpop.f32.mrb[0].mxu0
    %v1756 = vadd.f32 %v1543, %v1755
    %v1757 = vpop.f32.mrb[0].mxu0
    %1758 = vdwg.mxu0
    %1759 = vmatprep.subr.mxu0 0.0
    %1760 = vmatpush1.msra.mxu0 %v1436
    %1761 = vmatprep.subr.mxu0 0.0
    %1762 = vmatpush1.msra.mxu0 %v1439
    %1763 = vmatprep.subr.mxu0 0.0
    %1764 = vmatpush1.msra.mxu0 %v1442
    %1765 = vmatprep.subr.mxu0 0.0
    %1766 = vmatpush1.msra.mxu0 %v1445
    %1767 = vmatprep.subr.mxu0 0.0
    %1768 = vmatpush1.msra.mxu0 %v1448
    %1769 = vmatprep.subr.mxu0 0.0
    %1770 = vmatpush1.msra.mxu0 %v1451
    %1771 = vmatprep.subr.mxu0 0.0
    %1772 = vmatpush1.msra.mxu0 %v1454
    %1773 = vmatprep.subr.mxu0 0.0
    %1774 = vmatpush1.msra.mxu0 %v1457
    %1775 = vmatprep.subr.mxu0 0.0
    %1776 = vmatpush1.msra.mxu0 %v1460
    %1777 = vmatprep.subr.mxu0 0.0
    %1778 = vmatpush1.msra.mxu0 %v1463
    %1779 = vmatprep.subr.mxu0 0.0
    %1780 = vmatpush1.msra.mxu0 %v1466
    %1781 = vmatprep.subr.mxu0 0.0
    %1782 = vmatpush1.msra.mxu0 %v1469
    %1783 = vmatprep.subr.mxu0 0.0
    %1784 = vmatpush1.msra.mxu0 %v1472
    %1785 = vmatprep.subr.mxu0 0.0
    %1786 = vmatpush1.msra.mxu0 %v1475
    %1787 = vmatprep.subr.mxu0 0.0
    %1788 = vmatpush1.msra.mxu0 %v1478
    %1789 = vmatprep.subr.mxu0 0.0
    %1790 = vmatpush1.msra.mxu0 %v1481
    %1791 = vmatprep.subr.mxu0 0.0
    %1792 = vmatpush1.msra.mxu0 %v1484
    %1793 = vmatprep.subr.mxu0 0.0
    %1794 = vmatpush1.msra.mxu0 %v1487
    %1795 = vmatprep.subr.mxu0 0.0
    %1796 = vmatpush1.msra.mxu0 %v1490
    %1797 = vmatprep.subr.mxu0 0.0
    %1798 = vmatpush1.msra.mxu0 %v1493
    %1799 = vmatprep.subr.mxu0 0.0
    %1800 = vmatpush1.msra.mxu0 %v1496
    %1801 = vmatprep.subr.mxu0 0.0
    %1802 = vmatpush1.msra.mxu0 %v1499
    %1803 = vmatprep.subr.mxu0 0.0
    %1804 = vmatpush1.msra.mxu0 %v1502
    %1805 = vmatprep.subr.mxu0 0.0
    %1806 = vmatpush1.msra.mxu0 %v1505
    %1807 = vmatprep.subr.mxu0 0.0
    %1808 = vmatpush1.msra.mxu0 %v1508
    %1809 = vmatprep.subr.mxu0 0.0
    %1810 = vmatpush1.msra.mxu0 %v1511
    %1811 = vmatprep.subr.mxu0 0.0
    %1812 = vmatpush1.msra.mxu0 %v1514
    %1813 = vmatprep.subr.mxu0 0.0
    %1814 = vmatpush1.msra.mxu0 %v1517
    %1815 = vmatprep.subr.mxu0 0.0
    %1816 = vmatpush1.msra.mxu0 %v1520
    %1817 = vmatprep.subr.mxu0 0.0
    %1818 = vmatpush1.msra.mxu0 %v1523
    %1819 = vmatprep.subr.mxu0 0.0
    %1820 = vmatpush1.msra.mxu0 %v1526
    %1821 = vmatprep.subr.mxu0 0.0
    %1822 = vmatpush1.msra.mxu0 %v1529
    %1823 = vmatprep.mubr.f32.mxu0 %v1337
    %1824 = vmatmul.mubr.f32.gmra.mrb[0].mxu0 %v1335
    %v1825 = vpop.f32.mrb[0].mxu0
    %v1826 = vadd.f32 %v1756, %v1825
    %v1827 = vpop.f32.mrb[0].mxu0
    %1828 = vdwg.mxu0
    %v1829 = vxor.u32 %v1685, 2147483648
    %v1830 = vxor.u32 %v1687, 2147483648
    %v1831 = vxor.u32 %v1826, 2147483648
    %v1832 = vmul.f32 %v1829, 1.442695
    %v1833 = vpow.pop %v1832
    %v1834 = vmul.f32 %v1830, 1.442695
    %v1835 = vpow.pop %v1834
    %v1836 = vmul.f32 %v1831, 1.442695
    %v1837 = vpow.pop %v1836
    %v1838 = vadd.f32 %v1833, 1.0
    %v1839 = vadd.f32 %v1835, 1.0
    %v1840 = vadd.f32 %v1837, 1.0
    %v1841 = vrcp.pop %v1838
    %v1842 = vmul.f32 1.0, %v1841
    %v1843 = vrcp.pop %v1839
    %v1844 = vmul.f32 1.0, %v1843
    %v1845 = vrcp.pop %v1840
    %v1846 = vmul.f32 1.0, %v1845
    %v1847 = vld [vmem:[#allocation11] sm:$0xff]
    %v1848 = vld [vmem:[#allocation11 + $0x8] sm:$0xff]
    %v1849 = vld [vmem:[#allocation11 + $0x10] sm:$0xff]
    %v1850 = vld [vmem:[#allocation11 + $0x18] sm:$0xff]
    %v1851 = vld [vmem:[#allocation11 + $0x20] sm:$0xff]
    %v1852 = vld [vmem:[#allocation11 + $0x28] sm:$0xff]
    %v1853 = vld [vmem:[#allocation11 + $0x30] sm:$0xff]
    %v1854 = vld [vmem:[#allocation11 + $0x38] sm:$0xff]
    %v1855 = vld [vmem:[#allocation11 + $0x40] sm:$0xff]
    %v1856 = vld [vmem:[#allocation11 + $0x48] sm:$0xff]
    %v1857 = vld [vmem:[#allocation11 + $0x50] sm:$0xff]
    %v1858 = vld [vmem:[#allocation11 + $0x58] sm:$0xff]
    %v1859 = vld [vmem:[#allocation11 + $0x60] sm:$0xff]
    %v1860 = vld [vmem:[#allocation11 + $0x68] sm:$0xff]
    %v1861 = vld [vmem:[#allocation11 + $0x70] sm:$0xff]
    %v1862 = vld [vmem:[#allocation11 + $0x78] sm:$0xff]
    %v1863 = vld [vmem:[#allocation11 + $0x80] sm:$0xff]
    %v1864 = vld [vmem:[#allocation11 + $0x88] sm:$0xff]
    %v1865 = vld [vmem:[#allocation11 + $0x90] sm:$0xff]
    %v1866 = vld [vmem:[#allocation11 + $0x98] sm:$0xff]
    %v1867 = vld [vmem:[#allocation11 + $0xa0] sm:$0xff]
    %v1868 = vld [vmem:[#allocation11 + $0xa8] sm:$0xff]
    %v1869 = vld [vmem:[#allocation11 + $0xb0] sm:$0xff]
    %v1870 = vld [vmem:[#allocation11 + $0xb8] sm:$0xff]
    %v1871 = vld [vmem:[#allocation11 + $0xc0] sm:$0xff]
    %v1872 = vld [vmem:[#allocation11 + $0xc8] sm:$0xff]
    %v1873 = vld [vmem:[#allocation11 + $0xd0] sm:$0xff]
    %v1874 = vld [vmem:[#allocation11 + $0xd8] sm:$0xff]
    %v1875 = vld [vmem:[#allocation11 + $0xe0] sm:$0xff]
    %v1876 = vld [vmem:[#allocation11 + $0xe8] sm:$0xff]
    %v1877 = vld [vmem:[#allocation11 + $0xf0] sm:$0xff]
    %v1878 = vld [vmem:[#allocation11 + $0xf8] sm:$0xff]
    %v1879 = vld [vmem:[#allocation11 + $0x100] sm:$0xff]
    %v1880 = vld [vmem:[#allocation11 + $0x108] sm:$0xff]
    %v1881 = vld [vmem:[#allocation11 + $0x110] sm:$0xff]
    %v1882 = vld [vmem:[#allocation11 + $0x118] sm:$0xff]
    %v1883 = vld [vmem:[#allocation11 + $0x120] sm:$0xff]
    %v1884 = vld [vmem:[#allocation11 + $0x128] sm:$0xff]
    %v1885 = vld [vmem:[#allocation11 + $0x130] sm:$0xff]
    %v1886 = vld [vmem:[#allocation11 + $0x138] sm:$0xff]
    %v1887 = vld [vmem:[#allocation11 + $0x140] sm:$0xff]
    %v1888 = vld [vmem:[#allocation11 + $0x148] sm:$0xff]
    %v1889 = vld [vmem:[#allocation11 + $0x150] sm:$0xff]
    %v1890 = vld [vmem:[#allocation11 + $0x158] sm:$0xff]
    %v1891 = vld [vmem:[#allocation11 + $0x160] sm:$0xff]
    %v1892 = vld [vmem:[#allocation11 + $0x168] sm:$0xff]
    %v1893 = vld [vmem:[#allocation11 + $0x170] sm:$0xff]
    %v1894 = vld [vmem:[#allocation11 + $0x178] sm:$0xff]
    %v1895 = vld [vmem:[#allocation13] sm:$0x1]
    %v1897 = vlaneseq
    %v1898 = vshrl.u32 %v1897, 7
    %v1899 = vsub.s32 0, %v1898
    %v1900 = vrot.slane %v1895, %v1899
    %1902 = vmatprep.subr.mxu0 0.0
    %1903 = vmatpush1.msra.mxu0 %v1847
    %1904 = vmatprep.subr.mxu0 0.0
    %1905 = vmatpush1.msra.mxu0 %v1848
    %1906 = vmatprep.subr.mxu0 0.0
    %1907 = vmatpush1.msra.mxu0 %v1849
    %1908 = vmatprep.subr.mxu0 0.0
    %1909 = vmatpush1.msra.mxu0 %v1850
    %1910 = vmatprep.subr.mxu0 0.0
    %1911 = vmatpush1.msra.mxu0 %v1851
    %1912 = vmatprep.subr.mxu0 0.0
    %1913 = vmatpush1.msra.mxu0 %v1852
    %1914 = vmatprep.subr.mxu0 0.0
    %1915 = vmatpush1.msra.mxu0 %v1853
    %1916 = vmatprep.subr.mxu0 0.0
    %1917 = vmatpush1.msra.mxu0 %v1854
    %1918 = vmatprep.subr.mxu0 0.0
    %1919 = vmatpush1.msra.mxu0 %v1855
    %1920 = vmatprep.subr.mxu0 0.0
    %1921 = vmatpush1.msra.mxu0 %v1856
    %1922 = vmatprep.subr.mxu0 0.0
    %1923 = vmatpush1.msra.mxu0 %v1857
    %1924 = vmatprep.subr.mxu0 0.0
    %1925 = vmatpush1.msra.mxu0 %v1858
    %1926 = vmatprep.subr.mxu0 0.0
    %1927 = vmatpush1.msra.mxu0 %v1859
    %1928 = vmatprep.subr.mxu0 0.0
    %1929 = vmatpush1.msra.mxu0 %v1860
    %1930 = vmatprep.subr.mxu0 0.0
    %1931 = vmatpush1.msra.mxu0 %v1861
    %1932 = vmatprep.subr.mxu0 0.0
    %1933 = vmatpush1.msra.mxu0 %v1862
    %1934 = vmatprep.subr.mxu0 0.0
    %1935 = vmatpush1.msra.mxu0 %v1863
    %1936 = vmatprep.subr.mxu0 0.0
    %1937 = vmatpush1.msra.mxu0 %v1864
    %1938 = vmatprep.subr.mxu0 0.0
    %1939 = vmatpush1.msra.mxu0 %v1865
    %1940 = vmatprep.subr.mxu0 0.0
    %1941 = vmatpush1.msra.mxu0 %v1866
    %1942 = vmatprep.subr.mxu0 0.0
    %1943 = vmatpush1.msra.mxu0 %v1867
    %1944 = vmatprep.subr.mxu0 0.0
    %1945 = vmatpush1.msra.mxu0 %v1868
    %1946 = vmatprep.subr.mxu0 0.0
    %1947 = vmatpush1.msra.mxu0 %v1869
    %1948 = vmatprep.subr.mxu0 0.0
    %1949 = vmatpush1.msra.mxu0 %v1870
    %1950 = vmatprep.subr.mxu0 0.0
    %1951 = vmatpush1.msra.mxu0 %v1871
    %1952 = vmatprep.subr.mxu0 0.0
    %1953 = vmatpush1.msra.mxu0 %v1872
    %1954 = vmatprep.subr.mxu0 0.0
    %1955 = vmatpush1.msra.mxu0 %v1873
    %1956 = vmatprep.subr.mxu0 0.0
    %1957 = vmatpush1.msra.mxu0 %v1874
    %1958 = vmatprep.subr.mxu0 0.0
    %1959 = vmatpush1.msra.mxu0 %v1875
    %1960 = vmatprep.subr.mxu0 0.0
    %1961 = vmatpush1.msra.mxu0 %v1876
    %1962 = vmatprep.subr.mxu0 0.0
    %1963 = vmatpush1.msra.mxu0 %v1877
    %1964 = vmatprep.subr.mxu0 0.0
    %1965 = vmatpush1.msra.mxu0 %v1878
    %1966 = vmatprep.mubr.f32.mxu0 %v1844
    %1967 = vmatmul.mubr.f32.gmra.mrb[0].mxu0 %v1842
    %v1968 = vpop.f32.mrb[0].mxu0
    %v1969 = vadd.f32 %v1900, %v1968
    %v1970 = vpop.f32.mrb[0].mxu0
    %1971 = vdwg.mxu0
    %1972 = vmatprep.subr.mxu0 0.0
    %1973 = vmatpush1.msra.mxu0 %v1879
    %1974 = vmatprep.subr.mxu0 0.0
    %1975 = vmatpush1.msra.mxu0 %v1880
    %1976 = vmatprep.subr.mxu0 0.0
    %1977 = vmatpush1.msra.mxu0 %v1881
    %1978 = vmatprep.subr.mxu0 0.0
    %1979 = vmatpush1.msra.mxu0 %v1882
    %1980 = vmatprep.subr.mxu0 0.0
    %1981 = vmatpush1.msra.mxu0 %v1883
    %1982 = vmatprep.subr.mxu0 0.0
    %1983 = vmatpush1.msra.mxu0 %v1884
    %1984 = vmatprep.subr.mxu0 0.0
    %1985 = vmatpush1.msra.mxu0 %v1885
    %1986 = vmatprep.subr.mxu0 0.0
    %1987 = vmatpush1.msra.mxu0 %v1886
    %1988 = vmatprep.subr.mxu0 0.0
    %1989 = vmatpush1.msra.mxu0 %v1887
    %1990 = vmatprep.subr.mxu0 0.0
    %1991 = vmatpush1.msra.mxu0 %v1888
    %1992 = vmatprep.subr.mxu0 0.0
    %1993 = vmatpush1.msra.mxu0 %v1889
    %1994 = vmatprep.subr.mxu0 0.0
    %1995 = vmatpush1.msra.mxu0 %v1890
    %1996 = vmatprep.subr.mxu0 0.0
    %1997 = vmatpush1.msra.mxu0 %v1891
    %1998 = vmatprep.subr.mxu0 0.0
    %1999 = vmatpush1.msra.mxu0 %v1892
    %2000 = vmatprep.subr.mxu0 0.0
    %2001 = vmatpush1.msra.mxu0 %v1893
    %2002 = vmatprep.subr.mxu0 0.0
    %2003 = vmatpush1.msra.mxu0 %v1894
    %2004 = vmatprep.subr.mxu0 0.0
    %2005 = vmatpush1.msra.mxu0 0.0
    %2006 = vmatprep.subr.mxu0 0.0
    %2007 = vmatpush1.msra.mxu0 0.0
    %2008 = vmatprep.subr.mxu0 0.0
    %2009 = vmatpush1.msra.mxu0 0.0
    %2010 = vmatprep.subr.mxu0 0.0
    %2011 = vmatpush1.msra.mxu0 0.0
    %2012 = vmatprep.subr.mxu0 0.0
    %2013 = vmatpush1.msra.mxu0 0.0
    %2014 = vmatprep.subr.mxu0 0.0
    %2015 = vmatpush1.msra.mxu0 0.0
    %2016 = vmatprep.subr.mxu0 0.0
    %2017 = vmatpush1.msra.mxu0 0.0
    %2018 = vmatprep.subr.mxu0 0.0
    %2019 = vmatpush1.msra.mxu0 0.0
    %2020 = vmatprep.subr.mxu0 0.0
    %2021 = vmatpush1.msra.mxu0 0.0
    %2022 = vmatprep.subr.mxu0 0.0
    %2023 = vmatpush1.msra.mxu0 0.0
    %2024 = vmatprep.subr.mxu0 0.0
    %2025 = vmatpush1.msra.mxu0 0.0
    %2026 = vmatprep.subr.mxu0 0.0
    %2027 = vmatpush1.msra.mxu0 0.0
    %2028 = vmatprep.subr.mxu0 0.0
    %2029 = vmatpush1.msra.mxu0 0.0
    %2030 = vmatprep.subr.mxu0 0.0
    %2031 = vmatpush1.msra.mxu0 0.0
    %2032 = vmatprep.subr.mxu0 0.0
    %2033 = vmatpush1.msra.mxu0 0.0
    %2034 = vmatprep.subr.mxu0 0.0
    %2035 = vmatpush1.msra.mxu0 0.0
    %2036 = vmatprep.mubr.f32.mxu0 0.0
    %2037 = vmatmul.mubr.f32.gmra.mrb[0].mxu0 %v1846
    %v2038 = vpop.f32.mrb[0].mxu0
    %v2039 = vadd.f32 %v1969, %v2038
    %v2040 = vpop.f32.mrb[0].mxu0
    %2041 = vdwg.mxu0
    %v2042 = vxor.u32 %v2039, 2147483648
    %v2043 = vmul.f32 %v2042, 1.442695
    %v2044 = vpow.pop %v2043
    %v2045 = vadd.f32 %v2044, 1.0
    %v2046 = vrcp.pop %v2045
    %v2047 = vmul.f32 1.0, %v2046
    %v2048 = vld [vmem:[#allocation14] sm:$0xff]
    %v2049 = vld [vmem:[#allocation14 + $0x8] sm:$0xff]
    %v2050 = vld [vmem:[#allocation14 + $0x10] sm:$0xff]
    %v2051 = vld [vmem:[#allocation14 + $0x18] sm:$0xff]
    %v2052 = vld [vmem:[#allocation14 + $0x20] sm:$0xff]
    %v2053 = vld [vmem:[#allocation14 + $0x28] sm:$0xff]
    %v2054 = vld [vmem:[#allocation14 + $0x30] sm:$0xff]
    %v2055 = vld [vmem:[#allocation14 + $0x38] sm:$0xff]
    %v2056 = vld [vmem:[#allocation14 + $0x40] sm:$0xff]
    %v2057 = vld [vmem:[#allocation14 + $0x48] sm:$0xff]
    %v2058 = vld [vmem:[#allocation14 + $0x50] sm:$0xff]
    %v2059 = vld [vmem:[#allocation14 + $0x58] sm:$0xff]
    %v2060 = vld [vmem:[#allocation14 + $0x60] sm:$0xff]
    %v2061 = vld [vmem:[#allocation14 + $0x68] sm:$0xff]
    %v2062 = vld [vmem:[#allocation14 + $0x70] sm:$0xff]
    %v2063 = vld [vmem:[#allocation14 + $0x78] sm:$0xff]
    %v2064 = vld [vmem:[#allocation16] sm:$0x1]
    %v2066 = vlaneseq
    %v2067 = vshrl.u32 %v2066, 7
    %v2068 = vsub.s32 0, %v2067
    %v2069 = vrot.slane %v2064, %v2068
    %2071 = vmatprep.subr.mxu0 0.0
    %2072 = vmatpush1.msra.mxu0 %v2048
    %2073 = vmatprep.subr.mxu0 0.0
    %2074 = vmatpush1.msra.mxu0 %v2049
    %2075 = vmatprep.subr.mxu0 0.0
    %2076 = vmatpush1.msra.mxu0 %v2050
    %2077 = vmatprep.subr.mxu0 0.0
    %2078 = vmatpush1.msra.mxu0 %v2051
    %2079 = vmatprep.subr.mxu0 0.0
    %2080 = vmatpush1.msra.mxu0 %v2052
    %2081 = vmatprep.subr.mxu0 0.0
    %2082 = vmatpush1.msra.mxu0 %v2053
    %2083 = vmatprep.subr.mxu0 0.0
    %2084 = vmatpush1.msra.mxu0 %v2054
    %2085 = vmatprep.subr.mxu0 0.0
    %2086 = vmatpush1.msra.mxu0 %v2055
    %2087 = vmatprep.subr.mxu0 0.0
    %2088 = vmatpush1.msra.mxu0 %v2056
    %2089 = vmatprep.subr.mxu0 0.0
    %2090 = vmatpush1.msra.mxu0 %v2057
    %2091 = vmatprep.subr.mxu0 0.0
    %2092 = vmatpush1.msra.mxu0 %v2058
    %2093 = vmatprep.subr.mxu0 0.0
    %2094 = vmatpush1.msra.mxu0 %v2059
    %2095 = vmatprep.subr.mxu0 0.0
    %2096 = vmatpush1.msra.mxu0 %v2060
    %2097 = vmatprep.subr.mxu0 0.0
    %2098 = vmatpush1.msra.mxu0 %v2061
    %2099 = vmatprep.subr.mxu0 0.0
    %2100 = vmatpush1.msra.mxu0 %v2062
    %2101 = vmatprep.subr.mxu0 0.0
    %2102 = vmatpush1.msra.mxu0 %v2063
    %2103 = vmatprep.subr.mxu0 0.0
    %2104 = vmatpush1.msra.mxu0 0.0
    %2105 = vmatprep.subr.mxu0 0.0
    %2106 = vmatpush1.msra.mxu0 0.0
    %2107 = vmatprep.subr.mxu0 0.0
    %2108 = vmatpush1.msra.mxu0 0.0
    %2109 = vmatprep.subr.mxu0 0.0
    %2110 = vmatpush1.msra.mxu0 0.0
    %2111 = vmatprep.subr.mxu0 0.0
    %2112 = vmatpush1.msra.mxu0 0.0
    %2113 = vmatprep.subr.mxu0 0.0
    %2114 = vmatpush1.msra.mxu0 0.0
    %2115 = vmatprep.subr.mxu0 0.0
    %2116 = vmatpush1.msra.mxu0 0.0
    %2117 = vmatprep.subr.mxu0 0.0
    %2118 = vmatpush1.msra.mxu0 0.0
    %2119 = vmatprep.subr.mxu0 0.0
    %2120 = vmatpush1.msra.mxu0 0.0
    %2121 = vmatprep.subr.mxu0 0.0
    %2122 = vmatpush1.msra.mxu0 0.0
    %2123 = vmatprep.subr.mxu0 0.0
    %2124 = vmatpush1.msra.mxu0 0.0
    %2125 = vmatprep.subr.mxu0 0.0
    %2126 = vmatpush1.msra.mxu0 0.0
    %2127 = vmatprep.subr.mxu0 0.0
    %2128 = vmatpush1.msra.mxu0 0.0
    %2129 = vmatprep.subr.mxu0 0.0
    %2130 = vmatpush1.msra.mxu0 0.0
    %2131 = vmatprep.subr.mxu0 0.0
    %2132 = vmatpush1.msra.mxu0 0.0
    %2133 = vmatprep.subr.mxu0 0.0
    %2134 = vmatpush1.msra.mxu0 0.0
    %2135 = vmatprep.mubr.f32.mxu0 0.0
    %2136 = vmatmul.mubr.f32.gmra.mrb[0].mxu0 %v2047
    %v2137 = vpop.f32.mrb[0].mxu0
    %v2138 = vadd.f32 %v2069, %v2137
    %v2139 = vpop.f32.mrb[0].mxu0
    %2140 = vdwg.mxu0
    %v2141 = vtanh.pop %v2138
    %v2142 = vld [vmem:[#allocation17] sm:$0xff]
    %v2143 = vld [vmem:[#allocation17 + $0x8] sm:$0xff]
    %v2144 = vld [vmem:[#allocation17 + $0x10] sm:$0xff]
    %v2145 = vld [vmem:[#allocation17 + $0x18] sm:$0xff]
    %v2146 = vld [vmem:[#allocation17 + $0x20] sm:$0xff]
    %v2147 = vld [vmem:[#allocation17 + $0x28] sm:$0xff]
    %v2148 = vld [vmem:[#allocation17 + $0x30] sm:$0xff]
    %v2149 = vld [vmem:[#allocation17 + $0x38] sm:$0xff]
    %v2150 = vld [vmem:[#allocation17 + $0x40] sm:$0xff]
    %v2151 = vld [vmem:[#allocation17 + $0x48] sm:$0xff]
    %v2152 = vld [vmem:[#allocation17 + $0x50] sm:$0xff]
    %v2153 = vld [vmem:[#allocation17 + $0x58] sm:$0xff]
    %v2154 = vld [vmem:[#allocation17 + $0x60] sm:$0xff]
    %v2155 = vld [vmem:[#allocation17 + $0x68] sm:$0xff]
    %v2156 = vld [vmem:[#allocation17 + $0x70] sm:$0xff]
    %v2157 = vld [vmem:[#allocation17 + $0x78] sm:$0xff]
    %v2158 = vld [vmem:[#allocation19] sm:$0x1]
    %v2160 = vlaneseq
    %v2161 = vshrl.u32 %v2160, 7
    %v2162 = vsub.s32 0, %v2161
    %v2163 = vrot.slane %v2158, %v2162
    %2165 = vmatprep.subr.mxu0 0.0
    %2166 = vmatpush1.msra.mxu0 %v2142
    %2167 = vmatprep.subr.mxu0 0.0
    %2168 = vmatpush1.msra.mxu0 %v2143
    %2169 = vmatprep.subr.mxu0 0.0
    %2170 = vmatpush1.msra.mxu0 %v2144
    %2171 = vmatprep.subr.mxu0 0.0
    %2172 = vmatpush1.msra.mxu0 %v2145
    %2173 = vmatprep.subr.mxu0 0.0
    %2174 = vmatpush1.msra.mxu0 %v2146
    %2175 = vmatprep.subr.mxu0 0.0
    %2176 = vmatpush1.msra.mxu0 %v2147
    %2177 = vmatprep.subr.mxu0 0.0
    %2178 = vmatpush1.msra.mxu0 %v2148
    %2179 = vmatprep.subr.mxu0 0.0
    %2180 = vmatpush1.msra.mxu0 %v2149
    %2181 = vmatprep.subr.mxu0 0.0
    %2182 = vmatpush1.msra.mxu0 %v2150
    %2183 = vmatprep.subr.mxu0 0.0
    %2184 = vmatpush1.msra.mxu0 %v2151
    %2185 = vmatprep.subr.mxu0 0.0
    %2186 = vmatpush1.msra.mxu0 %v2152
    %2187 = vmatprep.subr.mxu0 0.0
    %2188 = vmatpush1.msra.mxu0 %v2153
    %2189 = vmatprep.subr.mxu0 0.0
    %2190 = vmatpush1.msra.mxu0 %v2154
    %2191 = vmatprep.subr.mxu0 0.0
    %2192 = vmatpush1.msra.mxu0 %v2155
    %2193 = vmatprep.subr.mxu0 0.0
    %2194 = vmatpush1.msra.mxu0 %v2156
    %2195 = vmatprep.subr.mxu0 0.0
    %2196 = vmatpush1.msra.mxu0 %v2157
    %2197 = vmatprep.subr.mxu0 0.0
    %2198 = vmatpush1.msra.mxu0 0.0
    %2199 = vmatprep.subr.mxu0 0.0
    %2200 = vmatpush1.msra.mxu0 0.0
    %2201 = vmatprep.subr.mxu0 0.0
    %2202 = vmatpush1.msra.mxu0 0.0
    %2203 = vmatprep.subr.mxu0 0.0
    %2204 = vmatpush1.msra.mxu0 0.0
    %2205 = vmatprep.subr.mxu0 0.0
    %2206 = vmatpush1.msra.mxu0 0.0
    %2207 = vmatprep.subr.mxu0 0.0
    %2208 = vmatpush1.msra.mxu0 0.0
    %2209 = vmatprep.subr.mxu0 0.0
    %2210 = vmatpush1.msra.mxu0 0.0
    %2211 = vmatprep.subr.mxu0 0.0
    %2212 = vmatpush1.msra.mxu0 0.0
    %2213 = vmatprep.subr.mxu0 0.0
    %2214 = vmatpush1.msra.mxu0 0.0
    %2215 = vmatprep.subr.mxu0 0.0
    %2216 = vmatpush1.msra.mxu0 0.0
    %2217 = vmatprep.subr.mxu0 0.0
    %2218 = vmatpush1.msra.mxu0 0.0
    %2219 = vmatprep.subr.mxu0 0.0
    %2220 = vmatpush1.msra.mxu0 0.0
    %2221 = vmatprep.subr.mxu0 0.0
    %2222 = vmatpush1.msra.mxu0 0.0
    %2223 = vmatprep.subr.mxu0 0.0
    %2224 = vmatpush1.msra.mxu0 0.0
    %2225 = vmatprep.subr.mxu0 0.0
    %2226 = vmatpush1.msra.mxu0 0.0
    %2227 = vmatprep.subr.mxu0 0.0
    %2228 = vmatpush1.msra.mxu0 0.0
    %2229 = vmatprep.mubr.f32.mxu0 0.0
    %2230 = vmatmul.mubr.f32.gmra.mrb[0].mxu0 %v2141
    %v2231 = vpop.f32.mrb[0].mxu0
    %v2232 = vadd.f32 %v2163, %v2231
    %v2233 = vpop.f32.mrb[0].mxu0
    %2234 = vdwg.mxu0
    %v2235 = vxor.u32 %v2232, 2147483648
    %v2236 = vmul.f32 %v2235, 1.442695
    %v2237 = vpow.pop %v2236
    %v2238 = vadd.f32 %v2237, 1.0
    %v2239 = vrcp.pop %v2238
    %v2240 = vmul.f32 1.0, %v2239
    %v2241 = vld [vmem:[#allocation20] sm:$0xff]
    %v2242 = vld [vmem:[#allocation20 + $0x8] sm:$0xff]
    %v2243 = vld [vmem:[#allocation20 + $0x10] sm:$0xff]
    %v2244 = vld [vmem:[#allocation20 + $0x18] sm:$0xff]
    %v2245 = vld [vmem:[#allocation20 + $0x20] sm:$0xff]
    %v2246 = vld [vmem:[#allocation20 + $0x28] sm:$0xff]
    %v2247 = vld [vmem:[#allocation20 + $0x30] sm:$0xff]
    %v2248 = vld [vmem:[#allocation20 + $0x38] sm:$0xff]
    %v2249 = vld [vmem:[#allocation20 + $0x40] sm:$0xff]
    %v2250 = vld [vmem:[#allocation20 + $0x48] sm:$0xff]
    %v2251 = vld [vmem:[#allocation20 + $0x50] sm:$0xff]
    %v2252 = vld [vmem:[#allocation20 + $0x58] sm:$0xff]
    %v2253 = vld [vmem:[#allocation20 + $0x60] sm:$0xff]
    %v2254 = vld [vmem:[#allocation20 + $0x68] sm:$0xff]
    %v2255 = vld [vmem:[#allocation20 + $0x70] sm:$0xff]
    %v2256 = vld [vmem:[#allocation20 + $0x78] sm:$0xff]
    %v2257 = vld [vmem:[#allocation20 + $0x80] sm:$0xff]
    %v2258 = vld [vmem:[#allocation20 + $0x88] sm:$0xff]
    %v2259 = vld [vmem:[#allocation20 + $0x90] sm:$0xff]
    %v2260 = vld [vmem:[#allocation20 + $0x98] sm:$0xff]
    %v2261 = vld [vmem:[#allocation20 + $0xa0] sm:$0xff]
    %v2262 = vld [vmem:[#allocation20 + $0xa8] sm:$0xff]
    %v2263 = vld [vmem:[#allocation20 + $0xb0] sm:$0xff]
    %v2264 = vld [vmem:[#allocation20 + $0xb8] sm:$0xff]
    %v2265 = vld [vmem:[#allocation20 + $0xc0] sm:$0xff]
    %v2266 = vld [vmem:[#allocation20 + $0xc8] sm:$0xff]
    %v2267 = vld [vmem:[#allocation20 + $0xd0] sm:$0xff]
    %v2268 = vld [vmem:[#allocation20 + $0xd8] sm:$0xff]
    %v2269 = vld [vmem:[#allocation20 + $0xe0] sm:$0xff]
    %v2270 = vld [vmem:[#allocation20 + $0xe8] sm:$0xff]
    %v2271 = vld [vmem:[#allocation20 + $0xf0] sm:$0xff]
    %v2272 = vld [vmem:[#allocation20 + $0xf8] sm:$0xff]
    %v2273 = vld [vmem:[#allocation20 + $0x100] sm:$0xff]
    %v2274 = vld [vmem:[#allocation20 + $0x108] sm:$0xff]
    %v2275 = vld [vmem:[#allocation20 + $0x110] sm:$0xff]
    %v2276 = vld [vmem:[#allocation20 + $0x118] sm:$0xff]
    %v2277 = vld [vmem:[#allocation20 + $0x120] sm:$0xff]
    %v2278 = vld [vmem:[#allocation20 + $0x128] sm:$0xff]
    %v2279 = vld [vmem:[#allocation20 + $0x130] sm:$0xff]
    %v2280 = vld [vmem:[#allocation20 + $0x138] sm:$0xff]
    %v2281 = vld [vmem:[#allocation20 + $0x140] sm:$0xff]
    %v2282 = vld [vmem:[#allocation20 + $0x148] sm:$0xff]
    %v2283 = vld [vmem:[#allocation20 + $0x150] sm:$0xff]
    %v2284 = vld [vmem:[#allocation20 + $0x158] sm:$0xff]
    %v2285 = vld [vmem:[#allocation20 + $0x160] sm:$0xff]
    %v2286 = vld [vmem:[#allocation20 + $0x168] sm:$0xff]
    %v2287 = vld [vmem:[#allocation20 + $0x170] sm:$0xff]
    %v2288 = vld [vmem:[#allocation20 + $0x178] sm:$0xff]
    %v2289 = vld [vmem:[#allocation22] sm:$0x7]
    %v2291 = vlaneseq
    %v2292 = vshrl.u32 %v2291, 7
    %v2293 = vsub.s32 0, %v2292
    %v2294 = vrot.slane %v2289, %v2293
    %v2295 = vlaneseq
    %v2296 = vshrl.u32 %v2295, 7
    %v2297 = vsub.s32 1, %v2296
    %v2298 = vrot.slane %v2289, %v2297
    %v2299 = vlaneseq
    %v2300 = vshrl.u32 %v2299, 7
    %v2301 = vsub.s32 2, %v2300
    %v2302 = vrot.slane %v2289, %v2301
    %2306 = vmatprep.subr.mxu0 %v2242
    %2307 = vmatpush1.msra.mxu0 %v2241
    %2308 = vmatprep.subr.mxu0 %v2245
    %2309 = vmatpush1.msra.mxu0 %v2244
    %2310 = vmatprep.subr.mxu0 %v2248
    %2311 = vmatpush1.msra.mxu0 %v2247
    %2312 = vmatprep.subr.mxu0 %v2251
    %2313 = vmatpush1.msra.mxu0 %v2250
    %2314 = vmatprep.subr.mxu0 %v2254
    %2315 = vmatpush1.msra.mxu0 %v2253
    %2316 = vmatprep.subr.mxu0 %v2257
    %2317 = vmatpush1.msra.mxu0 %v2256
    %2318 = vmatprep.subr.mxu0 %v2260
    %2319 = vmatpush1.msra.mxu0 %v2259
    %2320 = vmatprep.subr.mxu0 %v2263
    %2321 = vmatpush1.msra.mxu0 %v2262
    %2322 = vmatprep.subr.mxu0 %v2266
    %2323 = vmatpush1.msra.mxu0 %v2265
    %2324 = vmatprep.subr.mxu0 %v2269
    %2325 = vmatpush1.msra.mxu0 %v2268
    %2326 = vmatprep.subr.mxu0 %v2272
    %2327 = vmatpush1.msra.mxu0 %v2271
    %2328 = vmatprep.subr.mxu0 %v2275
    %2329 = vmatpush1.msra.mxu0 %v2274
    %2330 = vmatprep.subr.mxu0 %v2278
    %2331 = vmatpush1.msra.mxu0 %v2277
    %2332 = vmatprep.subr.mxu0 %v2281
    %2333 = vmatpush1.msra.mxu0 %v2280
    %2334 = vmatprep.subr.mxu0 %v2284
    %2335 = vmatpush1.msra.mxu0 %v2283
    %2336 = vmatprep.subr.mxu0 %v2287
    %2337 = vmatpush1.msra.mxu0 %v2286
    %2338 = vmatprep.subr.mxu0 0.0
    %2339 = vmatpush1.msra.mxu0 0.0
    %2340 = vmatprep.subr.mxu0 0.0
    %2341 = vmatpush1.msra.mxu0 0.0
    %2342 = vmatprep.subr.mxu0 0.0
    %2343 = vmatpush1.msra.mxu0 0.0
    %2344 = vmatprep.subr.mxu0 0.0
    %2345 = vmatpush1.msra.mxu0 0.0
    %2346 = vmatprep.subr.mxu0 0.0
    %2347 = vmatpush1.msra.mxu0 0.0
    %2348 = vmatprep.subr.mxu0 0.0
    %2349 = vmatpush1.msra.mxu0 0.0
    %2350 = vmatprep.subr.mxu0 0.0
    %2351 = vmatpush1.msra.mxu0 0.0
    %2352 = vmatprep.subr.mxu0 0.0
    %2353 = vmatpush1.msra.mxu0 0.0
    %2354 = vmatprep.subr.mxu0 0.0
    %2355 = vmatpush1.msra.mxu0 0.0
    %2356 = vmatprep.subr.mxu0 0.0
    %2357 = vmatpush1.msra.mxu0 0.0
    %2358 = vmatprep.subr.mxu0 0.0
    %2359 = vmatpush1.msra.mxu0 0.0
    %2360 = vmatprep.subr.mxu0 0.0
    %2361 = vmatpush1.msra.mxu0 0.0
    %2362 = vmatprep.subr.mxu0 0.0
    %2363 = vmatpush1.msra.mxu0 0.0
    %2364 = vmatprep.subr.mxu0 0.0
    %2365 = vmatpush1.msra.mxu0 0.0
    %2366 = vmatprep.subr.mxu0 0.0
    %2367 = vmatpush1.msra.mxu0 0.0
    %2368 = vmatprep.subr.mxu0 0.0
    %2369 = vmatpush1.msra.mxu0 0.0
    %2370 = vmatprep.mubr.f32.mxu0 0.0
    %2371 = vmatmul.mubr.f32.gmra.mrb[0].mxu0 %v2240
    %v2372 = vpop.f32.mrb[0].mxu0
    %v2373 = vadd.f32 %v2294, %v2372
    %v2374 = vpop.f32.mrb[0].mxu0
    %v2375 = vadd.f32 %v2298, %v2374
    %2376 = vdwg.mxu0
    %2377 = vmatprep.subr.mxu0 0.0
    %2378 = vmatpush1.msra.mxu0 %v2243
    %2379 = vmatprep.subr.mxu0 0.0
    %2380 = vmatpush1.msra.mxu0 %v2246
    %2381 = vmatprep.subr.mxu0 0.0
    %2382 = vmatpush1.msra.mxu0 %v2249
    %2383 = vmatprep.subr.mxu0 0.0
    %2384 = vmatpush1.msra.mxu0 %v2252
    %2385 = vmatprep.subr.mxu0 0.0
    %2386 = vmatpush1.msra.mxu0 %v2255
    %2387 = vmatprep.subr.mxu0 0.0
    %2388 = vmatpush1.msra.mxu0 %v2258
    %2389 = vmatprep.subr.mxu0 0.0
    %2390 = vmatpush1.msra.mxu0 %v2261
    %2391 = vmatprep.subr.mxu0 0.0
    %2392 = vmatpush1.msra.mxu0 %v2264
    %2393 = vmatprep.subr.mxu0 0.0
    %2394 = vmatpush1.msra.mxu0 %v2267
    %2395 = vmatprep.subr.mxu0 0.0
    %2396 = vmatpush1.msra.mxu0 %v2270
    %2397 = vmatprep.subr.mxu0 0.0
    %2398 = vmatpush1.msra.mxu0 %v2273
    %2399 = vmatprep.subr.mxu0 0.0
    %2400 = vmatpush1.msra.mxu0 %v2276
    %2401 = vmatprep.subr.mxu0 0.0
    %2402 = vmatpush1.msra.mxu0 %v2279
    %2403 = vmatprep.subr.mxu0 0.0
    %2404 = vmatpush1.msra.mxu0 %v2282
    %2405 = vmatprep.subr.mxu0 0.0
    %2406 = vmatpush1.msra.mxu0 %v2285
    %2407 = vmatprep.subr.mxu0 0.0
    %2408 = vmatpush1.msra.mxu0 %v2288
    %2409 = vmatprep.subr.mxu0 0.0
    %2410 = vmatpush1.msra.mxu0 0.0
    %2411 = vmatprep.subr.mxu0 0.0
    %2412 = vmatpush1.msra.mxu0 0.0
    %2413 = vmatprep.subr.mxu0 0.0
    %2414 = vmatpush1.msra.mxu0 0.0
    %2415 = vmatprep.subr.mxu0 0.0
    %2416 = vmatpush1.msra.mxu0 0.0
    %2417 = vmatprep.subr.mxu0 0.0
    %2418 = vmatpush1.msra.mxu0 0.0
    %2419 = vmatprep.subr.mxu0 0.0
    %2420 = vmatpush1.msra.mxu0 0.0
    %2421 = vmatprep.subr.mxu0 0.0
    %2422 = vmatpush1.msra.mxu0 0.0
    %2423 = vmatprep.subr.mxu0 0.0
    %2424 = vmatpush1.msra.mxu0 0.0
    %2425 = vmatprep.subr.mxu0 0.0
    %2426 = vmatpush1.msra.mxu0 0.0
    %2427 = vmatprep.subr.mxu0 0.0
    %2428 = vmatpush1.msra.mxu0 0.0
    %2429 = vmatprep.subr.mxu0 0.0
    %2430 = vmatpush1.msra.mxu0 0.0
    %2431 = vmatprep.subr.mxu0 0.0
    %2432 = vmatpush1.msra.mxu0 0.0
    %2433 = vmatprep.subr.mxu0 0.0
    %2434 = vmatpush1.msra.mxu0 0.0
    %2435 = vmatprep.subr.mxu0 0.0
    %2436 = vmatpush1.msra.mxu0 0.0
    %2437 = vmatprep.subr.mxu0 0.0
    %2438 = vmatpush1.msra.mxu0 0.0
    %2439 = vmatprep.subr.mxu0 0.0
    %2440 = vmatpush1.msra.mxu0 0.0
    %2441 = vmatprep.mubr.f32.mxu0 0.0
    %2442 = vmatmul.mubr.f32.gmra.mrb[0].mxu0 %v2240
    %v2443 = vpop.f32.mrb[0].mxu0
    %v2444 = vadd.f32 %v2302, %v2443
    %v2445 = vpop.f32.mrb[0].mxu0
    %2446 = vdwg.mxu0
    %v2447 = vxor.u32 %v2373, 2147483648
    %v2448 = vxor.u32 %v2375, 2147483648
    %v2449 = vxor.u32 %v2444, 2147483648
    %v2450 = vmul.f32 %v2447, 1.442695
    %v2451 = vpow.pop %v2450
    %v2452 = vmul.f32 %v2448, 1.442695
    %v2453 = vpow.pop %v2452
    %v2454 = vmul.f32 %v2449, 1.442695
    %v2455 = vpow.pop %v2454
    %v2456 = vadd.f32 %v2451, 1.0
    %v2457 = vadd.f32 %v2453, 1.0
    %v2458 = vadd.f32 %v2455, 1.0
    %v2459 = vrcp.pop %v2456
    %v2460 = vmul.f32 1.0, %v2459
    %v2461 = vrcp.pop %v2457
    %v2462 = vmul.f32 1.0, %v2461
    %v2463 = vrcp.pop %v2458
    %v2464 = vmul.f32 1.0, %v2463
    %v2465 = vld [vmem:[#allocation23] sm:$0xff]
    %v2466 = vld [vmem:[#allocation23 + $0x8] sm:$0xff]
    %v2467 = vld [vmem:[#allocation23 + $0x10] sm:$0xff]
    %v2468 = vld [vmem:[#allocation23 + $0x18] sm:$0xff]
    %v2469 = vld [vmem:[#allocation23 + $0x20] sm:$0xff]
    %v2470 = vld [vmem:[#allocation23 + $0x28] sm:$0xff]
    %v2471 = vld [vmem:[#allocation23 + $0x30] sm:$0xff]
    %v2472 = vld [vmem:[#allocation23 + $0x38] sm:$0xff]
    %v2473 = vld [vmem:[#allocation23 + $0x40] sm:$0xff]
    %v2474 = vld [vmem:[#allocation23 + $0x48] sm:$0xff]
    %v2475 = vld [vmem:[#allocation23 + $0x50] sm:$0xff]
    %v2476 = vld [vmem:[#allocation23 + $0x58] sm:$0xff]
    %v2477 = vld [vmem:[#allocation23 + $0x60] sm:$0xff]
    %v2478 = vld [vmem:[#allocation23 + $0x68] sm:$0xff]
    %v2479 = vld [vmem:[#allocation23 + $0x70] sm:$0xff]
    %v2480 = vld [vmem:[#allocation23 + $0x78] sm:$0xff]
    %v2481 = vld [vmem:[#allocation23 + $0x80] sm:$0xff]
    %v2482 = vld [vmem:[#allocation23 + $0x88] sm:$0xff]
    %v2483 = vld [vmem:[#allocation23 + $0x90] sm:$0xff]
    %v2484 = vld [vmem:[#allocation23 + $0x98] sm:$0xff]
    %v2485 = vld [vmem:[#allocation23 + $0xa0] sm:$0xff]
    %v2486 = vld [vmem:[#allocation23 + $0xa8] sm:$0xff]
    %v2487 = vld [vmem:[#allocation23 + $0xb0] sm:$0xff]
    %v2488 = vld [vmem:[#allocation23 + $0xb8] sm:$0xff]
    %v2489 = vld [vmem:[#allocation23 + $0xc0] sm:$0xff]
    %v2490 = vld [vmem:[#allocation23 + $0xc8] sm:$0xff]
    %v2491 = vld [vmem:[#allocation23 + $0xd0] sm:$0xff]
    %v2492 = vld [vmem:[#allocation23 + $0xd8] sm:$0xff]
    %v2493 = vld [vmem:[#allocation23 + $0xe0] sm:$0xff]
    %v2494 = vld [vmem:[#allocation23 + $0xe8] sm:$0xff]
    %v2495 = vld [vmem:[#allocation23 + $0xf0] sm:$0xff]
    %v2496 = vld [vmem:[#allocation23 + $0xf8] sm:$0xff]
    %v2497 = vld [vmem:[#allocation23 + $0x100] sm:$0xff]
    %v2498 = vld [vmem:[#allocation23 + $0x108] sm:$0xff]
    %v2499 = vld [vmem:[#allocation23 + $0x110] sm:$0xff]
    %v2500 = vld [vmem:[#allocation23 + $0x118] sm:$0xff]
    %v2501 = vld [vmem:[#allocation23 + $0x120] sm:$0xff]
    %v2502 = vld [vmem:[#allocation23 + $0x128] sm:$0xff]
    %v2503 = vld [vmem:[#allocation23 + $0x130] sm:$0xff]
    %v2504 = vld [vmem:[#allocation23 + $0x138] sm:$0xff]
    %v2505 = vld [vmem:[#allocation23 + $0x140] sm:$0xff]
    %v2506 = vld [vmem:[#allocation23 + $0x148] sm:$0xff]
    %v2507 = vld [vmem:[#allocation23 + $0x150] sm:$0xff]
    %v2508 = vld [vmem:[#allocation23 + $0x158] sm:$0xff]
    %v2509 = vld [vmem:[#allocation23 + $0x160] sm:$0xff]
    %v2510 = vld [vmem:[#allocation23 + $0x168] sm:$0xff]
    %v2511 = vld [vmem:[#allocation23 + $0x170] sm:$0xff]
    %v2512 = vld [vmem:[#allocation23 + $0x178] sm:$0xff]
    %v2513 = vld [vmem:[#allocation23 + $0x180] sm:$0xff]
    %v2514 = vld [vmem:[#allocation23 + $0x188] sm:$0xff]
    %v2515 = vld [vmem:[#allocation23 + $0x190] sm:$0xff]
    %v2516 = vld [vmem:[#allocation23 + $0x198] sm:$0xff]
    %v2517 = vld [vmem:[#allocation23 + $0x1a0] sm:$0xff]
    %v2518 = vld [vmem:[#allocation23 + $0x1a8] sm:$0xff]
    %v2519 = vld [vmem:[#allocation23 + $0x1b0] sm:$0xff]
    %v2520 = vld [vmem:[#allocation23 + $0x1b8] sm:$0xff]
    %v2521 = vld [vmem:[#allocation23 + $0x1c0] sm:$0xff]
    %v2522 = vld [vmem:[#allocation23 + $0x1c8] sm:$0xff]
    %v2523 = vld [vmem:[#allocation23 + $0x1d0] sm:$0xff]
    %v2524 = vld [vmem:[#allocation23 + $0x1d8] sm:$0xff]
    %v2525 = vld [vmem:[#allocation23 + $0x1e0] sm:$0xff]
    %v2526 = vld [vmem:[#allocation23 + $0x1e8] sm:$0xff]
    %v2527 = vld [vmem:[#allocation23 + $0x1f0] sm:$0xff]
    %v2528 = vld [vmem:[#allocation23 + $0x1f8] sm:$0xff]
    %v2529 = vld [vmem:[#allocation23 + $0x200] sm:$0xff]
    %v2530 = vld [vmem:[#allocation23 + $0x208] sm:$0xff]
    %v2531 = vld [vmem:[#allocation23 + $0x210] sm:$0xff]
    %v2532 = vld [vmem:[#allocation23 + $0x218] sm:$0xff]
    %v2533 = vld [vmem:[#allocation23 + $0x220] sm:$0xff]
    %v2534 = vld [vmem:[#allocation23 + $0x228] sm:$0xff]
    %v2535 = vld [vmem:[#allocation23 + $0x230] sm:$0xff]
    %v2536 = vld [vmem:[#allocation23 + $0x238] sm:$0xff]
    %v2537 = vld [vmem:[#allocation23 + $0x240] sm:$0xff]
    %v2538 = vld [vmem:[#allocation23 + $0x248] sm:$0xff]
    %v2539 = vld [vmem:[#allocation23 + $0x250] sm:$0xff]
    %v2540 = vld [vmem:[#allocation23 + $0x258] sm:$0xff]
    %v2541 = vld [vmem:[#allocation23 + $0x260] sm:$0xff]
    %v2542 = vld [vmem:[#allocation23 + $0x268] sm:$0xff]
    %v2543 = vld [vmem:[#allocation23 + $0x270] sm:$0xff]
    %v2544 = vld [vmem:[#allocation23 + $0x278] sm:$0xff]
    %v2545 = vld [vmem:[#allocation23 + $0x280] sm:$0xff]
    %v2546 = vld [vmem:[#allocation23 + $0x288] sm:$0xff]
    %v2547 = vld [vmem:[#allocation23 + $0x290] sm:$0xff]
    %v2548 = vld [vmem:[#allocation23 + $0x298] sm:$0xff]
    %v2549 = vld [vmem:[#allocation23 + $0x2a0] sm:$0xff]
    %v2550 = vld [vmem:[#allocation23 + $0x2a8] sm:$0xff]
    %v2551 = vld [vmem:[#allocation23 + $0x2b0] sm:$0xff]
    %v2552 = vld [vmem:[#allocation23 + $0x2b8] sm:$0xff]
    %v2553 = vld [vmem:[#allocation23 + $0x2c0] sm:$0xff]
    %v2554 = vld [vmem:[#allocation23 + $0x2c8] sm:$0xff]
    %v2555 = vld [vmem:[#allocation23 + $0x2d0] sm:$0xff]
    %v2556 = vld [vmem:[#allocation23 + $0x2d8] sm:$0xff]
    %v2557 = vld [vmem:[#allocation23 + $0x2e0] sm:$0xff]
    %v2558 = vld [vmem:[#allocation23 + $0x2e8] sm:$0xff]
    %v2559 = vld [vmem:[#allocation23 + $0x2f0] sm:$0xff]
    %v2560 = vld [vmem:[#allocation23 + $0x2f8] sm:$0xff]
    %v2561 = vld [vmem:[#allocation23 + $0x300] sm:$0xff]
    %v2562 = vld [vmem:[#allocation23 + $0x308] sm:$0xff]
    %v2563 = vld [vmem:[#allocation23 + $0x310] sm:$0xff]
    %v2564 = vld [vmem:[#allocation23 + $0x318] sm:$0xff]
    %v2565 = vld [vmem:[#allocation23 + $0x320] sm:$0xff]
    %v2566 = vld [vmem:[#allocation23 + $0x328] sm:$0xff]
    %v2567 = vld [vmem:[#allocation23 + $0x330] sm:$0xff]
    %v2568 = vld [vmem:[#allocation23 + $0x338] sm:$0xff]
    %v2569 = vld [vmem:[#allocation23 + $0x340] sm:$0xff]
    %v2570 = vld [vmem:[#allocation23 + $0x348] sm:$0xff]
    %v2571 = vld [vmem:[#allocation23 + $0x350] sm:$0xff]
    %v2572 = vld [vmem:[#allocation23 + $0x358] sm:$0xff]
    %v2573 = vld [vmem:[#allocation23 + $0x360] sm:$0xff]
    %v2574 = vld [vmem:[#allocation23 + $0x368] sm:$0xff]
    %v2575 = vld [vmem:[#allocation23 + $0x370] sm:$0xff]
    %v2576 = vld [vmem:[#allocation23 + $0x378] sm:$0xff]
    %v2577 = vld [vmem:[#allocation23 + $0x380] sm:$0xff]
    %v2578 = vld [vmem:[#allocation23 + $0x388] sm:$0xff]
    %v2579 = vld [vmem:[#allocation23 + $0x390] sm:$0xff]
    %v2580 = vld [vmem:[#allocation23 + $0x398] sm:$0xff]
    %v2581 = vld [vmem:[#allocation23 + $0x3a0] sm:$0xff]
    %v2582 = vld [vmem:[#allocation23 + $0x3a8] sm:$0xff]
    %v2583 = vld [vmem:[#allocation23 + $0x3b0] sm:$0xff]
    %v2584 = vld [vmem:[#allocation23 + $0x3b8] sm:$0xff]
    %v2585 = vld [vmem:[#allocation23 + $0x3c0] sm:$0xff]
    %v2586 = vld [vmem:[#allocation23 + $0x3c8] sm:$0xff]
    %v2587 = vld [vmem:[#allocation23 + $0x3d0] sm:$0xff]
    %v2588 = vld [vmem:[#allocation23 + $0x3d8] sm:$0xff]
    %v2589 = vld [vmem:[#allocation23 + $0x3e0] sm:$0xff]
    %v2590 = vld [vmem:[#allocation23 + $0x3e8] sm:$0xff]
    %v2591 = vld [vmem:[#allocation23 + $0x3f0] sm:$0xff]
    %v2592 = vld [vmem:[#allocation23 + $0x3f8] sm:$0xff]
    %v2593 = vld [vmem:[#allocation23 + $0x400] sm:$0xff]
    %v2594 = vld [vmem:[#allocation23 + $0x408] sm:$0xff]
    %v2595 = vld [vmem:[#allocation23 + $0x410] sm:$0xff]
    %v2596 = vld [vmem:[#allocation23 + $0x418] sm:$0xff]
    %v2597 = vld [vmem:[#allocation23 + $0x420] sm:$0xff]
    %v2598 = vld [vmem:[#allocation23 + $0x428] sm:$0xff]
    %v2599 = vld [vmem:[#allocation23 + $0x430] sm:$0xff]
    %v2600 = vld [vmem:[#allocation23 + $0x438] sm:$0xff]
    %v2601 = vld [vmem:[#allocation23 + $0x440] sm:$0xff]
    %v2602 = vld [vmem:[#allocation23 + $0x448] sm:$0xff]
    %v2603 = vld [vmem:[#allocation23 + $0x450] sm:$0xff]
    %v2604 = vld [vmem:[#allocation23 + $0x458] sm:$0xff]
    %v2605 = vld [vmem:[#allocation23 + $0x460] sm:$0xff]
    %v2606 = vld [vmem:[#allocation23 + $0x468] sm:$0xff]
    %v2607 = vld [vmem:[#allocation23 + $0x470] sm:$0xff]
    %v2608 = vld [vmem:[#allocation23 + $0x478] sm:$0xff]
    %v2609 = vld [vmem:[#allocation23 + $0x480] sm:$0xff]
    %v2610 = vld [vmem:[#allocation23 + $0x488] sm:$0xff]
    %v2611 = vld [vmem:[#allocation23 + $0x490] sm:$0xff]
    %v2612 = vld [vmem:[#allocation23 + $0x498] sm:$0xff]
    %v2613 = vld [vmem:[#allocation23 + $0x4a0] sm:$0xff]
    %v2614 = vld [vmem:[#allocation23 + $0x4a8] sm:$0xff]
    %v2615 = vld [vmem:[#allocation23 + $0x4b0] sm:$0xff]
    %v2616 = vld [vmem:[#allocation23 + $0x4b8] sm:$0xff]
    %v2617 = vld [vmem:[#allocation23 + $0x4c0] sm:$0xff]
    %v2618 = vld [vmem:[#allocation23 + $0x4c8] sm:$0xff]
    %v2619 = vld [vmem:[#allocation23 + $0x4d0] sm:$0xff]
    %v2620 = vld [vmem:[#allocation23 + $0x4d8] sm:$0xff]
    %v2621 = vld [vmem:[#allocation23 + $0x4e0] sm:$0xff]
    %v2622 = vld [vmem:[#allocation23 + $0x4e8] sm:$0xff]
    %v2623 = vld [vmem:[#allocation23 + $0x4f0] sm:$0xff]
    %v2624 = vld [vmem:[#allocation23 + $0x4f8] sm:$0xff]
    %v2625 = vld [vmem:[#allocation23 + $0x500] sm:$0xff]
    %v2626 = vld [vmem:[#allocation23 + $0x508] sm:$0xff]
    %v2627 = vld [vmem:[#allocation23 + $0x510] sm:$0xff]
    %v2628 = vld [vmem:[#allocation23 + $0x518] sm:$0xff]
    %v2629 = vld [vmem:[#allocation23 + $0x520] sm:$0xff]
    %v2630 = vld [vmem:[#allocation23 + $0x528] sm:$0xff]
    %v2631 = vld [vmem:[#allocation23 + $0x530] sm:$0xff]
    %v2632 = vld [vmem:[#allocation23 + $0x538] sm:$0xff]
    %v2633 = vld [vmem:[#allocation23 + $0x540] sm:$0xff]
    %v2634 = vld [vmem:[#allocation23 + $0x548] sm:$0xff]
    %v2635 = vld [vmem:[#allocation23 + $0x550] sm:$0xff]
    %v2636 = vld [vmem:[#allocation23 + $0x558] sm:$0xff]
    %v2637 = vld [vmem:[#allocation23 + $0x560] sm:$0xff]
    %v2638 = vld [vmem:[#allocation23 + $0x568] sm:$0xff]
    %v2639 = vld [vmem:[#allocation23 + $0x570] sm:$0xff]
    %v2640 = vld [vmem:[#allocation23 + $0x578] sm:$0xff]
    %v2641 = vld [vmem:[#allocation23 + $0x580] sm:$0xff]
    %v2642 = vld [vmem:[#allocation23 + $0x588] sm:$0xff]
    %v2643 = vld [vmem:[#allocation23 + $0x590] sm:$0xff]
    %v2644 = vld [vmem:[#allocation23 + $0x598] sm:$0xff]
    %v2645 = vld [vmem:[#allocation23 + $0x5a0] sm:$0xff]
    %v2646 = vld [vmem:[#allocation23 + $0x5a8] sm:$0xff]
    %v2647 = vld [vmem:[#allocation23 + $0x5b0] sm:$0xff]
    %v2648 = vld [vmem:[#allocation23 + $0x5b8] sm:$0xff]
    %v2649 = vld [vmem:[#allocation23 + $0x5c0] sm:$0xff]
    %v2650 = vld [vmem:[#allocation23 + $0x5c8] sm:$0xff]
    %v2651 = vld [vmem:[#allocation23 + $0x5d0] sm:$0xff]
    %v2652 = vld [vmem:[#allocation23 + $0x5d8] sm:$0xff]
    %v2653 = vld [vmem:[#allocation23 + $0x5e0] sm:$0xff]
    %v2654 = vld [vmem:[#allocation23 + $0x5e8] sm:$0xff]
    %v2655 = vld [vmem:[#allocation23 + $0x5f0] sm:$0xff]
    %v2656 = vld [vmem:[#allocation23 + $0x5f8] sm:$0xff]
    %v2657 = vld [vmem:[#allocation25] sm:$0xf]
    %v2659 = vlaneseq
    %v2660 = vshrl.u32 %v2659, 7
    %v2661 = vsub.s32 0, %v2660
    %v2662 = vrot.slane %v2657, %v2661
    %v2663 = vlaneseq
    %v2664 = vshrl.u32 %v2663, 7
    %v2665 = vsub.s32 1, %v2664
    %v2666 = vrot.slane %v2657, %v2665
    %v2667 = vlaneseq
    %v2668 = vshrl.u32 %v2667, 7
    %v2669 = vsub.s32 2, %v2668
    %v2670 = vrot.slane %v2657, %v2669
    %v2671 = vlaneseq
    %v2672 = vshrl.u32 %v2671, 7
    %v2673 = vsub.s32 3, %v2672
    %v2674 = vrot.slane %v2657, %v2673
    %2679 = vmatprep.subr.mxu0 %v2466
    %2680 = vmatpush1.msra.mxu0 %v2465
    %2681 = vmatprep.subr.mxu0 %v2470
    %2682 = vmatpush1.msra.mxu0 %v2469
    %2683 = vmatprep.subr.mxu0 %v2474
    %2684 = vmatpush1.msra.mxu0 %v2473
    %2685 = vmatprep.subr.mxu0 %v2478
    %2686 = vmatpush1.msra.mxu0 %v2477
    %2687 = vmatprep.subr.mxu0 %v2482
    %2688 = vmatpush1.msra.mxu0 %v2481
    %2689 = vmatprep.subr.mxu0 %v2486
    %2690 = vmatpush1.msra.mxu0 %v2485
    %2691 = vmatprep.subr.mxu0 %v2490
    %2692 = vmatpush1.msra.mxu0 %v2489
    %2693 = vmatprep.subr.mxu0 %v2494
    %2694 = vmatpush1.msra.mxu0 %v2493
    %2695 = vmatprep.subr.mxu0 %v2498
    %2696 = vmatpush1.msra.mxu0 %v2497
    %2697 = vmatprep.subr.mxu0 %v2502
    %2698 = vmatpush1.msra.mxu0 %v2501
    %2699 = vmatprep.subr.mxu0 %v2506
    %2700 = vmatpush1.msra.mxu0 %v2505
    %2701 = vmatprep.subr.mxu0 %v2510
    %2702 = vmatpush1.msra.mxu0 %v2509
    %2703 = vmatprep.subr.mxu0 %v2514
    %2704 = vmatpush1.msra.mxu0 %v2513
    %2705 = vmatprep.subr.mxu0 %v2518
    %2706 = vmatpush1.msra.mxu0 %v2517
    %2707 = vmatprep.subr.mxu0 %v2522
    %2708 = vmatpush1.msra.mxu0 %v2521
    %2709 = vmatprep.subr.mxu0 %v2526
    %2710 = vmatpush1.msra.mxu0 %v2525
    %2711 = vmatprep.subr.mxu0 %v2530
    %2712 = vmatpush1.msra.mxu0 %v2529
    %2713 = vmatprep.subr.mxu0 %v2534
    %2714 = vmatpush1.msra.mxu0 %v2533
    %2715 = vmatprep.subr.mxu0 %v2538
    %2716 = vmatpush1.msra.mxu0 %v2537
    %2717 = vmatprep.subr.mxu0 %v2542
    %2718 = vmatpush1.msra.mxu0 %v2541
    %2719 = vmatprep.subr.mxu0 %v2546
    %2720 = vmatpush1.msra.mxu0 %v2545
    %2721 = vmatprep.subr.mxu0 %v2550
    %2722 = vmatpush1.msra.mxu0 %v2549
    %2723 = vmatprep.subr.mxu0 %v2554
    %2724 = vmatpush1.msra.mxu0 %v2553
    %2725 = vmatprep.subr.mxu0 %v2558
    %2726 = vmatpush1.msra.mxu0 %v2557
    %2727 = vmatprep.subr.mxu0 %v2562
    %2728 = vmatpush1.msra.mxu0 %v2561
    %2729 = vmatprep.subr.mxu0 %v2566
    %2730 = vmatpush1.msra.mxu0 %v2565
    %2731 = vmatprep.subr.mxu0 %v2570
    %2732 = vmatpush1.msra.mxu0 %v2569
    %2733 = vmatprep.subr.mxu0 %v2574
    %2734 = vmatpush1.msra.mxu0 %v2573
    %2735 = vmatprep.subr.mxu0 %v2578
    %2736 = vmatpush1.msra.mxu0 %v2577
    %2737 = vmatprep.subr.mxu0 %v2582
    %2738 = vmatpush1.msra.mxu0 %v2581
    %2739 = vmatprep.subr.mxu0 %v2586
    %2740 = vmatpush1.msra.mxu0 %v2585
    %2741 = vmatprep.subr.mxu0 %v2590
    %2742 = vmatpush1.msra.mxu0 %v2589
    %2743 = vmatprep.mubr.f32.mxu0 %v2462
    %2744 = vmatmul.mubr.f32.gmra.mrb[0].mxu0 %v2460
    %v2745 = vpop.f32.mrb[0].mxu0
    %v2746 = vadd.f32 %v2662, %v2745
    %v2747 = vpop.f32.mrb[0].mxu0
    %v2748 = vadd.f32 %v2666, %v2747
    %2749 = vdwg.mxu0
    %2750 = vmatprep.subr.mxu0 %v2594
    %2751 = vmatpush1.msra.mxu0 %v2593
    %2752 = vmatprep.subr.mxu0 %v2598
    %2753 = vmatpush1.msra.mxu0 %v2597
    %2754 = vmatprep.subr.mxu0 %v2602
    %2755 = vmatpush1.msra.mxu0 %v2601
    %2756 = vmatprep.subr.mxu0 %v2606
    %2757 = vmatpush1.msra.mxu0 %v2605
    %2758 = vmatprep.subr.mxu0 %v2610
    %2759 = vmatpush1.msra.mxu0 %v2609
    %2760 = vmatprep.subr.mxu0 %v2614
    %2761 = vmatpush1.msra.mxu0 %v2613
    %2762 = vmatprep.subr.mxu0 %v2618
    %2763 = vmatpush1.msra.mxu0 %v2617
    %2764 = vmatprep.subr.mxu0 %v2622
    %2765 = vmatpush1.msra.mxu0 %v2621
    %2766 = vmatprep.subr.mxu0 %v2626
    %2767 = vmatpush1.msra.mxu0 %v2625
    %2768 = vmatprep.subr.mxu0 %v2630
    %2769 = vmatpush1.msra.mxu0 %v2629
    %2770 = vmatprep.subr.mxu0 %v2634
    %2771 = vmatpush1.msra.mxu0 %v2633
    %2772 = vmatprep.subr.mxu0 %v2638
    %2773 = vmatpush1.msra.mxu0 %v2637
    %2774 = vmatprep.subr.mxu0 %v2642
    %2775 = vmatpush1.msra.mxu0 %v2641
    %2776 = vmatprep.subr.mxu0 %v2646
    %2777 = vmatpush1.msra.mxu0 %v2645
    %2778 = vmatprep.subr.mxu0 %v2650
    %2779 = vmatpush1.msra.mxu0 %v2649
    %2780 = vmatprep.subr.mxu0 %v2654
    %2781 = vmatpush1.msra.mxu0 %v2653
    %2782 = vmatprep.subr.mxu0 0.0
    %2783 = vmatpush1.msra.mxu0 0.0
    %2784 = vmatprep.subr.mxu0 0.0
    %2785 = vmatpush1.msra.mxu0 0.0
    %2786 = vmatprep.subr.mxu0 0.0
    %2787 = vmatpush1.msra.mxu0 0.0
    %2788 = vmatprep.subr.mxu0 0.0
    %2789 = vmatpush1.msra.mxu0 0.0
    %2790 = vmatprep.subr.mxu0 0.0
    %2791 = vmatpush1.msra.mxu0 0.0
    %2792 = vmatprep.subr.mxu0 0.0
    %2793 = vmatpush1.msra.mxu0 0.0
    %2794 = vmatprep.subr.mxu0 0.0
    %2795 = vmatpush1.msra.mxu0 0.0
    %2796 = vmatprep.subr.mxu0 0.0
    %2797 = vmatpush1.msra.mxu0 0.0
    %2798 = vmatprep.subr.mxu0 0.0
    %2799 = vmatpush1.msra.mxu0 0.0
    %2800 = vmatprep.subr.mxu0 0.0
    %2801 = vmatpush1.msra.mxu0 0.0
    %2802 = vmatprep.subr.mxu0 0.0
    %2803 = vmatpush1.msra.mxu0 0.0
    %2804 = vmatprep.subr.mxu0 0.0
    %2805 = vmatpush1.msra.mxu0 0.0
    %2806 = vmatprep.subr.mxu0 0.0
    %2807 = vmatpush1.msra.mxu0 0.0
    %2808 = vmatprep.subr.mxu0 0.0
    %2809 = vmatpush1.msra.mxu0 0.0
    %2810 = vmatprep.subr.mxu0 0.0
    %2811 = vmatpush1.msra.mxu0 0.0
    %2812 = vmatprep.subr.mxu0 0.0
    %2813 = vmatpush1.msra.mxu0 0.0
    %2814 = vmatprep.mubr.f32.mxu0 0.0
    %2815 = vmatmul.mubr.f32.gmra.mrb[0].mxu0 %v2464
    %v2816 = vpop.f32.mrb[0].mxu0
    %v2817 = vadd.f32 %v2746, %v2816
    %v2818 = vpop.f32.mrb[0].mxu0
    %v2819 = vadd.f32 %v2748, %v2818
    %2820 = vdwg.mxu0
    %2821 = vmatprep.subr.mxu0 %v2468
    %2822 = vmatpush1.msra.mxu0 %v2467
    %2823 = vmatprep.subr.mxu0 %v2472
    %2824 = vmatpush1.msra.mxu0 %v2471
    %2825 = vmatprep.subr.mxu0 %v2476
    %2826 = vmatpush1.msra.mxu0 %v2475
    %2827 = vmatprep.subr.mxu0 %v2480
    %2828 = vmatpush1.msra.mxu0 %v2479
    %2829 = vmatprep.subr.mxu0 %v2484
    %2830 = vmatpush1.msra.mxu0 %v2483
    %2831 = vmatprep.subr.mxu0 %v2488
    %2832 = vmatpush1.msra.mxu0 %v2487
    %2833 = vmatprep.subr.mxu0 %v2492
    %2834 = vmatpush1.msra.mxu0 %v2491
    %2835 = vmatprep.subr.mxu0 %v2496
    %2836 = vmatpush1.msra.mxu0 %v2495
    %2837 = vmatprep.subr.mxu0 %v2500
    %2838 = vmatpush1.msra.mxu0 %v2499
    %2839 = vmatprep.subr.mxu0 %v2504
    %2840 = vmatpush1.msra.mxu0 %v2503
    %2841 = vmatprep.subr.mxu0 %v2508
    %2842 = vmatpush1.msra.mxu0 %v2507
    %2843 = vmatprep.subr.mxu0 %v2512
    %2844 = vmatpush1.msra.mxu0 %v2511
    %2845 = vmatprep.subr.mxu0 %v2516
    %2846 = vmatpush1.msra.mxu0 %v2515
    %2847 = vmatprep.subr.mxu0 %v2520
    %2848 = vmatpush1.msra.mxu0 %v2519
    %2849 = vmatprep.subr.mxu0 %v2524
    %2850 = vmatpush1.msra.mxu0 %v2523
    %2851 = vmatprep.subr.mxu0 %v2528
    %2852 = vmatpush1.msra.mxu0 %v2527
    %2853 = vmatprep.subr.mxu0 %v2532
    %2854 = vmatpush1.msra.mxu0 %v2531
    %2855 = vmatprep.subr.mxu0 %v2536
    %2856 = vmatpush1.msra.mxu0 %v2535
    %2857 = vmatprep.subr.mxu0 %v2540
    %2858 = vmatpush1.msra.mxu0 %v2539
    %2859 = vmatprep.subr.mxu0 %v2544
    %2860 = vmatpush1.msra.mxu0 %v2543
    %2861 = vmatprep.subr.mxu0 %v2548
    %2862 = vmatpush1.msra.mxu0 %v2547
    %2863 = vmatprep.subr.mxu0 %v2552
    %2864 = vmatpush1.msra.mxu0 %v2551
    %2865 = vmatprep.subr.mxu0 %v2556
    %2866 = vmatpush1.msra.mxu0 %v2555
    %2867 = vmatprep.subr.mxu0 %v2560
    %2868 = vmatpush1.msra.mxu0 %v2559
    %2869 = vmatprep.subr.mxu0 %v2564
    %2870 = vmatpush1.msra.mxu0 %v2563
    %2871 = vmatprep.subr.mxu0 %v2568
    %2872 = vmatpush1.msra.mxu0 %v2567
    %2873 = vmatprep.subr.mxu0 %v2572
    %2874 = vmatpush1.msra.mxu0 %v2571
    %2875 = vmatprep.subr.mxu0 %v2576
    %2876 = vmatpush1.msra.mxu0 %v2575
    %2877 = vmatprep.subr.mxu0 %v2580
    %2878 = vmatpush1.msra.mxu0 %v2579
    %2879 = vmatprep.subr.mxu0 %v2584
    %2880 = vmatpush1.msra.mxu0 %v2583
    %2881 = vmatprep.subr.mxu0 %v2588
    %2882 = vmatpush1.msra.mxu0 %v2587
    %2883 = vmatprep.subr.mxu0 %v2592
    %2884 = vmatpush1.msra.mxu0 %v2591
    %2885 = vmatprep.mubr.f32.mxu0 %v2462
    %2886 = vmatmul.mubr.f32.gmra.mrb[0].mxu0 %v2460
    %v2887 = vpop.f32.mrb[0].mxu0
    %v2888 = vadd.f32 %v2670, %v2887
    %v2889 = vpop.f32.mrb[0].mxu0
    %v2890 = vadd.f32 %v2674, %v2889
    %2891 = vdwg.mxu0
    %2892 = vmatprep.subr.mxu0 %v2596
    %2893 = vmatpush1.msra.mxu0 %v2595
    %2894 = vmatprep.subr.mxu0 %v2600
    %2895 = vmatpush1.msra.mxu0 %v2599
    %2896 = vmatprep.subr.mxu0 %v2604
    %2897 = vmatpush1.msra.mxu0 %v2603
    %2898 = vmatprep.subr.mxu0 %v2608
    %2899 = vmatpush1.msra.mxu0 %v2607
    %2900 = vmatprep.subr.mxu0 %v2612
    %2901 = vmatpush1.msra.mxu0 %v2611
    %2902 = vmatprep.subr.mxu0 %v2616
    %2903 = vmatpush1.msra.mxu0 %v2615
    %2904 = vmatprep.subr.mxu0 %v2620
    %2905 = vmatpush1.msra.mxu0 %v2619
    %2906 = vmatprep.subr.mxu0 %v2624
    %2907 = vmatpush1.msra.mxu0 %v2623
    %2908 = vmatprep.subr.mxu0 %v2628
    %2909 = vmatpush1.msra.mxu0 %v2627
    %2910 = vmatprep.subr.mxu0 %v2632
    %2911 = vmatpush1.msra.mxu0 %v2631
    %2912 = vmatprep.subr.mxu0 %v2636
    %2913 = vmatpush1.msra.mxu0 %v2635
    %2914 = vmatprep.subr.mxu0 %v2640
    %2915 = vmatpush1.msra.mxu0 %v2639
    %2916 = vmatprep.subr.mxu0 %v2644
    %2917 = vmatpush1.msra.mxu0 %v2643
    %2918 = vmatprep.subr.mxu0 %v2648
    %2919 = vmatpush1.msra.mxu0 %v2647
    %2920 = vmatprep.subr.mxu0 %v2652
    %2921 = vmatpush1.msra.mxu0 %v2651
    %2922 = vmatprep.subr.mxu0 %v2656
    %2923 = vmatpush1.msra.mxu0 %v2655
    %2924 = vmatprep.subr.mxu0 0.0
    %2925 = vmatpush1.msra.mxu0 0.0
    %2926 = vmatprep.subr.mxu0 0.0
    %2927 = vmatpush1.msra.mxu0 0.0
    %2928 = vmatprep.subr.mxu0 0.0
    %2929 = vmatpush1.msra.mxu0 0.0
    %2930 = vmatprep.subr.mxu0 0.0
    %2931 = vmatpush1.msra.mxu0 0.0
    %2932 = vmatprep.subr.mxu0 0.0
    %2933 = vmatpush1.msra.mxu0 0.0
    %2934 = vmatprep.subr.mxu0 0.0
    %2935 = vmatpush1.msra.mxu0 0.0
    %2936 = vmatprep.subr.mxu0 0.0
    %2937 = vmatpush1.msra.mxu0 0.0
    %2938 = vmatprep.subr.mxu0 0.0
    %2939 = vmatpush1.msra.mxu0 0.0
    %2940 = vmatprep.subr.mxu0 0.0
    %2941 = vmatpush1.msra.mxu0 0.0
    %2942 = vmatprep.subr.mxu0 0.0
    %2943 = vmatpush1.msra.mxu0 0.0
    %2944 = vmatprep.subr.mxu0 0.0
    %2945 = vmatpush1.msra.mxu0 0.0
    %2946 = vmatprep.subr.mxu0 0.0
    %2947 = vmatpush1.msra.mxu0 0.0
    %2948 = vmatprep.subr.mxu0 0.0
    %2949 = vmatpush1.msra.mxu0 0.0
    %2950 = vmatprep.subr.mxu0 0.0
    %2951 = vmatpush1.msra.mxu0 0.0
    %2952 = vmatprep.subr.mxu0 0.0
    %2953 = vmatpush1.msra.mxu0 0.0
    %2954 = vmatprep.subr.mxu0 0.0
    %2955 = vmatpush1.msra.mxu0 0.0
    %2956 = vmatprep.mubr.f32.mxu0 0.0
    %2957 = vmatmul.mubr.f32.gmra.mrb[0].mxu0 %v2464
    %v2958 = vpop.f32.mrb[0].mxu0
    %v2959 = vadd.f32 %v2888, %v2958
    %v2960 = vpop.f32.mrb[0].mxu0
    %v2961 = vadd.f32 %v2890, %v2960
    %2962 = vdwg.mxu0
    %v2963 = vxor.u32 %v2817, 2147483648
    %v2964 = vxor.u32 %v2819, 2147483648
    %v2965 = vxor.u32 %v2959, 2147483648
    %v2966 = vxor.u32 %v2961, 2147483648
    %v2967 = vmul.f32 %v2963, 1.442695
    %v2968 = vpow.pop %v2967
    %v2969 = vmul.f32 %v2964, 1.442695
    %v2970 = vpow.pop %v2969
    %v2971 = vmul.f32 %v2965, 1.442695
    %v2972 = vpow.pop %v2971
    %v2973 = vmul.f32 %v2966, 1.442695
    %v2974 = vpow.pop %v2973
    %v2975 = vadd.f32 %v2968, 1.0
    %v2976 = vadd.f32 %v2970, 1.0
    %v2977 = vadd.f32 %v2972, 1.0
    %v2978 = vadd.f32 %v2974, 1.0
    %v2979 = vrcp.pop %v2975
    %v2980 = vmul.f32 1.0, %v2979
    %v2981 = vrcp.pop %v2976
    %v2982 = vmul.f32 1.0, %v2981
    %v2983 = vrcp.pop %v2977
    %v2984 = vmul.f32 1.0, %v2983
    %v2985 = vrcp.pop %v2978
    %v2986 = vmul.f32 1.0, %v2985
    %v2987 = vld [vmem:[#allocation26] sm:$0xff]
    %v2988 = vld [vmem:[#allocation26 + $0x8] sm:$0xff]
    %v2989 = vld [vmem:[#allocation26 + $0x10] sm:$0xff]
    %v2990 = vld [vmem:[#allocation26 + $0x18] sm:$0xff]
    %v2991 = vld [vmem:[#allocation26 + $0x20] sm:$0xff]
    %v2992 = vld [vmem:[#allocation26 + $0x28] sm:$0xff]
    %v2993 = vld [vmem:[#allocation26 + $0x30] sm:$0xff]
    %v2994 = vld [vmem:[#allocation26 + $0x38] sm:$0xff]
    %v2995 = vld [vmem:[#allocation26 + $0x40] sm:$0xff]
    %v2996 = vld [vmem:[#allocation26 + $0x48] sm:$0xff]
    %v2997 = vld [vmem:[#allocation26 + $0x50] sm:$0xff]
    %v2998 = vld [vmem:[#allocation26 + $0x58] sm:$0xff]
    %v2999 = vld [vmem:[#allocation26 + $0x60] sm:$0xff]
    %v3000 = vld [vmem:[#allocation26 + $0x68] sm:$0xff]
    %v3001 = vld [vmem:[#allocation26 + $0x70] sm:$0xff]
    %v3002 = vld [vmem:[#allocation26 + $0x78] sm:$0xff]
    %v3003 = vld [vmem:[#allocation26 + $0x80] sm:$0xff]
    %v3004 = vld [vmem:[#allocation26 + $0x88] sm:$0xff]
    %v3005 = vld [vmem:[#allocation26 + $0x90] sm:$0xff]
    %v3006 = vld [vmem:[#allocation26 + $0x98] sm:$0xff]
    %v3007 = vld [vmem:[#allocation26 + $0xa0] sm:$0xff]
    %v3008 = vld [vmem:[#allocation26 + $0xa8] sm:$0xff]
    %v3009 = vld [vmem:[#allocation26 + $0xb0] sm:$0xff]
    %v3010 = vld [vmem:[#allocation26 + $0xb8] sm:$0xff]
    %v3011 = vld [vmem:[#allocation26 + $0xc0] sm:$0xff]
    %v3012 = vld [vmem:[#allocation26 + $0xc8] sm:$0xff]
    %v3013 = vld [vmem:[#allocation26 + $0xd0] sm:$0xff]
    %v3014 = vld [vmem:[#allocation26 + $0xd8] sm:$0xff]
    %v3015 = vld [vmem:[#allocation26 + $0xe0] sm:$0xff]
    %v3016 = vld [vmem:[#allocation26 + $0xe8] sm:$0xff]
    %v3017 = vld [vmem:[#allocation26 + $0xf0] sm:$0xff]
    %v3018 = vld [vmem:[#allocation26 + $0xf8] sm:$0xff]
    %v3019 = vld [vmem:[#allocation26 + $0x100] sm:$0xff]
    %v3020 = vld [vmem:[#allocation26 + $0x108] sm:$0xff]
    %v3021 = vld [vmem:[#allocation26 + $0x110] sm:$0xff]
    %v3022 = vld [vmem:[#allocation26 + $0x118] sm:$0xff]
    %v3023 = vld [vmem:[#allocation26 + $0x120] sm:$0xff]
    %v3024 = vld [vmem:[#allocation26 + $0x128] sm:$0xff]
    %v3025 = vld [vmem:[#allocation26 + $0x130] sm:$0xff]
    %v3026 = vld [vmem:[#allocation26 + $0x138] sm:$0xff]
    %v3027 = vld [vmem:[#allocation26 + $0x140] sm:$0xff]
    %v3028 = vld [vmem:[#allocation26 + $0x148] sm:$0xff]
    %v3029 = vld [vmem:[#allocation26 + $0x150] sm:$0xff]
    %v3030 = vld [vmem:[#allocation26 + $0x158] sm:$0xff]
    %v3031 = vld [vmem:[#allocation26 + $0x160] sm:$0xff]
    %v3032 = vld [vmem:[#allocation26 + $0x168] sm:$0xff]
    %v3033 = vld [vmem:[#allocation26 + $0x170] sm:$0xff]
    %v3034 = vld [vmem:[#allocation26 + $0x178] sm:$0xff]
    %v3035 = vld [vmem:[#allocation26 + $0x180] sm:$0xff]
    %v3036 = vld [vmem:[#allocation26 + $0x188] sm:$0xff]
    %v3037 = vld [vmem:[#allocation26 + $0x190] sm:$0xff]
    %v3038 = vld [vmem:[#allocation26 + $0x198] sm:$0xff]
    %v3039 = vld [vmem:[#allocation26 + $0x1a0] sm:$0xff]
    %v3040 = vld [vmem:[#allocation26 + $0x1a8] sm:$0xff]
    %v3041 = vld [vmem:[#allocation26 + $0x1b0] sm:$0xff]
    %v3042 = vld [vmem:[#allocation26 + $0x1b8] sm:$0xff]
    %v3043 = vld [vmem:[#allocation26 + $0x1c0] sm:$0xff]
    %v3044 = vld [vmem:[#allocation26 + $0x1c8] sm:$0xff]
    %v3045 = vld [vmem:[#allocation26 + $0x1d0] sm:$0xff]
    %v3046 = vld [vmem:[#allocation26 + $0x1d8] sm:$0xff]
    %v3047 = vld [vmem:[#allocation26 + $0x1e0] sm:$0xff]
    %v3048 = vld [vmem:[#allocation26 + $0x1e8] sm:$0xff]
    %v3049 = vld [vmem:[#allocation26 + $0x1f0] sm:$0xff]
    %v3050 = vld [vmem:[#allocation26 + $0x1f8] sm:$0xff]
    %v3051 = vld [vmem:[#allocation26 + $0x200] sm:$0xff]
    %v3052 = vld [vmem:[#allocation26 + $0x208] sm:$0xff]
    %v3053 = vld [vmem:[#allocation26 + $0x210] sm:$0xff]
    %v3054 = vld [vmem:[#allocation26 + $0x218] sm:$0xff]
    %v3055 = vld [vmem:[#allocation26 + $0x220] sm:$0xff]
    %v3056 = vld [vmem:[#allocation26 + $0x228] sm:$0xff]
    %v3057 = vld [vmem:[#allocation26 + $0x230] sm:$0xff]
    %v3058 = vld [vmem:[#allocation26 + $0x238] sm:$0xff]
    %v3059 = vld [vmem:[#allocation26 + $0x240] sm:$0xff]
    %v3060 = vld [vmem:[#allocation26 + $0x248] sm:$0xff]
    %v3061 = vld [vmem:[#allocation26 + $0x250] sm:$0xff]
    %v3062 = vld [vmem:[#allocation26 + $0x258] sm:$0xff]
    %v3063 = vld [vmem:[#allocation26 + $0x260] sm:$0xff]
    %v3064 = vld [vmem:[#allocation26 + $0x268] sm:$0xff]
    %v3065 = vld [vmem:[#allocation26 + $0x270] sm:$0xff]
    %v3066 = vld [vmem:[#allocation26 + $0x278] sm:$0xff]
    %v3067 = vld [vmem:[#allocation26 + $0x280] sm:$0xff]
    %v3068 = vld [vmem:[#allocation26 + $0x288] sm:$0xff]
    %v3069 = vld [vmem:[#allocation26 + $0x290] sm:$0xff]
    %v3070 = vld [vmem:[#allocation26 + $0x298] sm:$0xff]
    %v3071 = vld [vmem:[#allocation26 + $0x2a0] sm:$0xff]
    %v3072 = vld [vmem:[#allocation26 + $0x2a8] sm:$0xff]
    %v3073 = vld [vmem:[#allocation26 + $0x2b0] sm:$0xff]
    %v3074 = vld [vmem:[#allocation26 + $0x2b8] sm:$0xff]
    %v3075 = vld [vmem:[#allocation26 + $0x2c0] sm:$0xff]
    %v3076 = vld [vmem:[#allocation26 + $0x2c8] sm:$0xff]
    %v3077 = vld [vmem:[#allocation26 + $0x2d0] sm:$0xff]
    %v3078 = vld [vmem:[#allocation26 + $0x2d8] sm:$0xff]
    %v3079 = vld [vmem:[#allocation26 + $0x2e0] sm:$0xff]
    %v3080 = vld [vmem:[#allocation26 + $0x2e8] sm:$0xff]
    %v3081 = vld [vmem:[#allocation26 + $0x2f0] sm:$0xff]
    %v3082 = vld [vmem:[#allocation26 + $0x2f8] sm:$0xff]
    %v3083 = vld [vmem:[#allocation26 + $0x300] sm:$0xff]
    %v3084 = vld [vmem:[#allocation26 + $0x308] sm:$0xff]
    %v3085 = vld [vmem:[#allocation26 + $0x310] sm:$0xff]
    %v3086 = vld [vmem:[#allocation26 + $0x318] sm:$0xff]
    %v3087 = vld [vmem:[#allocation26 + $0x320] sm:$0xff]
    %v3088 = vld [vmem:[#allocation26 + $0x328] sm:$0xff]
    %v3089 = vld [vmem:[#allocation26 + $0x330] sm:$0xff]
    %v3090 = vld [vmem:[#allocation26 + $0x338] sm:$0xff]
    %v3091 = vld [vmem:[#allocation26 + $0x340] sm:$0xff]
    %v3092 = vld [vmem:[#allocation26 + $0x348] sm:$0xff]
    %v3093 = vld [vmem:[#allocation26 + $0x350] sm:$0xff]
    %v3094 = vld [vmem:[#allocation26 + $0x358] sm:$0xff]
    %v3095 = vld [vmem:[#allocation26 + $0x360] sm:$0xff]
    %v3096 = vld [vmem:[#allocation26 + $0x368] sm:$0xff]
    %v3097 = vld [vmem:[#allocation26 + $0x370] sm:$0xff]
    %v3098 = vld [vmem:[#allocation26 + $0x378] sm:$0xff]
    %v3099 = vld [vmem:[#allocation26 + $0x380] sm:$0xff]
    %v3100 = vld [vmem:[#allocation26 + $0x388] sm:$0xff]
    %v3101 = vld [vmem:[#allocation26 + $0x390] sm:$0xff]
    %v3102 = vld [vmem:[#allocation26 + $0x398] sm:$0xff]
    %v3103 = vld [vmem:[#allocation26 + $0x3a0] sm:$0xff]
    %v3104 = vld [vmem:[#allocation26 + $0x3a8] sm:$0xff]
    %v3105 = vld [vmem:[#allocation26 + $0x3b0] sm:$0xff]
    %v3106 = vld [vmem:[#allocation26 + $0x3b8] sm:$0xff]
    %v3107 = vld [vmem:[#allocation26 + $0x3c0] sm:$0xff]
    %v3108 = vld [vmem:[#allocation26 + $0x3c8] sm:$0xff]
    %v3109 = vld [vmem:[#allocation26 + $0x3d0] sm:$0xff]
    %v3110 = vld [vmem:[#allocation26 + $0x3d8] sm:$0xff]
    %v3111 = vld [vmem:[#allocation26 + $0x3e0] sm:$0xff]
    %v3112 = vld [vmem:[#allocation26 + $0x3e8] sm:$0xff]
    %v3113 = vld [vmem:[#allocation26 + $0x3f0] sm:$0xff]
    %v3114 = vld [vmem:[#allocation26 + $0x3f8] sm:$0xff]
    %v3115 = vld [vmem:[#allocation26 + $0x400] sm:$0xff]
    %v3116 = vld [vmem:[#allocation26 + $0x408] sm:$0xff]
    %v3117 = vld [vmem:[#allocation26 + $0x410] sm:$0xff]
    %v3118 = vld [vmem:[#allocation26 + $0x418] sm:$0xff]
    %v3119 = vld [vmem:[#allocation26 + $0x420] sm:$0xff]
    %v3120 = vld [vmem:[#allocation26 + $0x428] sm:$0xff]
    %v3121 = vld [vmem:[#allocation26 + $0x430] sm:$0xff]
    %v3122 = vld [vmem:[#allocation26 + $0x438] sm:$0xff]
    %v3123 = vld [vmem:[#allocation26 + $0x440] sm:$0xff]
    %v3124 = vld [vmem:[#allocation26 + $0x448] sm:$0xff]
    %v3125 = vld [vmem:[#allocation26 + $0x450] sm:$0xff]
    %v3126 = vld [vmem:[#allocation26 + $0x458] sm:$0xff]
    %v3127 = vld [vmem:[#allocation26 + $0x460] sm:$0xff]
    %v3128 = vld [vmem:[#allocation26 + $0x468] sm:$0xff]
    %v3129 = vld [vmem:[#allocation26 + $0x470] sm:$0xff]
    %v3130 = vld [vmem:[#allocation26 + $0x478] sm:$0xff]
    %v3131 = vld [vmem:[#allocation26 + $0x480] sm:$0xff]
    %v3132 = vld [vmem:[#allocation26 + $0x488] sm:$0xff]
    %v3133 = vld [vmem:[#allocation26 + $0x490] sm:$0xff]
    %v3134 = vld [vmem:[#allocation26 + $0x498] sm:$0xff]
    %v3135 = vld [vmem:[#allocation26 + $0x4a0] sm:$0xff]
    %v3136 = vld [vmem:[#allocation26 + $0x4a8] sm:$0xff]
    %v3137 = vld [vmem:[#allocation26 + $0x4b0] sm:$0xff]
    %v3138 = vld [vmem:[#allocation26 + $0x4b8] sm:$0xff]
    %v3139 = vld [vmem:[#allocation26 + $0x4c0] sm:$0xff]
    %v3140 = vld [vmem:[#allocation26 + $0x4c8] sm:$0xff]
    %v3141 = vld [vmem:[#allocation26 + $0x4d0] sm:$0xff]
    %v3142 = vld [vmem:[#allocation26 + $0x4d8] sm:$0xff]
    %v3143 = vld [vmem:[#allocation26 + $0x4e0] sm:$0xff]
    %v3144 = vld [vmem:[#allocation26 + $0x4e8] sm:$0xff]
    %v3145 = vld [vmem:[#allocation26 + $0x4f0] sm:$0xff]
    %v3146 = vld [vmem:[#allocation26 + $0x4f8] sm:$0xff]
    %v3147 = vld [vmem:[#allocation26 + $0x500] sm:$0xff]
    %v3148 = vld [vmem:[#allocation26 + $0x508] sm:$0xff]
    %v3149 = vld [vmem:[#allocation26 + $0x510] sm:$0xff]
    %v3150 = vld [vmem:[#allocation26 + $0x518] sm:$0xff]
    %v3151 = vld [vmem:[#allocation26 + $0x520] sm:$0xff]
    %v3152 = vld [vmem:[#allocation26 + $0x528] sm:$0xff]
    %v3153 = vld [vmem:[#allocation26 + $0x530] sm:$0xff]
    %v3154 = vld [vmem:[#allocation26 + $0x538] sm:$0xff]
    %v3155 = vld [vmem:[#allocation26 + $0x540] sm:$0xff]
    %v3156 = vld [vmem:[#allocation26 + $0x548] sm:$0xff]
    %v3157 = vld [vmem:[#allocation26 + $0x550] sm:$0xff]
    %v3158 = vld [vmem:[#allocation26 + $0x558] sm:$0xff]
    %v3159 = vld [vmem:[#allocation26 + $0x560] sm:$0xff]
    %v3160 = vld [vmem:[#allocation26 + $0x568] sm:$0xff]
    %v3161 = vld [vmem:[#allocation26 + $0x570] sm:$0xff]
    %v3162 = vld [vmem:[#allocation26 + $0x578] sm:$0xff]
    %v3163 = vld [vmem:[#allocation26 + $0x580] sm:$0xff]
    %v3164 = vld [vmem:[#allocation26 + $0x588] sm:$0xff]
    %v3165 = vld [vmem:[#allocation26 + $0x590] sm:$0xff]
    %v3166 = vld [vmem:[#allocation26 + $0x598] sm:$0xff]
    %v3167 = vld [vmem:[#allocation26 + $0x5a0] sm:$0xff]
    %v3168 = vld [vmem:[#allocation26 + $0x5a8] sm:$0xff]
    %v3169 = vld [vmem:[#allocation26 + $0x5b0] sm:$0xff]
    %v3170 = vld [vmem:[#allocation26 + $0x5b8] sm:$0xff]
    %v3171 = vld [vmem:[#allocation26 + $0x5c0] sm:$0xff]
    %v3172 = vld [vmem:[#allocation26 + $0x5c8] sm:$0xff]
    %v3173 = vld [vmem:[#allocation26 + $0x5d0] sm:$0xff]
    %v3174 = vld [vmem:[#allocation26 + $0x5d8] sm:$0xff]
    %v3175 = vld [vmem:[#allocation26 + $0x5e0] sm:$0xff]
    %v3176 = vld [vmem:[#allocation26 + $0x5e8] sm:$0xff]
    %v3177 = vld [vmem:[#allocation26 + $0x5f0] sm:$0xff]
    %v3178 = vld [vmem:[#allocation26 + $0x5f8] sm:$0xff]
    %v3179 = vld [vmem:[#allocation26 + $0x600] sm:$0xff]
    %v3180 = vld [vmem:[#allocation26 + $0x608] sm:$0xff]
    %v3181 = vld [vmem:[#allocation26 + $0x610] sm:$0xff]
    %v3182 = vld [vmem:[#allocation26 + $0x618] sm:$0xff]
    %v3183 = vld [vmem:[#allocation26 + $0x620] sm:$0xff]
    %v3184 = vld [vmem:[#allocation26 + $0x628] sm:$0xff]
    %v3185 = vld [vmem:[#allocation26 + $0x630] sm:$0xff]
    %v3186 = vld [vmem:[#allocation26 + $0x638] sm:$0xff]
    %v3187 = vld [vmem:[#allocation26 + $0x640] sm:$0xff]
    %v3188 = vld [vmem:[#allocation26 + $0x648] sm:$0xff]
    %v3189 = vld [vmem:[#allocation26 + $0x650] sm:$0xff]
    %v3190 = vld [vmem:[#allocation26 + $0x658] sm:$0xff]
    %v3191 = vld [vmem:[#allocation26 + $0x660] sm:$0xff]
    %v3192 = vld [vmem:[#allocation26 + $0x668] sm:$0xff]
    %v3193 = vld [vmem:[#allocation26 + $0x670] sm:$0xff]
    %v3194 = vld [vmem:[#allocation26 + $0x678] sm:$0xff]
    %v3195 = vld [vmem:[#allocation26 + $0x680] sm:$0xff]
    %v3196 = vld [vmem:[#allocation26 + $0x688] sm:$0xff]
    %v3197 = vld [vmem:[#allocation26 + $0x690] sm:$0xff]
    %v3198 = vld [vmem:[#allocation26 + $0x698] sm:$0xff]
    %v3199 = vld [vmem:[#allocation26 + $0x6a0] sm:$0xff]
    %v3200 = vld [vmem:[#allocation26 + $0x6a8] sm:$0xff]
    %v3201 = vld [vmem:[#allocation26 + $0x6b0] sm:$0xff]
    %v3202 = vld [vmem:[#allocation26 + $0x6b8] sm:$0xff]
    %v3203 = vld [vmem:[#allocation26 + $0x6c0] sm:$0xff]
    %v3204 = vld [vmem:[#allocation26 + $0x6c8] sm:$0xff]
    %v3205 = vld [vmem:[#allocation26 + $0x6d0] sm:$0xff]
    %v3206 = vld [vmem:[#allocation26 + $0x6d8] sm:$0xff]
    %v3207 = vld [vmem:[#allocation26 + $0x6e0] sm:$0xff]
    %v3208 = vld [vmem:[#allocation26 + $0x6e8] sm:$0xff]
    %v3209 = vld [vmem:[#allocation26 + $0x6f0] sm:$0xff]
    %v3210 = vld [vmem:[#allocation26 + $0x6f8] sm:$0xff]
    %v3211 = vld [vmem:[#allocation26 + $0x700] sm:$0xff]
    %v3212 = vld [vmem:[#allocation26 + $0x708] sm:$0xff]
    %v3213 = vld [vmem:[#allocation26 + $0x710] sm:$0xff]
    %v3214 = vld [vmem:[#allocation26 + $0x718] sm:$0xff]
    %v3215 = vld [vmem:[#allocation26 + $0x720] sm:$0xff]
    %v3216 = vld [vmem:[#allocation26 + $0x728] sm:$0xff]
    %v3217 = vld [vmem:[#allocation26 + $0x730] sm:$0xff]
    %v3218 = vld [vmem:[#allocation26 + $0x738] sm:$0xff]
    %v3219 = vld [vmem:[#allocation26 + $0x740] sm:$0xff]
    %v3220 = vld [vmem:[#allocation26 + $0x748] sm:$0xff]
    %v3221 = vld [vmem:[#allocation26 + $0x750] sm:$0xff]
    %v3222 = vld [vmem:[#allocation26 + $0x758] sm:$0xff]
    %v3223 = vld [vmem:[#allocation26 + $0x760] sm:$0xff]
    %v3224 = vld [vmem:[#allocation26 + $0x768] sm:$0xff]
    %v3225 = vld [vmem:[#allocation26 + $0x770] sm:$0xff]
    %v3226 = vld [vmem:[#allocation26 + $0x778] sm:$0xff]
    %v3227 = vld [vmem:[#allocation26 + $0x780] sm:$0xff]
    %v3228 = vld [vmem:[#allocation26 + $0x788] sm:$0xff]
    %v3229 = vld [vmem:[#allocation26 + $0x790] sm:$0xff]
    %v3230 = vld [vmem:[#allocation26 + $0x798] sm:$0xff]
    %v3231 = vld [vmem:[#allocation26 + $0x7a0] sm:$0xff]
    %v3232 = vld [vmem:[#allocation26 + $0x7a8] sm:$0xff]
    %v3233 = vld [vmem:[#allocation26 + $0x7b0] sm:$0xff]
    %v3234 = vld [vmem:[#allocation26 + $0x7b8] sm:$0xff]
    %v3235 = vld [vmem:[#allocation26 + $0x7c0] sm:$0xff]
    %v3236 = vld [vmem:[#allocation26 + $0x7c8] sm:$0xff]
    %v3237 = vld [vmem:[#allocation26 + $0x7d0] sm:$0xff]
    %v3238 = vld [vmem:[#allocation26 + $0x7d8] sm:$0xff]
    %v3239 = vld [vmem:[#allocation26 + $0x7e0] sm:$0xff]
    %v3240 = vld [vmem:[#allocation26 + $0x7e8] sm:$0xff]
    %v3241 = vld [vmem:[#allocation26 + $0x7f0] sm:$0xff]
    %v3242 = vld [vmem:[#allocation26 + $0x7f8] sm:$0xff]
    %v3243 = vld [vmem:[#allocation26 + $0x800] sm:$0xff]
    %v3244 = vld [vmem:[#allocation26 + $0x808] sm:$0xff]
    %v3245 = vld [vmem:[#allocation26 + $0x810] sm:$0xff]
    %v3246 = vld [vmem:[#allocation26 + $0x818] sm:$0xff]
    %v3247 = vld [vmem:[#allocation26 + $0x820] sm:$0xff]
    %v3248 = vld [vmem:[#allocation26 + $0x828] sm:$0xff]
    %v3249 = vld [vmem:[#allocation26 + $0x830] sm:$0xff]
    %v3250 = vld [vmem:[#allocation26 + $0x838] sm:$0xff]
    %v3251 = vld [vmem:[#allocation26 + $0x840] sm:$0xff]
    %v3252 = vld [vmem:[#allocation26 + $0x848] sm:$0xff]
    %v3253 = vld [vmem:[#allocation26 + $0x850] sm:$0xff]
    %v3254 = vld [vmem:[#allocation26 + $0x858] sm:$0xff]
    %v3255 = vld [vmem:[#allocation26 + $0x860] sm:$0xff]
    %v3256 = vld [vmem:[#allocation26 + $0x868] sm:$0xff]
    %v3257 = vld [vmem:[#allocation26 + $0x870] sm:$0xff]
    %v3258 = vld [vmem:[#allocation26 + $0x878] sm:$0xff]
    %v3259 = vld [vmem:[#allocation26 + $0x880] sm:$0xff]
    %v3260 = vld [vmem:[#allocation26 + $0x888] sm:$0xff]
    %v3261 = vld [vmem:[#allocation26 + $0x890] sm:$0xff]
    %v3262 = vld [vmem:[#allocation26 + $0x898] sm:$0xff]
    %v3263 = vld [vmem:[#allocation26 + $0x8a0] sm:$0xff]
    %v3264 = vld [vmem:[#allocation26 + $0x8a8] sm:$0xff]
    %v3265 = vld [vmem:[#allocation26 + $0x8b0] sm:$0xff]
    %v3266 = vld [vmem:[#allocation26 + $0x8b8] sm:$0xff]
    %v3267 = vld [vmem:[#allocation26 + $0x8c0] sm:$0xff]
    %v3268 = vld [vmem:[#allocation26 + $0x8c8] sm:$0xff]
    %v3269 = vld [vmem:[#allocation26 + $0x8d0] sm:$0xff]
    %v3270 = vld [vmem:[#allocation26 + $0x8d8] sm:$0xff]
    %v3271 = vld [vmem:[#allocation26 + $0x8e0] sm:$0xff]
    %v3272 = vld [vmem:[#allocation26 + $0x8e8] sm:$0xff]
    %v3273 = vld [vmem:[#allocation26 + $0x8f0] sm:$0xff]
    %v3274 = vld [vmem:[#allocation26 + $0x8f8] sm:$0xff]
    %v3275 = vld [vmem:[#allocation26 + $0x900] sm:$0xff]
    %v3276 = vld [vmem:[#allocation26 + $0x908] sm:$0xff]
    %v3277 = vld [vmem:[#allocation26 + $0x910] sm:$0xff]
    %v3278 = vld [vmem:[#allocation26 + $0x918] sm:$0xff]
    %v3279 = vld [vmem:[#allocation26 + $0x920] sm:$0xff]
    %v3280 = vld [vmem:[#allocation26 + $0x928] sm:$0xff]
    %v3281 = vld [vmem:[#allocation26 + $0x930] sm:$0xff]
    %v3282 = vld [vmem:[#allocation26 + $0x938] sm:$0xff]
    %v3283 = vld [vmem:[#allocation26 + $0x940] sm:$0xff]
    %v3284 = vld [vmem:[#allocation26 + $0x948] sm:$0xff]
    %v3285 = vld [vmem:[#allocation26 + $0x950] sm:$0xff]
    %v3286 = vld [vmem:[#allocation26 + $0x958] sm:$0xff]
    %v3287 = vld [vmem:[#allocation26 + $0x960] sm:$0xff]
    %v3288 = vld [vmem:[#allocation26 + $0x968] sm:$0xff]
    %v3289 = vld [vmem:[#allocation26 + $0x970] sm:$0xff]
    %v3290 = vld [vmem:[#allocation26 + $0x978] sm:$0xff]
    %v3291 = vld [vmem:[#allocation26 + $0x980] sm:$0xff]
    %v3292 = vld [vmem:[#allocation26 + $0x988] sm:$0xff]
    %v3293 = vld [vmem:[#allocation26 + $0x990] sm:$0xff]
    %v3294 = vld [vmem:[#allocation26 + $0x998] sm:$0xff]
    %v3295 = vld [vmem:[#allocation26 + $0x9a0] sm:$0xff]
    %v3296 = vld [vmem:[#allocation26 + $0x9a8] sm:$0xff]
    %v3297 = vld [vmem:[#allocation26 + $0x9b0] sm:$0xff]
    %v3298 = vld [vmem:[#allocation26 + $0x9b8] sm:$0xff]
    %v3299 = vld [vmem:[#allocation26 + $0x9c0] sm:$0xff]
    %v3300 = vld [vmem:[#allocation26 + $0x9c8] sm:$0xff]
    %v3301 = vld [vmem:[#allocation26 + $0x9d0] sm:$0xff]
    %v3302 = vld [vmem:[#allocation26 + $0x9d8] sm:$0xff]
    %v3303 = vld [vmem:[#allocation26 + $0x9e0] sm:$0xff]
    %v3304 = vld [vmem:[#allocation26 + $0x9e8] sm:$0xff]
    %v3305 = vld [vmem:[#allocation26 + $0x9f0] sm:$0xff]
    %v3306 = vld [vmem:[#allocation26 + $0x9f8] sm:$0xff]
    %v3307 = vld [vmem:[#allocation26 + $0xa00] sm:$0xff]
    %v3308 = vld [vmem:[#allocation26 + $0xa08] sm:$0xff]
    %v3309 = vld [vmem:[#allocation26 + $0xa10] sm:$0xff]
    %v3310 = vld [vmem:[#allocation26 + $0xa18] sm:$0xff]
    %v3311 = vld [vmem:[#allocation26 + $0xa20] sm:$0xff]
    %v3312 = vld [vmem:[#allocation26 + $0xa28] sm:$0xff]
    %v3313 = vld [vmem:[#allocation26 + $0xa30] sm:$0xff]
    %v3314 = vld [vmem:[#allocation26 + $0xa38] sm:$0xff]
    %v3315 = vld [vmem:[#allocation26 + $0xa40] sm:$0xff]
    %v3316 = vld [vmem:[#allocation26 + $0xa48] sm:$0xff]
    %v3317 = vld [vmem:[#allocation26 + $0xa50] sm:$0xff]
    %v3318 = vld [vmem:[#allocation26 + $0xa58] sm:$0xff]
    %v3319 = vld [vmem:[#allocation26 + $0xa60] sm:$0xff]
    %v3320 = vld [vmem:[#allocation26 + $0xa68] sm:$0xff]
    %v3321 = vld [vmem:[#allocation26 + $0xa70] sm:$0xff]
    %v3322 = vld [vmem:[#allocation26 + $0xa78] sm:$0xff]
    %v3323 = vld [vmem:[#allocation26 + $0xa80] sm:$0xff]
    %v3324 = vld [vmem:[#allocation26 + $0xa88] sm:$0xff]
    %v3325 = vld [vmem:[#allocation26 + $0xa90] sm:$0xff]
    %v3326 = vld [vmem:[#allocation26 + $0xa98] sm:$0xff]
    %v3327 = vld [vmem:[#allocation26 + $0xaa0] sm:$0xff]
    %v3328 = vld [vmem:[#allocation26 + $0xaa8] sm:$0xff]
    %v3329 = vld [vmem:[#allocation26 + $0xab0] sm:$0xff]
    %v3330 = vld [vmem:[#allocation26 + $0xab8] sm:$0xff]
    %v3331 = vld [vmem:[#allocation26 + $0xac0] sm:$0xff]
    %v3332 = vld [vmem:[#allocation26 + $0xac8] sm:$0xff]
    %v3333 = vld [vmem:[#allocation26 + $0xad0] sm:$0xff]
    %v3334 = vld [vmem:[#allocation26 + $0xad8] sm:$0xff]
    %v3335 = vld [vmem:[#allocation26 + $0xae0] sm:$0xff]
    %v3336 = vld [vmem:[#allocation26 + $0xae8] sm:$0xff]
    %v3337 = vld [vmem:[#allocation26 + $0xaf0] sm:$0xff]
    %v3338 = vld [vmem:[#allocation26 + $0xaf8] sm:$0xff]
    %v3339 = vld [vmem:[#allocation26 + $0xb00] sm:$0xff]
    %v3340 = vld [vmem:[#allocation26 + $0xb08] sm:$0xff]
    %v3341 = vld [vmem:[#allocation26 + $0xb10] sm:$0xff]
    %v3342 = vld [vmem:[#allocation26 + $0xb18] sm:$0xff]
    %v3343 = vld [vmem:[#allocation26 + $0xb20] sm:$0xff]
    %v3344 = vld [vmem:[#allocation26 + $0xb28] sm:$0xff]
    %v3345 = vld [vmem:[#allocation26 + $0xb30] sm:$0xff]
    %v3346 = vld [vmem:[#allocation26 + $0xb38] sm:$0xff]
    %v3347 = vld [vmem:[#allocation26 + $0xb40] sm:$0xff]
    %v3348 = vld [vmem:[#allocation26 + $0xb48] sm:$0xff]
    %v3349 = vld [vmem:[#allocation26 + $0xb50] sm:$0xff]
    %v3350 = vld [vmem:[#allocation26 + $0xb58] sm:$0xff]
    %v3351 = vld [vmem:[#allocation26 + $0xb60] sm:$0xff]
    %v3352 = vld [vmem:[#allocation26 + $0xb68] sm:$0xff]
    %v3353 = vld [vmem:[#allocation26 + $0xb70] sm:$0xff]
    %v3354 = vld [vmem:[#allocation26 + $0xb78] sm:$0xff]
    %v3355 = vld [vmem:[#allocation26 + $0xb80] sm:$0xff]
    %v3356 = vld [vmem:[#allocation26 + $0xb88] sm:$0xff]
    %v3357 = vld [vmem:[#allocation26 + $0xb90] sm:$0xff]
    %v3358 = vld [vmem:[#allocation26 + $0xb98] sm:$0xff]
    %v3359 = vld [vmem:[#allocation26 + $0xba0] sm:$0xff]
    %v3360 = vld [vmem:[#allocation26 + $0xba8] sm:$0xff]
    %v3361 = vld [vmem:[#allocation26 + $0xbb0] sm:$0xff]
    %v3362 = vld [vmem:[#allocation26 + $0xbb8] sm:$0xff]
    %v3363 = vld [vmem:[#allocation26 + $0xbc0] sm:$0xff]
    %v3364 = vld [vmem:[#allocation26 + $0xbc8] sm:$0xff]
    %v3365 = vld [vmem:[#allocation26 + $0xbd0] sm:$0xff]
    %v3366 = vld [vmem:[#allocation26 + $0xbd8] sm:$0xff]
    %v3367 = vld [vmem:[#allocation26 + $0xbe0] sm:$0xff]
    %v3368 = vld [vmem:[#allocation26 + $0xbe8] sm:$0xff]
    %v3369 = vld [vmem:[#allocation26 + $0xbf0] sm:$0xff]
    %v3370 = vld [vmem:[#allocation26 + $0xbf8] sm:$0xff]
    %v3371 = vld [vmem:[#allocation26 + $0xc00] sm:$0xff]
    %v3372 = vld [vmem:[#allocation26 + $0xc08] sm:$0xff]
    %v3373 = vld [vmem:[#allocation26 + $0xc10] sm:$0xff]
    %v3374 = vld [vmem:[#allocation26 + $0xc18] sm:$0xff]
    %v3375 = vld [vmem:[#allocation26 + $0xc20] sm:$0xff]
    %v3376 = vld [vmem:[#allocation26 + $0xc28] sm:$0xff]
    %v3377 = vld [vmem:[#allocation26 + $0xc30] sm:$0xff]
    %v3378 = vld [vmem:[#allocation26 + $0xc38] sm:$0xff]
    %v3379 = vld [vmem:[#allocation26 + $0xc40] sm:$0xff]
    %v3380 = vld [vmem:[#allocation26 + $0xc48] sm:$0xff]
    %v3381 = vld [vmem:[#allocation26 + $0xc50] sm:$0xff]
    %v3382 = vld [vmem:[#allocation26 + $0xc58] sm:$0xff]
    %v3383 = vld [vmem:[#allocation26 + $0xc60] sm:$0xff]
    %v3384 = vld [vmem:[#allocation26 + $0xc68] sm:$0xff]
    %v3385 = vld [vmem:[#allocation26 + $0xc70] sm:$0xff]
    %v3386 = vld [vmem:[#allocation26 + $0xc78] sm:$0xff]
    %v3387 = vld [vmem:[#allocation26 + $0xc80] sm:$0xff]
    %v3388 = vld [vmem:[#allocation26 + $0xc88] sm:$0xff]
    %v3389 = vld [vmem:[#allocation26 + $0xc90] sm:$0xff]
    %v3390 = vld [vmem:[#allocation26 + $0xc98] sm:$0xff]
    %v3391 = vld [vmem:[#allocation26 + $0xca0] sm:$0xff]
    %v3392 = vld [vmem:[#allocation26 + $0xca8] sm:$0xff]
    %v3393 = vld [vmem:[#allocation26 + $0xcb0] sm:$0xff]
    %v3394 = vld [vmem:[#allocation26 + $0xcb8] sm:$0xff]
    %v3395 = vld [vmem:[#allocation26 + $0xcc0] sm:$0xff]
    %v3396 = vld [vmem:[#allocation26 + $0xcc8] sm:$0xff]
    %v3397 = vld [vmem:[#allocation26 + $0xcd0] sm:$0xff]
    %v3398 = vld [vmem:[#allocation26 + $0xcd8] sm:$0xff]
    %v3399 = vld [vmem:[#allocation26 + $0xce0] sm:$0xff]
    %v3400 = vld [vmem:[#allocation26 + $0xce8] sm:$0xff]
    %v3401 = vld [vmem:[#allocation26 + $0xcf0] sm:$0xff]
    %v3402 = vld [vmem:[#allocation26 + $0xcf8] sm:$0xff]
    %v3403 = vld [vmem:[#allocation26 + $0xd00] sm:$0xff]
    %v3404 = vld [vmem:[#allocation26 + $0xd08] sm:$0xff]
    %v3405 = vld [vmem:[#allocation26 + $0xd10] sm:$0xff]
    %v3406 = vld [vmem:[#allocation26 + $0xd18] sm:$0xff]
    %v3407 = vld [vmem:[#allocation26 + $0xd20] sm:$0xff]
    %v3408 = vld [vmem:[#allocation26 + $0xd28] sm:$0xff]
    %v3409 = vld [vmem:[#allocation26 + $0xd30] sm:$0xff]
    %v3410 = vld [vmem:[#allocation26 + $0xd38] sm:$0xff]
    %v3411 = vld [vmem:[#allocation26 + $0xd40] sm:$0xff]
    %v3412 = vld [vmem:[#allocation26 + $0xd48] sm:$0xff]
    %v3413 = vld [vmem:[#allocation26 + $0xd50] sm:$0xff]
    %v3414 = vld [vmem:[#allocation26 + $0xd58] sm:$0xff]
    %v3415 = vld [vmem:[#allocation26 + $0xd60] sm:$0xff]
    %v3416 = vld [vmem:[#allocation26 + $0xd68] sm:$0xff]
    %v3417 = vld [vmem:[#allocation26 + $0xd70] sm:$0xff]
    %v3418 = vld [vmem:[#allocation26 + $0xd78] sm:$0xff]
    %v3419 = vld [vmem:[#allocation26 + $0xd80] sm:$0xff]
    %v3420 = vld [vmem:[#allocation26 + $0xd88] sm:$0xff]
    %v3421 = vld [vmem:[#allocation26 + $0xd90] sm:$0xff]
    %v3422 = vld [vmem:[#allocation26 + $0xd98] sm:$0xff]
    %v3423 = vld [vmem:[#allocation26 + $0xda0] sm:$0xff]
    %v3424 = vld [vmem:[#allocation26 + $0xda8] sm:$0xff]
    %v3425 = vld [vmem:[#allocation26 + $0xdb0] sm:$0xff]
    %v3426 = vld [vmem:[#allocation26 + $0xdb8] sm:$0xff]
    %v3427 = vld [vmem:[#allocation26 + $0xdc0] sm:$0xff]
    %v3428 = vld [vmem:[#allocation26 + $0xdc8] sm:$0xff]
    %v3429 = vld [vmem:[#allocation26 + $0xdd0] sm:$0xff]
    %v3430 = vld [vmem:[#allocation26 + $0xdd8] sm:$0xff]
    %v3431 = vld [vmem:[#allocation26 + $0xde0] sm:$0xff]
    %v3432 = vld [vmem:[#allocation26 + $0xde8] sm:$0xff]
    %v3433 = vld [vmem:[#allocation26 + $0xdf0] sm:$0xff]
    %v3434 = vld [vmem:[#allocation26 + $0xdf8] sm:$0xff]
    %v3435 = vld [vmem:[#allocation28] sm:$0xff]
    %v3437 = vlaneseq
    %v3438 = vshrl.u32 %v3437, 7
    %v3439 = vsub.s32 0, %v3438
    %v3440 = vrot.slane %v3435, %v3439
    %v3441 = vlaneseq
    %v3442 = vshrl.u32 %v3441, 7
    %v3443 = vsub.s32 1, %v3442
    %v3444 = vrot.slane %v3435, %v3443
    %v3445 = vlaneseq
    %v3446 = vshrl.u32 %v3445, 7
    %v3447 = vsub.s32 2, %v3446
    %v3448 = vrot.slane %v3435, %v3447
    %v3449 = vlaneseq
    %v3450 = vshrl.u32 %v3449, 7
    %v3451 = vsub.s32 3, %v3450
    %v3452 = vrot.slane %v3435, %v3451
    %v3453 = vlaneseq
    %v3454 = vshrl.u32 %v3453, 7
    %v3455 = vsub.s32 4, %v3454
    %v3456 = vrot.slane %v3435, %v3455
    %v3457 = vlaneseq
    %v3458 = vshrl.u32 %v3457, 7
    %v3459 = vsub.s32 5, %v3458
    %v3460 = vrot.slane %v3435, %v3459
    %v3461 = vlaneseq
    %v3462 = vshrl.u32 %v3461, 7
    %v3463 = vsub.s32 6, %v3462
    %v3464 = vrot.slane %v3435, %v3463
    %3472 = vmatprep.subr.mxu0 %v2988
    %3473 = vmatpush1.msra.mxu0 %v2987
    %3474 = vmatprep.subr.mxu0 %v2995
    %3475 = vmatpush1.msra.mxu0 %v2994
    %3476 = vmatprep.subr.mxu0 %v3002
    %3477 = vmatpush1.msra.mxu0 %v3001
    %3478 = vmatprep.subr.mxu0 %v3009
    %3479 = vmatpush1.msra.mxu0 %v3008
    %3480 = vmatprep.subr.mxu0 %v3016
    %3481 = vmatpush1.msra.mxu0 %v3015
    %3482 = vmatprep.subr.mxu0 %v3023
    %3483 = vmatpush1.msra.mxu0 %v3022
    %3484 = vmatprep.subr.mxu0 %v3030
    %3485 = vmatpush1.msra.mxu0 %v3029
    %3486 = vmatprep.subr.mxu0 %v3037
    %3487 = vmatpush1.msra.mxu0 %v3036
    %3488 = vmatprep.subr.mxu0 %v3044
    %3489 = vmatpush1.msra.mxu0 %v3043
    %3490 = vmatprep.subr.mxu0 %v3051
    %3491 = vmatpush1.msra.mxu0 %v3050
    %3492 = vmatprep.subr.mxu0 %v3058
    %3493 = vmatpush1.msra.mxu0 %v3057
    %3494 = vmatprep.subr.mxu0 %v3065
    %3495 = vmatpush1.msra.mxu0 %v3064
    %3496 = vmatprep.subr.mxu0 %v3072
    %3497 = vmatpush1.msra.mxu0 %v3071
    %3498 = vmatprep.subr.mxu0 %v3079
    %3499 = vmatpush1.msra.mxu0 %v3078
    %3500 = vmatprep.subr.mxu0 %v3086
    %3501 = vmatpush1.msra.mxu0 %v3085
    %3502 = vmatprep.subr.mxu0 %v3093
    %3503 = vmatpush1.msra.mxu0 %v3092
    %3504 = vmatprep.subr.mxu0 %v3100
    %3505 = vmatpush1.msra.mxu0 %v3099
    %3506 = vmatprep.subr.mxu0 %v3107
    %3507 = vmatpush1.msra.mxu0 %v3106
    %3508 = vmatprep.subr.mxu0 %v3114
    %3509 = vmatpush1.msra.mxu0 %v3113
    %3510 = vmatprep.subr.mxu0 %v3121
    %3511 = vmatpush1.msra.mxu0 %v3120
    %3512 = vmatprep.subr.mxu0 %v3128
    %3513 = vmatpush1.msra.mxu0 %v3127
    %3514 = vmatprep.subr.mxu0 %v3135
    %3515 = vmatpush1.msra.mxu0 %v3134
    %3516 = vmatprep.subr.mxu0 %v3142
    %3517 = vmatpush1.msra.mxu0 %v3141
    %3518 = vmatprep.subr.mxu0 %v3149
    %3519 = vmatpush1.msra.mxu0 %v3148
    %3520 = vmatprep.subr.mxu0 %v3156
    %3521 = vmatpush1.msra.mxu0 %v3155
    %3522 = vmatprep.subr.mxu0 %v3163
    %3523 = vmatpush1.msra.mxu0 %v3162
    %3524 = vmatprep.subr.mxu0 %v3170
    %3525 = vmatpush1.msra.mxu0 %v3169
    %3526 = vmatprep.subr.mxu0 %v3177
    %3527 = vmatpush1.msra.mxu0 %v3176
    %3528 = vmatprep.subr.mxu0 %v3184
    %3529 = vmatpush1.msra.mxu0 %v3183
    %3530 = vmatprep.subr.mxu0 %v3191
    %3531 = vmatpush1.msra.mxu0 %v3190
    %3532 = vmatprep.subr.mxu0 %v3198
    %3533 = vmatpush1.msra.mxu0 %v3197
    %3534 = vmatprep.subr.mxu0 %v3205
    %3535 = vmatpush1.msra.mxu0 %v3204
    %3536 = vmatprep.mubr.f32.mxu0 %v2982
    %3537 = vmatmul.mubr.f32.gmra.mrb[0].mxu0 %v2980
    %v3538 = vpop.f32.mrb[0].mxu0
    %v3539 = vadd.f32 %v3440, %v3538
    %v3540 = vpop.f32.mrb[0].mxu0
    %v3541 = vadd.f32 %v3444, %v3540
    %3542 = vdwg.mxu0
    %3543 = vmatprep.subr.mxu0 %v3212
    %3544 = vmatpush1.msra.mxu0 %v3211
    %3545 = vmatprep.subr.mxu0 %v3219
    %3546 = vmatpush1.msra.mxu0 %v3218
    %3547 = vmatprep.subr.mxu0 %v3226
    %3548 = vmatpush1.msra.mxu0 %v3225
    %3549 = vmatprep.subr.mxu0 %v3233
    %3550 = vmatpush1.msra.mxu0 %v3232
    %3551 = vmatprep.subr.mxu0 %v3240
    %3552 = vmatpush1.msra.mxu0 %v3239
    %3553 = vmatprep.subr.mxu0 %v3247
    %3554 = vmatpush1.msra.mxu0 %v3246
    %3555 = vmatprep.subr.mxu0 %v3254
    %3556 = vmatpush1.msra.mxu0 %v3253
    %3557 = vmatprep.subr.mxu0 %v3261
    %3558 = vmatpush1.msra.mxu0 %v3260
    %3559 = vmatprep.subr.mxu0 %v3268
    %3560 = vmatpush1.msra.mxu0 %v3267
    %3561 = vmatprep.subr.mxu0 %v3275
    %3562 = vmatpush1.msra.mxu0 %v3274
    %3563 = vmatprep.subr.mxu0 %v3282
    %3564 = vmatpush1.msra.mxu0 %v3281
    %3565 = vmatprep.subr.mxu0 %v3289
    %3566 = vmatpush1.msra.mxu0 %v3288
    %3567 = vmatprep.subr.mxu0 %v3296
    %3568 = vmatpush1.msra.mxu0 %v3295
    %3569 = vmatprep.subr.mxu0 %v3303
    %3570 = vmatpush1.msra.mxu0 %v3302
    %3571 = vmatprep.subr.mxu0 %v3310
    %3572 = vmatpush1.msra.mxu0 %v3309
    %3573 = vmatprep.subr.mxu0 %v3317
    %3574 = vmatpush1.msra.mxu0 %v3316
    %3575 = vmatprep.subr.mxu0 %v3324
    %3576 = vmatpush1.msra.mxu0 %v3323
    %3577 = vmatprep.subr.mxu0 %v3331
    %3578 = vmatpush1.msra.mxu0 %v3330
    %3579 = vmatprep.subr.mxu0 %v3338
    %3580 = vmatpush1.msra.mxu0 %v3337
    %3581 = vmatprep.subr.mxu0 %v3345
    %3582 = vmatpush1.msra.mxu0 %v3344
    %3583 = vmatprep.subr.mxu0 %v3352
    %3584 = vmatpush1.msra.mxu0 %v3351
    %3585 = vmatprep.subr.mxu0 %v3359
    %3586 = vmatpush1.msra.mxu0 %v3358
    %3587 = vmatprep.subr.mxu0 %v3366
    %3588 = vmatpush1.msra.mxu0 %v3365
    %3589 = vmatprep.subr.mxu0 %v3373
    %3590 = vmatpush1.msra.mxu0 %v3372
    %3591 = vmatprep.subr.mxu0 %v3380
    %3592 = vmatpush1.msra.mxu0 %v3379
    %3593 = vmatprep.subr.mxu0 %v3387
    %3594 = vmatpush1.msra.mxu0 %v3386
    %3595 = vmatprep.subr.mxu0 %v3394
    %3596 = vmatpush1.msra.mxu0 %v3393
    %3597 = vmatprep.subr.mxu0 %v3401
    %3598 = vmatpush1.msra.mxu0 %v3400
    %3599 = vmatprep.subr.mxu0 %v3408
    %3600 = vmatpush1.msra.mxu0 %v3407
    %3601 = vmatprep.subr.mxu0 %v3415
    %3602 = vmatpush1.msra.mxu0 %v3414
    %3603 = vmatprep.subr.mxu0 %v3422
    %3604 = vmatpush1.msra.mxu0 %v3421
    %3605 = vmatprep.subr.mxu0 %v3429
    %3606 = vmatpush1.msra.mxu0 %v3428
    %3607 = vmatprep.mubr.f32.mxu0 %v2986
    %3608 = vmatmul.mubr.f32.gmra.mrb[0].mxu0 %v2984
    %v3609 = vpop.f32.mrb[0].mxu0
    %v3610 = vadd.f32 %v3539, %v3609
    %v3611 = vpop.f32.mrb[0].mxu0
    %v3612 = vadd.f32 %v3541, %v3611
    %3613 = vdwg.mxu0
    %3614 = vmatprep.subr.mxu0 %v2990
    %3615 = vmatpush1.msra.mxu0 %v2989
    %3616 = vmatprep.subr.mxu0 %v2997
    %3617 = vmatpush1.msra.mxu0 %v2996
    %3618 = vmatprep.subr.mxu0 %v3004
    %3619 = vmatpush1.msra.mxu0 %v3003
    %3620 = vmatprep.subr.mxu0 %v3011
    %3621 = vmatpush1.msra.mxu0 %v3010
    %3622 = vmatprep.subr.mxu0 %v3018
    %3623 = vmatpush1.msra.mxu0 %v3017
    %3624 = vmatprep.subr.mxu0 %v3025
    %3625 = vmatpush1.msra.mxu0 %v3024
    %3626 = vmatprep.subr.mxu0 %v3032
    %3627 = vmatpush1.msra.mxu0 %v3031
    %3628 = vmatprep.subr.mxu0 %v3039
    %3629 = vmatpush1.msra.mxu0 %v3038
    %3630 = vmatprep.subr.mxu0 %v3046
    %3631 = vmatpush1.msra.mxu0 %v3045
    %3632 = vmatprep.subr.mxu0 %v3053
    %3633 = vmatpush1.msra.mxu0 %v3052
    %3634 = vmatprep.subr.mxu0 %v3060
    %3635 = vmatpush1.msra.mxu0 %v3059
    %3636 = vmatprep.subr.mxu0 %v3067
    %3637 = vmatpush1.msra.mxu0 %v3066
    %3638 = vmatprep.subr.mxu0 %v3074
    %3639 = vmatpush1.msra.mxu0 %v3073
    %3640 = vmatprep.subr.mxu0 %v3081
    %3641 = vmatpush1.msra.mxu0 %v3080
    %3642 = vmatprep.subr.mxu0 %v3088
    %3643 = vmatpush1.msra.mxu0 %v3087
    %3644 = vmatprep.subr.mxu0 %v3095
    %3645 = vmatpush1.msra.mxu0 %v3094
    %3646 = vmatprep.subr.mxu0 %v3102
    %3647 = vmatpush1.msra.mxu0 %v3101
    %3648 = vmatprep.subr.mxu0 %v3109
    %3649 = vmatpush1.msra.mxu0 %v3108
    %3650 = vmatprep.subr.mxu0 %v3116
    %3651 = vmatpush1.msra.mxu0 %v3115
    %3652 = vmatprep.subr.mxu0 %v3123
    %3653 = vmatpush1.msra.mxu0 %v3122
    %3654 = vmatprep.subr.mxu0 %v3130
    %3655 = vmatpush1.msra.mxu0 %v3129
    %3656 = vmatprep.subr.mxu0 %v3137
    %3657 = vmatpush1.msra.mxu0 %v3136
    %3658 = vmatprep.subr.mxu0 %v3144
    %3659 = vmatpush1.msra.mxu0 %v3143
    %3660 = vmatprep.subr.mxu0 %v3151
    %3661 = vmatpush1.msra.mxu0 %v3150
    %3662 = vmatprep.subr.mxu0 %v3158
    %3663 = vmatpush1.msra.mxu0 %v3157
    %3664 = vmatprep.subr.mxu0 %v3165
    %3665 = vmatpush1.msra.mxu0 %v3164
    %3666 = vmatprep.subr.mxu0 %v3172
    %3667 = vmatpush1.msra.mxu0 %v3171
    %3668 = vmatprep.subr.mxu0 %v3179
    %3669 = vmatpush1.msra.mxu0 %v3178
    %3670 = vmatprep.subr.mxu0 %v3186
    %3671 = vmatpush1.msra.mxu0 %v3185
    %3672 = vmatprep.subr.mxu0 %v3193
    %3673 = vmatpush1.msra.mxu0 %v3192
    %3674 = vmatprep.subr.mxu0 %v3200
    %3675 = vmatpush1.msra.mxu0 %v3199
    %3676 = vmatprep.subr.mxu0 %v3207
    %3677 = vmatpush1.msra.mxu0 %v3206
    %3678 = vmatprep.mubr.f32.mxu0 %v2982
    %3679 = vmatmul.mubr.f32.gmra.mrb[0].mxu0 %v2980
    %v3680 = vpop.f32.mrb[0].mxu0
    %v3681 = vadd.f32 %v3448, %v3680
    %v3682 = vpop.f32.mrb[0].mxu0
    %v3683 = vadd.f32 %v3452, %v3682
    %3684 = vdwg.mxu0
    %3685 = vmatprep.subr.mxu0 %v3214
    %3686 = vmatpush1.msra.mxu0 %v3213
    %3687 = vmatprep.subr.mxu0 %v3221
    %3688 = vmatpush1.msra.mxu0 %v3220
    %3689 = vmatprep.subr.mxu0 %v3228
    %3690 = vmatpush1.msra.mxu0 %v3227
    %3691 = vmatprep.subr.mxu0 %v3235
    %3692 = vmatpush1.msra.mxu0 %v3234
    %3693 = vmatprep.subr.mxu0 %v3242
    %3694 = vmatpush1.msra.mxu0 %v3241
    %3695 = vmatprep.subr.mxu0 %v3249
    %3696 = vmatpush1.msra.mxu0 %v3248
    %3697 = vmatprep.subr.mxu0 %v3256
    %3698 = vmatpush1.msra.mxu0 %v3255
    %3699 = vmatprep.subr.mxu0 %v3263
    %3700 = vmatpush1.msra.mxu0 %v3262
    %3701 = vmatprep.subr.mxu0 %v3270
    %3702 = vmatpush1.msra.mxu0 %v3269
    %3703 = vmatprep.subr.mxu0 %v3277
    %3704 = vmatpush1.msra.mxu0 %v3276
    %3705 = vmatprep.subr.mxu0 %v3284
    %3706 = vmatpush1.msra.mxu0 %v3283
    %3707 = vmatprep.subr.mxu0 %v3291
    %3708 = vmatpush1.msra.mxu0 %v3290
    %3709 = vmatprep.subr.mxu0 %v3298
    %3710 = vmatpush1.msra.mxu0 %v3297
    %3711 = vmatprep.subr.mxu0 %v3305
    %3712 = vmatpush1.msra.mxu0 %v3304
    %3713 = vmatprep.subr.mxu0 %v3312
    %3714 = vmatpush1.msra.mxu0 %v3311
    %3715 = vmatprep.subr.mxu0 %v3319
    %3716 = vmatpush1.msra.mxu0 %v3318
    %3717 = vmatprep.subr.mxu0 %v3326
    %3718 = vmatpush1.msra.mxu0 %v3325
    %3719 = vmatprep.subr.mxu0 %v3333
    %3720 = vmatpush1.msra.mxu0 %v3332
    %3721 = vmatprep.subr.mxu0 %v3340
    %3722 = vmatpush1.msra.mxu0 %v3339
    %3723 = vmatprep.subr.mxu0 %v3347
    %3724 = vmatpush1.msra.mxu0 %v3346
    %3725 = vmatprep.subr.mxu0 %v3354
    %3726 = vmatpush1.msra.mxu0 %v3353
    %3727 = vmatprep.subr.mxu0 %v3361
    %3728 = vmatpush1.msra.mxu0 %v3360
    %3729 = vmatprep.subr.mxu0 %v3368
    %3730 = vmatpush1.msra.mxu0 %v3367
    %3731 = vmatprep.subr.mxu0 %v3375
    %3732 = vmatpush1.msra.mxu0 %v3374
    %3733 = vmatprep.subr.mxu0 %v3382
    %3734 = vmatpush1.msra.mxu0 %v3381
    %3735 = vmatprep.subr.mxu0 %v3389
    %3736 = vmatpush1.msra.mxu0 %v3388
    %3737 = vmatprep.subr.mxu0 %v3396
    %3738 = vmatpush1.msra.mxu0 %v3395
    %3739 = vmatprep.subr.mxu0 %v3403
    %3740 = vmatpush1.msra.mxu0 %v3402
    %3741 = vmatprep.subr.mxu0 %v3410
    %3742 = vmatpush1.msra.mxu0 %v3409
    %3743 = vmatprep.subr.mxu0 %v3417
    %3744 = vmatpush1.msra.mxu0 %v3416
    %3745 = vmatprep.subr.mxu0 %v3424
    %3746 = vmatpush1.msra.mxu0 %v3423
    %3747 = vmatprep.subr.mxu0 %v3431
    %3748 = vmatpush1.msra.mxu0 %v3430
    %3749 = vmatprep.mubr.f32.mxu0 %v2986
    %3750 = vmatmul.mubr.f32.gmra.mrb[0].mxu0 %v2984
    %v3751 = vpop.f32.mrb[0].mxu0
    %v3752 = vadd.f32 %v3681, %v3751
    %v3753 = vpop.f32.mrb[0].mxu0
    %v3754 = vadd.f32 %v3683, %v3753
    %3755 = vdwg.mxu0
    %3756 = vmatprep.subr.mxu0 %v2992
    %3757 = vmatpush1.msra.mxu0 %v2991
    %3758 = vmatprep.subr.mxu0 %v2999
    %3759 = vmatpush1.msra.mxu0 %v2998
    %3760 = vmatprep.subr.mxu0 %v3006
    %3761 = vmatpush1.msra.mxu0 %v3005
    %3762 = vmatprep.subr.mxu0 %v3013
    %3763 = vmatpush1.msra.mxu0 %v3012
    %3764 = vmatprep.subr.mxu0 %v3020
    %3765 = vmatpush1.msra.mxu0 %v3019
    %3766 = vmatprep.subr.mxu0 %v3027
    %3767 = vmatpush1.msra.mxu0 %v3026
    %3768 = vmatprep.subr.mxu0 %v3034
    %3769 = vmatpush1.msra.mxu0 %v3033
    %3770 = vmatprep.subr.mxu0 %v3041
    %3771 = vmatpush1.msra.mxu0 %v3040
    %3772 = vmatprep.subr.mxu0 %v3048
    %3773 = vmatpush1.msra.mxu0 %v3047
    %3774 = vmatprep.subr.mxu0 %v3055
    %3775 = vmatpush1.msra.mxu0 %v3054
    %3776 = vmatprep.subr.mxu0 %v3062
    %3777 = vmatpush1.msra.mxu0 %v3061
    %3778 = vmatprep.subr.mxu0 %v3069
    %3779 = vmatpush1.msra.mxu0 %v3068
    %3780 = vmatprep.subr.mxu0 %v3076
    %3781 = vmatpush1.msra.mxu0 %v3075
    %3782 = vmatprep.subr.mxu0 %v3083
    %3783 = vmatpush1.msra.mxu0 %v3082
    %3784 = vmatprep.subr.mxu0 %v3090
    %3785 = vmatpush1.msra.mxu0 %v3089
    %3786 = vmatprep.subr.mxu0 %v3097
    %3787 = vmatpush1.msra.mxu0 %v3096
    %3788 = vmatprep.subr.mxu0 %v3104
    %3789 = vmatpush1.msra.mxu0 %v3103
    %3790 = vmatprep.subr.mxu0 %v3111
    %3791 = vmatpush1.msra.mxu0 %v3110
    %3792 = vmatprep.subr.mxu0 %v3118
    %3793 = vmatpush1.msra.mxu0 %v3117
    %3794 = vmatprep.subr.mxu0 %v3125
    %3795 = vmatpush1.msra.mxu0 %v3124
    %3796 = vmatprep.subr.mxu0 %v3132
    %3797 = vmatpush1.msra.mxu0 %v3131
    %3798 = vmatprep.subr.mxu0 %v3139
    %3799 = vmatpush1.msra.mxu0 %v3138
    %3800 = vmatprep.subr.mxu0 %v3146
    %3801 = vmatpush1.msra.mxu0 %v3145
    %3802 = vmatprep.subr.mxu0 %v3153
    %3803 = vmatpush1.msra.mxu0 %v3152
    %3804 = vmatprep.subr.mxu0 %v3160
    %3805 = vmatpush1.msra.mxu0 %v3159
    %3806 = vmatprep.subr.mxu0 %v3167
    %3807 = vmatpush1.msra.mxu0 %v3166
    %3808 = vmatprep.subr.mxu0 %v3174
    %3809 = vmatpush1.msra.mxu0 %v3173
    %3810 = vmatprep.subr.mxu0 %v3181
    %3811 = vmatpush1.msra.mxu0 %v3180
    %3812 = vmatprep.subr.mxu0 %v3188
    %3813 = vmatpush1.msra.mxu0 %v3187
    %3814 = vmatprep.subr.mxu0 %v3195
    %3815 = vmatpush1.msra.mxu0 %v3194
    %3816 = vmatprep.subr.mxu0 %v3202
    %3817 = vmatpush1.msra.mxu0 %v3201
    %3818 = vmatprep.subr.mxu0 %v3209
    %3819 = vmatpush1.msra.mxu0 %v3208
    %3820 = vmatprep.mubr.f32.mxu0 %v2982
    %3821 = vmatmul.mubr.f32.gmra.mrb[0].mxu0 %v2980
    %v3822 = vpop.f32.mrb[0].mxu0
    %v3823 = vadd.f32 %v3456, %v3822
    %v3824 = vpop.f32.mrb[0].mxu0
    %v3825 = vadd.f32 %v3460, %v3824
    %3826 = vdwg.mxu0
    %3827 = vmatprep.subr.mxu0 %v3216
    %3828 = vmatpush1.msra.mxu0 %v3215
    %3829 = vmatprep.subr.mxu0 %v3223
    %3830 = vmatpush1.msra.mxu0 %v3222
    %3831 = vmatprep.subr.mxu0 %v3230
    %3832 = vmatpush1.msra.mxu0 %v3229
    %3833 = vmatprep.subr.mxu0 %v3237
    %3834 = vmatpush1.msra.mxu0 %v3236
    %3835 = vmatprep.subr.mxu0 %v3244
    %3836 = vmatpush1.msra.mxu0 %v3243
    %3837 = vmatprep.subr.mxu0 %v3251
    %3838 = vmatpush1.msra.mxu0 %v3250
    %3839 = vmatprep.subr.mxu0 %v3258
    %3840 = vmatpush1.msra.mxu0 %v3257
    %3841 = vmatprep.subr.mxu0 %v3265
    %3842 = vmatpush1.msra.mxu0 %v3264
    %3843 = vmatprep.subr.mxu0 %v3272
    %3844 = vmatpush1.msra.mxu0 %v3271
    %3845 = vmatprep.subr.mxu0 %v3279
    %3846 = vmatpush1.msra.mxu0 %v3278
    %3847 = vmatprep.subr.mxu0 %v3286
    %3848 = vmatpush1.msra.mxu0 %v3285
    %3849 = vmatprep.subr.mxu0 %v3293
    %3850 = vmatpush1.msra.mxu0 %v3292
    %3851 = vmatprep.subr.mxu0 %v3300
    %3852 = vmatpush1.msra.mxu0 %v3299
    %3853 = vmatprep.subr.mxu0 %v3307
    %3854 = vmatpush1.msra.mxu0 %v3306
    %3855 = vmatprep.subr.mxu0 %v3314
    %3856 = vmatpush1.msra.mxu0 %v3313
    %3857 = vmatprep.subr.mxu0 %v3321
    %3858 = vmatpush1.msra.mxu0 %v3320
    %3859 = vmatprep.subr.mxu0 %v3328
    %3860 = vmatpush1.msra.mxu0 %v3327
    %3861 = vmatprep.subr.mxu0 %v3335
    %3862 = vmatpush1.msra.mxu0 %v3334
    %3863 = vmatprep.subr.mxu0 %v3342
    %3864 = vmatpush1.msra.mxu0 %v3341
    %3865 = vmatprep.subr.mxu0 %v3349
    %3866 = vmatpush1.msra.mxu0 %v3348
    %3867 = vmatprep.subr.mxu0 %v3356
    %3868 = vmatpush1.msra.mxu0 %v3355
    %3869 = vmatprep.subr.mxu0 %v3363
    %3870 = vmatpush1.msra.mxu0 %v3362
    %3871 = vmatprep.subr.mxu0 %v3370
    %3872 = vmatpush1.msra.mxu0 %v3369
    %3873 = vmatprep.subr.mxu0 %v3377
    %3874 = vmatpush1.msra.mxu0 %v3376
    %3875 = vmatprep.subr.mxu0 %v3384
    %3876 = vmatpush1.msra.mxu0 %v3383
    %3877 = vmatprep.subr.mxu0 %v3391
    %3878 = vmatpush1.msra.mxu0 %v3390
    %3879 = vmatprep.subr.mxu0 %v3398
    %3880 = vmatpush1.msra.mxu0 %v3397
    %3881 = vmatprep.subr.mxu0 %v3405
    %3882 = vmatpush1.msra.mxu0 %v3404
    %3883 = vmatprep.subr.mxu0 %v3412
    %3884 = vmatpush1.msra.mxu0 %v3411
    %3885 = vmatprep.subr.mxu0 %v3419
    %3886 = vmatpush1.msra.mxu0 %v3418
    %3887 = vmatprep.subr.mxu0 %v3426
    %3888 = vmatpush1.msra.mxu0 %v3425
    %3889 = vmatprep.subr.mxu0 %v3433
    %3890 = vmatpush1.msra.mxu0 %v3432
    %3891 = vmatprep.mubr.f32.mxu0 %v2986
    %3892 = vmatmul.mubr.f32.gmra.mrb[0].mxu0 %v2984
    %v3893 = vpop.f32.mrb[0].mxu0
    %v3894 = vadd.f32 %v3823, %v3893
    %v3895 = vpop.f32.mrb[0].mxu0
    %v3896 = vadd.f32 %v3825, %v3895
    %3897 = vdwg.mxu0
    %3898 = vmatprep.subr.mxu0 0.0
    %3899 = vmatpush1.msra.mxu0 %v2993
    %3900 = vmatprep.subr.mxu0 0.0
    %3901 = vmatpush1.msra.mxu0 %v3000
    %3902 = vmatprep.subr.mxu0 0.0
    %3903 = vmatpush1.msra.mxu0 %v3007
    %3904 = vmatprep.subr.mxu0 0.0
    %3905 = vmatpush1.msra.mxu0 %v3014
    %3906 = vmatprep.subr.mxu0 0.0
    %3907 = vmatpush1.msra.mxu0 %v3021
    %3908 = vmatprep.subr.mxu0 0.0
    %3909 = vmatpush1.msra.mxu0 %v3028
    %3910 = vmatprep.subr.mxu0 0.0
    %3911 = vmatpush1.msra.mxu0 %v3035
    %3912 = vmatprep.subr.mxu0 0.0
    %3913 = vmatpush1.msra.mxu0 %v3042
    %3914 = vmatprep.subr.mxu0 0.0
    %3915 = vmatpush1.msra.mxu0 %v3049
    %3916 = vmatprep.subr.mxu0 0.0
    %3917 = vmatpush1.msra.mxu0 %v3056
    %3918 = vmatprep.subr.mxu0 0.0
    %3919 = vmatpush1.msra.mxu0 %v3063
    %3920 = vmatprep.subr.mxu0 0.0
    %3921 = vmatpush1.msra.mxu0 %v3070
    %3922 = vmatprep.subr.mxu0 0.0
    %3923 = vmatpush1.msra.mxu0 %v3077
    %3924 = vmatprep.subr.mxu0 0.0
    %3925 = vmatpush1.msra.mxu0 %v3084
    %3926 = vmatprep.subr.mxu0 0.0
    %3927 = vmatpush1.msra.mxu0 %v3091
    %3928 = vmatprep.subr.mxu0 0.0
    %3929 = vmatpush1.msra.mxu0 %v3098
    %3930 = vmatprep.subr.mxu0 0.0
    %3931 = vmatpush1.msra.mxu0 %v3105
    %3932 = vmatprep.subr.mxu0 0.0
    %3933 = vmatpush1.msra.mxu0 %v3112
    %3934 = vmatprep.subr.mxu0 0.0
    %3935 = vmatpush1.msra.mxu0 %v3119
    %3936 = vmatprep.subr.mxu0 0.0
    %3937 = vmatpush1.msra.mxu0 %v3126
    %3938 = vmatprep.subr.mxu0 0.0
    %3939 = vmatpush1.msra.mxu0 %v3133
    %3940 = vmatprep.subr.mxu0 0.0
    %3941 = vmatpush1.msra.mxu0 %v3140
    %3942 = vmatprep.subr.mxu0 0.0
    %3943 = vmatpush1.msra.mxu0 %v3147
    %3944 = vmatprep.subr.mxu0 0.0
    %3945 = vmatpush1.msra.mxu0 %v3154
    %3946 = vmatprep.subr.mxu0 0.0
    %3947 = vmatpush1.msra.mxu0 %v3161
    %3948 = vmatprep.subr.mxu0 0.0
    %3949 = vmatpush1.msra.mxu0 %v3168
    %3950 = vmatprep.subr.mxu0 0.0
    %3951 = vmatpush1.msra.mxu0 %v3175
    %3952 = vmatprep.subr.mxu0 0.0
    %3953 = vmatpush1.msra.mxu0 %v3182
    %3954 = vmatprep.subr.mxu0 0.0
    %3955 = vmatpush1.msra.mxu0 %v3189
    %3956 = vmatprep.subr.mxu0 0.0
    %3957 = vmatpush1.msra.mxu0 %v3196
    %3958 = vmatprep.subr.mxu0 0.0
    %3959 = vmatpush1.msra.mxu0 %v3203
    %3960 = vmatprep.subr.mxu0 0.0
    %3961 = vmatpush1.msra.mxu0 %v3210
    %3962 = vmatprep.mubr.f32.mxu0 %v2982
    %3963 = vmatmul.mubr.f32.gmra.mrb[0].mxu0 %v2980
    %v3964 = vpop.f32.mrb[0].mxu0
    %v3965 = vadd.f32 %v3464, %v3964
    %v3966 = vpop.f32.mrb[0].mxu0
    %3967 = vdwg.mxu0
    %3968 = vmatprep.subr.mxu0 0.0
    %3969 = vmatpush1.msra.mxu0 %v3217
    %3970 = vmatprep.subr.mxu0 0.0
    %3971 = vmatpush1.msra.mxu0 %v3224
    %3972 = vmatprep.subr.mxu0 0.0
    %3973 = vmatpush1.msra.mxu0 %v3231
    %3974 = vmatprep.subr.mxu0 0.0
    %3975 = vmatpush1.msra.mxu0 %v3238
    %3976 = vmatprep.subr.mxu0 0.0
    %3977 = vmatpush1.msra.mxu0 %v3245
    %3978 = vmatprep.subr.mxu0 0.0
    %3979 = vmatpush1.msra.mxu0 %v3252
    %3980 = vmatprep.subr.mxu0 0.0
    %3981 = vmatpush1.msra.mxu0 %v3259
    %3982 = vmatprep.subr.mxu0 0.0
    %3983 = vmatpush1.msra.mxu0 %v3266
    %3984 = vmatprep.subr.mxu0 0.0
    %3985 = vmatpush1.msra.mxu0 %v3273
    %3986 = vmatprep.subr.mxu0 0.0
    %3987 = vmatpush1.msra.mxu0 %v3280
    %3988 = vmatprep.subr.mxu0 0.0
    %3989 = vmatpush1.msra.mxu0 %v3287
    %3990 = vmatprep.subr.mxu0 0.0
    %3991 = vmatpush1.msra.mxu0 %v3294
    %3992 = vmatprep.subr.mxu0 0.0
    %3993 = vmatpush1.msra.mxu0 %v3301
    %3994 = vmatprep.subr.mxu0 0.0
    %3995 = vmatpush1.msra.mxu0 %v3308
    %3996 = vmatprep.subr.mxu0 0.0
    %3997 = vmatpush1.msra.mxu0 %v3315
    %3998 = vmatprep.subr.mxu0 0.0
    %3999 = vmatpush1.msra.mxu0 %v3322
    %4000 = vmatprep.subr.mxu0 0.0
    %4001 = vmatpush1.msra.mxu0 %v3329
    %4002 = vmatprep.subr.mxu0 0.0
    %4003 = vmatpush1.msra.mxu0 %v3336
    %4004 = vmatprep.subr.mxu0 0.0
    %4005 = vmatpush1.msra.mxu0 %v3343
    %4006 = vmatprep.subr.mxu0 0.0
    %4007 = vmatpush1.msra.mxu0 %v3350
    %4008 = vmatprep.subr.mxu0 0.0
    %4009 = vmatpush1.msra.mxu0 %v3357
    %4010 = vmatprep.subr.mxu0 0.0
    %4011 = vmatpush1.msra.mxu0 %v3364
    %4012 = vmatprep.subr.mxu0 0.0
    %4013 = vmatpush1.msra.mxu0 %v3371
    %4014 = vmatprep.subr.mxu0 0.0
    %4015 = vmatpush1.msra.mxu0 %v3378
    %4016 = vmatprep.subr.mxu0 0.0
    %4017 = vmatpush1.msra.mxu0 %v3385
    %4018 = vmatprep.subr.mxu0 0.0
    %4019 = vmatpush1.msra.mxu0 %v3392
    %4020 = vmatprep.subr.mxu0 0.0
    %4021 = vmatpush1.msra.mxu0 %v3399
    %4022 = vmatprep.subr.mxu0 0.0
    %4023 = vmatpush1.msra.mxu0 %v3406
    %4024 = vmatprep.subr.mxu0 0.0
    %4025 = vmatpush1.msra.mxu0 %v3413
    %4026 = vmatprep.subr.mxu0 0.0
    %4027 = vmatpush1.msra.mxu0 %v3420
    %4028 = vmatprep.subr.mxu0 0.0
    %4029 = vmatpush1.msra.mxu0 %v3427
    %4030 = vmatprep.subr.mxu0 0.0
    %4031 = vmatpush1.msra.mxu0 %v3434
    %4032 = vmatprep.mubr.f32.mxu0 %v2986
    %4033 = vmatmul.mubr.f32.gmra.mrb[0].mxu0 %v2984
    %v4034 = vpop.f32.mrb[0].mxu0
    %v4035 = vadd.f32 %v3965, %v4034
    %v4036 = vpop.f32.mrb[0].mxu0
    %4037 = vdwg.mxu0
    %v4038 = vxor.u32 %v3610, 2147483648
    %v4039 = vxor.u32 %v3612, 2147483648
    %v4040 = vxor.u32 %v3752, 2147483648
    %v4041 = vxor.u32 %v3754, 2147483648
    %v4042 = vxor.u32 %v3894, 2147483648
    %v4043 = vxor.u32 %v3896, 2147483648
    %v4044 = vxor.u32 %v4035, 2147483648
    %v4045 = vmul.f32 %v4038, 1.442695
    %v4046 = vpow.pop %v4045
    %v4047 = vmul.f32 %v4039, 1.442695
    %v4048 = vpow.pop %v4047
    %v4049 = vmul.f32 %v4040, 1.442695
    %v4050 = vpow.pop %v4049
    %v4051 = vmul.f32 %v4041, 1.442695
    %v4052 = vpow.pop %v4051
    %v4053 = vmul.f32 %v4042, 1.442695
    %v4054 = vpow.pop %v4053
    %v4055 = vmul.f32 %v4043, 1.442695
    %v4056 = vpow.pop %v4055
    %v4057 = vmul.f32 %v4044, 1.442695
    %v4058 = vpow.pop %v4057
    %v4059 = vadd.f32 %v4046, 1.0
    %v4060 = vadd.f32 %v4048, 1.0
    %v4061 = vadd.f32 %v4050, 1.0
    %v4062 = vadd.f32 %v4052, 1.0
    %v4063 = vadd.f32 %v4054, 1.0
    %v4064 = vadd.f32 %v4056, 1.0
    %v4065 = vadd.f32 %v4058, 1.0
    %v4066 = vrcp.pop %v4059
    %v4067 = vmul.f32 1.0, %v4066
    %v4068 = vrcp.pop %v4060
    %v4069 = vmul.f32 1.0, %v4068
    %v4070 = vrcp.pop %v4061
    %v4071 = vmul.f32 1.0, %v4070
    %v4072 = vrcp.pop %v4062
    %v4073 = vmul.f32 1.0, %v4072
    %v4074 = vrcp.pop %v4063
    %v4075 = vmul.f32 1.0, %v4074
    %v4076 = vrcp.pop %v4064
    %v4077 = vmul.f32 1.0, %v4076
    %v4078 = vrcp.pop %v4065
    %v4079 = vmul.f32 1.0, %v4078
    %4080 = vst [vmem:[#allocation29] sm:$0xff] %v4067
    %4081 = vst [vmem:[#allocation29 + $0x8] sm:$0xff] %v4069
    %4082 = vst [vmem:[#allocation29 + $0x10] sm:$0xff] %v4071
    %4083 = vst [vmem:[#allocation29 + $0x18] sm:$0xff] %v4073
    %4084 = vst [vmem:[#allocation29 + $0x20] sm:$0xff] %v4075
    %4085 = vst [vmem:[#allocation29 + $0x28] sm:$0xff] %v4077
    %4086 = vst [vmem:[#allocation29 + $0x30] sm:$0xff] %v4079
    // Predicated region
    $region138: #{tpu_custom_call.1} parent=1 // pred_check
      _
    $region139: #{tpu_custom_call.1} parent=1 // pred_check_branch
      %4088 = sbr.rel (0) target = $region141
    $region140: #{tpu_custom_call.1} parent=1 // pred_region
      %s4090 = ssub.s32 896, 896
      %4091 = vsyncadd [#allocation4], %s4090
      %s4093 = sshll.u32 [#allocation29], 4
      %s4094 = int_to_ptr.vmem [resolvable:$true] %s4093
      %4096 = dma.vmem_to_hbm [thread:$0]  %s4094, 896, %s17, [#allocation4]
    $region141: #{tpu_custom_call.1} parent=1 // pred_fallthru
      _
    // Predicated region
    $region142: #{tpu_custom_call.1} parent=1 // pred_check
      _
    $region143: #{tpu_custom_call.1} parent=1 // pred_check_branch
      %4098 = sbr.rel (0) target = $region145
    $region144: #{tpu_custom_call.1} parent=1 // pred_region
      %4099 = dma.done [#allocation4], 896
    $region145: #{tpu_custom_call.1} parent=1 // pred_fallthru
      _
    %4100 = vsyncpa [#allocation3], 1
    %4101 = vsyncpa [#allocation6], 1
    %4102 = vsyncpa [#allocation9], 1
    %4103 = vsyncpa [#allocation12], 1
    %4104 = vsyncpa [#allocation15], 1
    %4105 = vsyncpa [#allocation18], 1
    %4106 = vsyncpa [#allocation21], 1
    %4107 = vsyncpa [#allocation24], 1
    %4108 = vsyncpa [#allocation27], 1
    %4109 = vsyncpa [#allocation4], 1

</llo_original>
